<compile_context>
chip_gen: v6e
topology: v6e:2x2x1
jax: 0.10.0
libtpu: 0.0.40
codegen_flags: <defaults>
</compile_context>

<pallas_src>
import jax
import jax.numpy as jnp
from jax.experimental import pallas as pl
from jax.experimental.pallas import tpu as pltpu

BN_EPS = 1e-5
LANE = 128


def basic2d_kernel(xc_ref, w_ref, s_ref, b_ref, out_ref):
    """One (batch, row-chunk) tile per grid step.

    xc_ref : (tH+3, Wp, Cin)  bf16 zero-padded input row chunk (1 halo row on
                              top, 2 on the bottom: 1 conv halo + 1 slack row
                              that keeps every shifted tap slice in bounds).
                              Wp % 8 == 0; 1 zero col left, >=1 zero col right.
    w_ref  : (9, Cin, Cp)     bf16 conv weights, tap-major (dy*3+dx).
    s_ref  : (1, Cp)          f32 per-output-channel scale (ones if no BN).
    b_ref  : (1, Cp)          f32 per-output-channel bias.
    out_ref: (tH, W, Cp)      output row chunk.
    """
    tH, W, Cp = out_ref.shape
    Hc, Wp, Cin = xc_ref.shape          # Hc == tH + 3

    # Flatten rows; layout-preserving because Wp % 8 == 0.
    flat = xc_ref[...].reshape(Hc * Wp, Cin)

    # All 9 taps accumulate into ONE f32 accumulator. The dx shift is a cheap
    # shifted slice of the bf16, Cin-wide input; elements that wrap into the
    # next padded row only ever land in output columns >= W, which are dropped
    # below, and the extra bottom slack row keeps the slices in bounds.
    acc = jnp.zeros((tH * Wp, Cp), jnp.float32)
    for dy in range(3):
        for dx in range(3):
            start = dy * Wp + dx
            lhs = flat[start:start + tH * Wp, :]
            acc = acc + jnp.dot(lhs, w_ref[dy * 3 + dx],
                                preferred_element_type=jnp.float32)

    # Single aligned output-side slice, then f32 scale/bias + ReLU epilogue.
    y = acc.reshape(tH, Wp, Cp)[:, :W, :]
    y = y * s_ref[...] + b_ref[...]
    out_ref[...] = jnp.maximum(y, 0.0).astype(out_ref.dtype)


def _fold_bn(gamma, beta, mean, var, eps=BN_EPS):
    scale = gamma / jnp.sqrt(var + eps)
    bias = beta - mean * scale
    return scale.astype(jnp.float32), bias.astype(jnp.float32)


def _round_up(x, m):
    return (x + m - 1) // m * m


def _vmem_bytes(t, Wp, W, Cin, Cp, out_itemsize):
    in_blk = (t + 3) * Wp * Cin * 2            # bf16 input chunk
    out_blk = t * W * Cp * out_itemsize        # output block
    acc = t * Wp * Cp * 4                      # f32 accumulator
    wts = 9 * Cin * Cp * 2 + 4 * Cp * 4        # weights + scale + bias
    return 2 * in_blk + 2 * out_blk + acc + 2 * wts   # double-buffered streams


def _pick_row_tile(H, Wp, W, Cin, Cp, out_itemsize, budget):
    """Largest divisor of H whose per-step working set fits the VMEM budget."""
    best = 1
    for t in range(1, H + 1):
        if H % t == 0 and _vmem_bytes(t, Wp, W, Cin, Cp, out_itemsize) <= budget:
            best = t
    return best


def basic2d_pallas(x_nchw, params, *, norm=True, row_tile=None,
                   out_dtype=jnp.float32, vmem_budget_bytes=16 << 20):
    """Basic2d forward: conv3x3(stride=1, pad=1) -> [BN eval] -> ReLU.

    x_nchw : (N, Cin, H, W) float32. Returns (N, Cout, H, W) in out_dtype.
    norm=True  : norm_layer branch (conv bias=False, BN folded from running stats)
    norm=False : default branch    (conv bias=True, no BN)
    out_dtype  : set jnp.bfloat16 if the consumer accepts it (halves writeback).
    """
    N, Cin, H, W = x_nchw.shape
    w = params["w"]
    Cout, Cin_w, KH, KW = w.shape
    assert Cin_w == Cin
    # TODO(synk): only the module defaults kernel_size=3 / padding=1 (stride=1)
    # are implemented in the Pallas kernel.
    assert (KH, KW) == (3, 3)

    if norm:
        scale, bias = _fold_bn(params["g"], params["be"], params["m"], params["v"])
    else:
        scale = jnp.ones((Cout,), jnp.float32)
        bias = params["bias"].astype(jnp.float32)

    # Lane-dense output: pad Cout to a multiple of 128. Padded channels carry
    # zero weights/scale/bias and are sliced off after the kernel.
    Cp = _round_up(Cout, LANE)
    w_tap = jnp.transpose(w.astype(jnp.float32), (2, 3, 1, 0)).reshape(9, Cin, Cout)
    w_tap = jnp.pad(w_tap, ((0, 0), (0, 0), (0, Cp - Cout))).astype(jnp.bfloat16)
    s_vec = jnp.pad(scale, (0, Cp - Cout)).reshape(1, Cp)
    b_vec = jnp.pad(bias, (0, Cp - Cout)).reshape(1, Cp)

    # NCHW -> NHWC (channels on lanes), bf16. Zero-pad: 1 row top, 2 rows
    # bottom, 1 col left, right-pad so the padded width is a multiple of 8
    # (keeps the in-kernel flatten layout-preserving; extra columns are zeros
    # and never reach valid output columns).
    out_itemsize = jnp.dtype(out_dtype).itemsize
    Wp = _round_up(W + 2, 8)
    x_nhwc = jnp.transpose(x_nchw, (0, 2, 3, 1)).astype(jnp.bfloat16)
    x_pad = jnp.pad(x_nhwc, ((0, 0), (1, 2), (1, Wp - W - 1), (0, 0)))

    if row_tile is None:
        row_tile = _pick_row_tile(H, Wp, W, Cin, Cp, out_itemsize, vmem_budget_bytes)
    assert H % row_tile == 0
    R = H // row_tile

    # Overlapping row chunks (halo rows included) so each grid step only needs
    # its own (row_tile+3, Wp, Cin) slab in VMEM: bounded working set for any
    # image size (v7x-safe) and chunk-private DMA under megacore sharding.
    # TODO(synk): replace the wrapper-side pad/chunk materialization with a
    # manual in-kernel DMA (memory_space=pl.ANY) that zero-pads the halo in a
    # VMEM scratch, to save one extra HBM pass over the activations.
    row_idx = jnp.arange(R)[:, None] * row_tile + jnp.arange(row_tile + 3)[None, :]
    x_chunks = x_pad[:, row_idx]                      # (N, R, row_tile+3, Wp, Cin)

    est = _vmem_bytes(row_tile, Wp, W, Cin, Cp, out_itemsize)
    vmem_limit = int(min(max(2 * est, 32 << 20), 56 << 20))

    out_nhwc = pl.pallas_call(
        basic2d_kernel,
        out_shape=jax.ShapeDtypeStruct((N, H, W, Cp), out_dtype),
        grid=(N, R),
        in_specs=[
            pl.BlockSpec((None, None, row_tile + 3, Wp, Cin),
                         lambda n, r: (n, r, 0, 0, 0)),          # input chunk
            pl.BlockSpec((9, Cin, Cp), lambda n, r: (0, 0, 0)),  # weights
            pl.BlockSpec((1, Cp), lambda n, r: (0, 0)),          # scale
            pl.BlockSpec((1, Cp), lambda n, r: (0, 0)),          # bias
        ],
        out_specs=pl.BlockSpec((None, row_tile, W, Cp),
                               lambda n, r: (n, r, 0, 0)),
        compiler_params=pltpu.CompilerParams(
            dimension_semantics=("parallel", "parallel"),
            vmem_limit_bytes=vmem_limit),
    )(x_chunks, w_tap, s_vec, b_vec)

    out = out_nhwc[..., :Cout]                  # drop padded output channels
    return jnp.transpose(out, (0, 3, 1, 2))     # back to NCHW


def basic2d_reference(x, params, *, norm=True):
    """Pure-JAX reference of Basic2d forward (eval-mode BN), NCHW, f32."""
    out = jax.lax.conv_general_dilated(
        x, params["w"], window_strides=(1, 1), padding=((1, 1), (1, 1)),
        dimension_numbers=("NCHW", "OIHW", "NCHW"))
    if norm:
        g, b, m, v = (params[k].reshape(1, -1, 1, 1) for k in ("g", "be", "m", "v"))
        out = (out - m) / jnp.sqrt(v + BN_EPS) * g + b
    else:
        out = out + params["bias"].reshape(1, -1, 1, 1)
    return jax.nn.relu(out)


def make_params(key, cin, cout):
    ks = jax.random.split(key, 6)
    return {
        "w": 0.1 * jax.random.normal(ks[0], (cout, cin, 3, 3), jnp.float32),
        "bias": 0.1 * jax.random.normal(ks[1], (cout,), jnp.float32),
        "g": 1.0 + 0.1 * jax.random.normal(ks[2], (cout,), jnp.float32),
        "be": 0.1 * jax.random.normal(ks[3], (cout,), jnp.float32),
        "m": 0.1 * jax.random.normal(ks[4], (cout,), jnp.float32),
        "v": jnp.abs(1.0 + 0.1 * jax.random.normal(ks[5], (cout,), jnp.float32)),
    }


if __name__ == "__main__":
    # TODO(synk): BatchNorm is eval-mode only (running statistics); training-mode
    # batch statistics are not computed in-kernel.
    key = jax.random.PRNGKey(0)
    kx, kp = jax.random.split(key)

    N, Cin, Cout, H, W = 2, 4, 8, 16, 16
    x = jax.random.normal(kx, (N, Cin, H, W), jnp.float32)
    params = make_params(kp, Cin, Cout)

    # norm_layer=BatchNorm2d branch: conv(bias=False) -> BN(eval) -> ReLU
    out_bn = jax.block_until_ready(basic2d_pallas(x, params, norm=True))
    ref_bn = basic2d_reference(x, params, norm=True)
    assert out_bn.shape == (N, Cout, H, W)
    # bf16 MXU inputs -> compare with a loose tolerance against the f32 reference.
    assert jnp.allclose(out_bn, ref_bn, atol=5e-2, rtol=5e-2), (
        "BN branch mismatch, max abs err = "
        f"{float(jnp.max(jnp.abs(out_bn - ref_bn)))}")

    # norm_layer=None branch (module default): conv(bias=True) -> ReLU
    out_b = jax.block_until_ready(basic2d_pallas(x, params, norm=False))
    ref_b = basic2d_reference(x, params, norm=False)
    assert out_b.shape == (N, Cout, H, W)
    assert jnp.allclose(out_b, ref_b, atol=5e-2, rtol=5e-2), (
        "bias branch mismatch, max abs err = "
        f"{float(jnp.max(jnp.abs(out_b - ref_b)))}")

    print("KERNEL_OK")
</pallas_src>

<mosaic_0001>
module attributes {stable_mosaic.version = 11 : i64} {
  func.func @basic2d_kernel(%arg0: i32, %arg1: i32, %arg2: memref<1x1x19x24x4xbf16, #tpu.memory_space<vmem>>, %arg3: memref<9x4x128xbf16, #tpu.memory_space<vmem>>, %arg4: memref<1x128xf32, #tpu.memory_space<vmem>>, %arg5: memref<1x128xf32, #tpu.memory_space<vmem>>, %arg6: memref<1x16x16x128xf32, #tpu.memory_space<vmem>>) attributes {dimension_semantics = [#tpu.dimension_semantics<parallel>, #tpu.dimension_semantics<parallel>], iteration_bounds = array<i64: 2, 1>, scalar_prefetch = 0 : i64, scratch_operands = 0 : i64, tpu.core_type = #tpu.core_type<tc>, window_params = [{transform_indices = @transform_0, window_bounds = array<i64: 1, 1, 19, 24, 4>}, {pipeline_mode = #tpu.pipeline_mode<synchronous>, transform_indices = @transform_1, window_bounds = array<i64: 9, 4, 128>}, {pipeline_mode = #tpu.pipeline_mode<synchronous>, transform_indices = @transform_2, window_bounds = array<i64: 1, 128>}, {pipeline_mode = #tpu.pipeline_mode<synchronous>, transform_indices = @transform_3, window_bounds = array<i64: 1, 128>}, {transform_indices = @transform_4, window_bounds = array<i64: 1, 16, 16, 128>}]} {
    %c0 = arith.constant 0 : index
    %c0_0 = arith.constant 0 : index
    %c0_1 = arith.constant 0 : index
    %c0_2 = arith.constant 0 : index
    %c0_3 = arith.constant 0 : index
    %0 = vector.load %arg2[%c0, %c0_0, %c0_1, %c0_2, %c0_3] : memref<1x1x19x24x4xbf16, #tpu.memory_space<vmem>>, vector<1x1x19x24x4xbf16>
    %1 = vector.shape_cast %0 : vector<1x1x19x24x4xbf16> to vector<19x24x4xbf16>
    %2 = vector.shape_cast %1 : vector<19x24x4xbf16> to vector<456x4xbf16>
    %cst = arith.constant 0.000000e+00 : f32
    %3 = vector.broadcast %cst : f32 to vector<384x128xf32>
    %4 = vector.extract_strided_slice %2 {offsets = [0, 0], sizes = [384, 4], strides = [1, 1]} : vector<456x4xbf16> to vector<384x4xbf16>
    %c0_4 = arith.constant 0 : index
    %c0_5 = arith.constant 0 : index
    %c0_6 = arith.constant 0 : index
    %5 = vector.load %arg3[%c0_4, %c0_5, %c0_6] : memref<9x4x128xbf16, #tpu.memory_space<vmem>>, vector<1x4x128xbf16>
    %6 = vector.shape_cast %5 : vector<1x4x128xbf16> to vector<4x128xbf16>
    %cst_7 = arith.constant dense<0.000000e+00> : vector<384x128xf32>
    %7 = tpu.matmul %4, %6, %cst_7 {dimension_numbers = #tpu.dot_dimension_numbers<[1], [0], [0], [1], [0, 0, 1, 1], [], []>} : vector<384x4xbf16>, vector<4x128xbf16>, vector<384x128xf32> -> vector<384x128xf32>
    %8 = arith.addf %3, %7 : vector<384x128xf32>
    %9 = vector.extract_strided_slice %2 {offsets = [1, 0], sizes = [384, 4], strides = [1, 1]} : vector<456x4xbf16> to vector<384x4xbf16>
    %c1 = arith.constant 1 : index
    %c0_8 = arith.constant 0 : index
    %c0_9 = arith.constant 0 : index
    %10 = vector.load %arg3[%c1, %c0_8, %c0_9] : memref<9x4x128xbf16, #tpu.memory_space<vmem>>, vector<1x4x128xbf16>
    %11 = vector.shape_cast %10 : vector<1x4x128xbf16> to vector<4x128xbf16>
    %cst_10 = arith.constant dense<0.000000e+00> : vector<384x128xf32>
    %12 = tpu.matmul %9, %11, %cst_10 {dimension_numbers = #tpu.dot_dimension_numbers<[1], [0], [0], [1], [0, 0, 1, 1], [], []>} : vector<384x4xbf16>, vector<4x128xbf16>, vector<384x128xf32> -> vector<384x128xf32>
    %13 = arith.addf %8, %12 : vector<384x128xf32>
    %14 = vector.extract_strided_slice %2 {offsets = [2, 0], sizes = [384, 4], strides = [1, 1]} : vector<456x4xbf16> to vector<384x4xbf16>
    %c2 = arith.constant 2 : index
    %c0_11 = arith.constant 0 : index
    %c0_12 = arith.constant 0 : index
    %15 = vector.load %arg3[%c2, %c0_11, %c0_12] : memref<9x4x128xbf16, #tpu.memory_space<vmem>>, vector<1x4x128xbf16>
    %16 = vector.shape_cast %15 : vector<1x4x128xbf16> to vector<4x128xbf16>
    %cst_13 = arith.constant dense<0.000000e+00> : vector<384x128xf32>
    %17 = tpu.matmul %14, %16, %cst_13 {dimension_numbers = #tpu.dot_dimension_numbers<[1], [0], [0], [1], [0, 0, 1, 1], [], []>} : vector<384x4xbf16>, vector<4x128xbf16>, vector<384x128xf32> -> vector<384x128xf32>
    %18 = arith.addf %13, %17 : vector<384x128xf32>
    %19 = vector.extract_strided_slice %2 {offsets = [24, 0], sizes = [384, 4], strides = [1, 1]} : vector<456x4xbf16> to vector<384x4xbf16>
    %c3 = arith.constant 3 : index
    %c0_14 = arith.constant 0 : index
    %c0_15 = arith.constant 0 : index
    %20 = vector.load %arg3[%c3, %c0_14, %c0_15] : memref<9x4x128xbf16, #tpu.memory_space<vmem>>, vector<1x4x128xbf16>
    %21 = vector.shape_cast %20 : vector<1x4x128xbf16> to vector<4x128xbf16>
    %cst_16 = arith.constant dense<0.000000e+00> : vector<384x128xf32>
    %22 = tpu.matmul %19, %21, %cst_16 {dimension_numbers = #tpu.dot_dimension_numbers<[1], [0], [0], [1], [0, 0, 1, 1], [], []>} : vector<384x4xbf16>, vector<4x128xbf16>, vector<384x128xf32> -> vector<384x128xf32>
    %23 = arith.addf %18, %22 : vector<384x128xf32>
    %24 = vector.extract_strided_slice %2 {offsets = [25, 0], sizes = [384, 4], strides = [1, 1]} : vector<456x4xbf16> to vector<384x4xbf16>
    %c4 = arith.constant 4 : index
    %c0_17 = arith.constant 0 : index
    %c0_18 = arith.constant 0 : index
    %25 = vector.load %arg3[%c4, %c0_17, %c0_18] : memref<9x4x128xbf16, #tpu.memory_space<vmem>>, vector<1x4x128xbf16>
    %26 = vector.shape_cast %25 : vector<1x4x128xbf16> to vector<4x128xbf16>
    %cst_19 = arith.constant dense<0.000000e+00> : vector<384x128xf32>
    %27 = tpu.matmul %24, %26, %cst_19 {dimension_numbers = #tpu.dot_dimension_numbers<[1], [0], [0], [1], [0, 0, 1, 1], [], []>} : vector<384x4xbf16>, vector<4x128xbf16>, vector<384x128xf32> -> vector<384x128xf32>
    %28 = arith.addf %23, %27 : vector<384x128xf32>
    %29 = vector.extract_strided_slice %2 {offsets = [26, 0], sizes = [384, 4], strides = [1, 1]} : vector<456x4xbf16> to vector<384x4xbf16>
    %c5 = arith.constant 5 : index
    %c0_20 = arith.constant 0 : index
    %c0_21 = arith.constant 0 : index
    %30 = vector.load %arg3[%c5, %c0_20, %c0_21] : memref<9x4x128xbf16, #tpu.memory_space<vmem>>, vector<1x4x128xbf16>
    %31 = vector.shape_cast %30 : vector<1x4x128xbf16> to vector<4x128xbf16>
    %cst_22 = arith.constant dense<0.000000e+00> : vector<384x128xf32>
    %32 = tpu.matmul %29, %31, %cst_22 {dimension_numbers = #tpu.dot_dimension_numbers<[1], [0], [0], [1], [0, 0, 1, 1], [], []>} : vector<384x4xbf16>, vector<4x128xbf16>, vector<384x128xf32> -> vector<384x128xf32>
    %33 = arith.addf %28, %32 : vector<384x128xf32>
    %34 = vector.extract_strided_slice %2 {offsets = [48, 0], sizes = [384, 4], strides = [1, 1]} : vector<456x4xbf16> to vector<384x4xbf16>
    %c6 = arith.constant 6 : index
    %c0_23 = arith.constant 0 : index
    %c0_24 = arith.constant 0 : index
    %35 = vector.load %arg3[%c6, %c0_23, %c0_24] : memref<9x4x128xbf16, #tpu.memory_space<vmem>>, vector<1x4x128xbf16>
    %36 = vector.shape_cast %35 : vector<1x4x128xbf16> to vector<4x128xbf16>
    %cst_25 = arith.constant dense<0.000000e+00> : vector<384x128xf32>
    %37 = tpu.matmul %34, %36, %cst_25 {dimension_numbers = #tpu.dot_dimension_numbers<[1], [0], [0], [1], [0, 0, 1, 1], [], []>} : vector<384x4xbf16>, vector<4x128xbf16>, vector<384x128xf32> -> vector<384x128xf32>
    %38 = arith.addf %33, %37 : vector<384x128xf32>
    %39 = vector.extract_strided_slice %2 {offsets = [49, 0], sizes = [384, 4], strides = [1, 1]} : vector<456x4xbf16> to vector<384x4xbf16>
    %c7 = arith.constant 7 : index
    %c0_26 = arith.constant 0 : index
    %c0_27 = arith.constant 0 : index
    %40 = vector.load %arg3[%c7, %c0_26, %c0_27] : memref<9x4x128xbf16, #tpu.memory_space<vmem>>, vector<1x4x128xbf16>
    %41 = vector.shape_cast %40 : vector<1x4x128xbf16> to vector<4x128xbf16>
    %cst_28 = arith.constant dense<0.000000e+00> : vector<384x128xf32>
    %42 = tpu.matmul %39, %41, %cst_28 {dimension_numbers = #tpu.dot_dimension_numbers<[1], [0], [0], [1], [0, 0, 1, 1], [], []>} : vector<384x4xbf16>, vector<4x128xbf16>, vector<384x128xf32> -> vector<384x128xf32>
    %43 = arith.addf %38, %42 : vector<384x128xf32>
    %44 = vector.extract_strided_slice %2 {offsets = [50, 0], sizes = [384, 4], strides = [1, 1]} : vector<456x4xbf16> to vector<384x4xbf16>
    %c8 = arith.constant 8 : index
    %c0_29 = arith.constant 0 : index
    %c0_30 = arith.constant 0 : index
    %45 = vector.load %arg3[%c8, %c0_29, %c0_30] : memref<9x4x128xbf16, #tpu.memory_space<vmem>>, vector<1x4x128xbf16>
    %46 = vector.shape_cast %45 : vector<1x4x128xbf16> to vector<4x128xbf16>
    %cst_31 = arith.constant dense<0.000000e+00> : vector<384x128xf32>
    %47 = tpu.matmul %44, %46, %cst_31 {dimension_numbers = #tpu.dot_dimension_numbers<[1], [0], [0], [1], [0, 0, 1, 1], [], []>} : vector<384x4xbf16>, vector<4x128xbf16>, vector<384x128xf32> -> vector<384x128xf32>
    %48 = arith.addf %43, %47 : vector<384x128xf32>
    %49 = vector.shape_cast %48 : vector<384x128xf32> to vector<16x24x128xf32>
    %50 = vector.extract_strided_slice %49 {offsets = [0, 0, 0], sizes = [16, 16, 128], strides = [1, 1, 1]} : vector<16x24x128xf32> to vector<16x16x128xf32>
    %c0_32 = arith.constant 0 : index
    %c0_33 = arith.constant 0 : index
    %51 = vector.load %arg4[%c0_32, %c0_33] : memref<1x128xf32, #tpu.memory_space<vmem>>, vector<1x128xf32>
    %52 = vector.shape_cast %51 : vector<1x128xf32> to vector<1x1x128xf32>
    %53 = vector.broadcast %52 : vector<1x1x128xf32> to vector<16x16x128xf32>
    %54 = arith.mulf %50, %53 : vector<16x16x128xf32>
    %c0_34 = arith.constant 0 : index
    %c0_35 = arith.constant 0 : index
    %55 = vector.load %arg5[%c0_34, %c0_35] : memref<1x128xf32, #tpu.memory_space<vmem>>, vector<1x128xf32>
    %56 = vector.shape_cast %55 : vector<1x128xf32> to vector<1x1x128xf32>
    %57 = vector.broadcast %56 : vector<1x1x128xf32> to vector<16x16x128xf32>
    %58 = arith.addf %54, %57 : vector<16x16x128xf32>
    %cst_36 = arith.constant 0.000000e+00 : f32
    %59 = vector.broadcast %cst_36 : f32 to vector<16x16x128xf32>
    %60 = arith.maximumf %58, %59 : vector<16x16x128xf32>
    %c0_37 = arith.constant 0 : index
    %c0_38 = arith.constant 0 : index
    %c0_39 = arith.constant 0 : index
    %c0_40 = arith.constant 0 : index
    %61 = vector.load %arg6[%c0_37, %c0_38, %c0_39, %c0_40] : memref<1x16x16x128xf32, #tpu.memory_space<vmem>>, vector<1x16x16x128xf32>
    %62 = vector.shape_cast %61 : vector<1x16x16x128xf32> to vector<16x16x128xf32>
    %63 = vector.shape_cast %60 : vector<16x16x128xf32> to vector<1x16x16x128xf32>
    tpu.vector_store %arg6[%c0_37, %c0_38, %c0_39, %c0_40], %63 {strides = array<i32>} : memref<1x16x16x128xf32, #tpu.memory_space<vmem>>, vector<1x16x16x128xf32>,
    return
  }
  func.func @transform_0(%arg0: i32, %arg1: i32) -> (i32, i32, i32, i32, i32) {
    %c0_i32 = arith.constant 0 : i32
    %c0_i32_0 = arith.constant 0 : i32
    %c0_i32_1 = arith.constant 0 : i32
    %c0_i32_2 = arith.constant 0 : i32
    return %arg0, %arg1, %c0_i32, %c0_i32_0, %c0_i32_1 : i32, i32, i32, i32, i32
  }
  func.func @transform_1(%arg0: i32, %arg1: i32) -> (i32, i32, i32) {
    %c0_i32 = arith.constant 0 : i32
    %c0_i32_0 = arith.constant 0 : i32
    %c0_i32_1 = arith.constant 0 : i32
    %c0_i32_2 = arith.constant 0 : i32
    return %c0_i32, %c0_i32_0, %c0_i32_1 : i32, i32, i32
  }
  func.func @transform_2(%arg0: i32, %arg1: i32) -> (i32, i32) {
    %c0_i32 = arith.constant 0 : i32
    %c0_i32_0 = arith.constant 0 : i32
    %c0_i32_1 = arith.constant 0 : i32
    return %c0_i32, %c0_i32_0 : i32, i32
  }
  func.func @transform_3(%arg0: i32, %arg1: i32) -> (i32, i32) {
    %c0_i32 = arith.constant 0 : i32
    %c0_i32_0 = arith.constant 0 : i32
    %c0_i32_1 = arith.constant 0 : i32
    return %c0_i32, %c0_i32_0 : i32, i32
  }
  func.func @transform_4(%arg0: i32, %arg1: i32) -> (i32, i32, i32, i32) {
    %c0_i32 = arith.constant 0 : i32
    %c0_i32_0 = arith.constant 0 : i32
    %c0_i32_1 = arith.constant 0 : i32
    return %arg0, %arg1, %c0_i32, %c0_i32_0 : i32, i32, i32, i32
  }
}

</mosaic_0001>

<llo_original>
// kernel: tpu_custom_call.1
$region0: #{tpu_custom_call.1}
  #allocation0 [shape = 'u32[]', space=smem, size = 0x4, offset = 0x4, fixed_abs, tag = 'smem constant byte address 0x4 - core index']
  #allocation1 [shape = 'u32[144,128]{1,0:T(1,128)}', space=vmem, size = 0x12000, scoped, tag = 'internal scratch']
  %s0 = inlined_call_operand.vmem [shape: bf16[2,1,19,24,4], index: 0, kind: input, shape index: {}]
  %s1 = inlined_call_operand.vmem [shape: bf16[9,4,128], index: 1, kind: input, shape index: {}]
  %s2 = inlined_call_operand.vmem [shape: f32[1,128], index: 2, kind: input, shape index: {}]
  %s3 = inlined_call_operand.vmem [shape: f32[1,128], index: 3, kind: input, shape index: {}]
  %s4 = inlined_call_operand.hbm [shape: f32[2,16,16,128], index: 4, kind: output, shape index: {}]
  %s5 = sld [smem:[#allocation0]]
  $region49: #{tpu_custom_call.1} parent=0
    _
  %s7 = ssub.s32 1, %s5
  %s8 = scalar_select 0, %s7, %s5
  $region1: #{tpu_custom_call.1} parent=0
    #allocation2 [shape = 'u8[262144]{0}', space=vmem, size = 0x40000, scoped, tag = 'output window, operand 0']
    #allocation3 [shape = 's32[2]{0}', space=sflag, size = 0x8, scoped, tag = 'scoped memory for tpu_custom_call.1']
    %9 = vsyncpa [#allocation3], 0
    %s10 = scalar_lea.sflag [#allocation3], 1
    %11 = vsyncpa %s10, 0
    loop: start=0, step=1, limit=4
    $region2: #{tpu_custom_call.1} parent=1 // loop_pre_header
      _
    $region3: #{tpu_custom_call.1} parent=1 // loop_header
      %s13 = sphi 0, %s17
      %p14 = scmp.ge.s32.totalorder %s13, 4
      %s20 = sphi 0, %s32
      %s21 = sphi 0, %s28
      %s22 = sphi 0, %s20
      %s23 = sphi 0, %s21
      %s24 = sphi 0, %s22
      %s25 = sphi 0, %s23
      %s37 = sphi 0, %s39
      %s40 = sphi 0, %s37
      %s41 = sphi 0, %s40
      %s57 = sphi 0, %s41
      %s61 = sphi 0, %s61
      %s63 = sphi 0, %s61
      %s64 = sphi 0, %s63
      %s78 = sphi 0, %s64
      %s82 = sphi 0, %s82
      %s84 = sphi 0, %s82
      %s85 = sphi 0, %s84
      %s99 = sphi 0, %s85
      %s103 = sphi 0, %s103
      %s105 = sphi 0, %s103
      %s106 = sphi 0, %s105
      %s120 = sphi 0, %s106
      %s128 = sphi 0, %s130
      %s131 = sphi 0, %s128
      %s132 = sphi 0, %s131
      %s148 = sphi 0, %s132
    $region4: #{tpu_custom_call.1} parent=1 // loop_header_branch
      %16 = sbr.rel (%p14) target = $region8
    $region5: #{tpu_custom_call.1} parent=1 // loop_body
      %s18 = ssub.s32 %s13, 1
      %s19 = ssub.s32 %s13, 2
      %s26 = sadd.s32 1, %s21
      %p27 = scmp.ge.s32.totalorder %s26, 1
      %s28 = scalar_select %p27, 0, %s26
      %s29 = sadd.s32 1, %s20
      %s30 = scalar_select %p27, %s29, %s20
      %p31 = scmp.ge.s32.totalorder %s30, 2
      %s32 = scalar_select %p31, 0, %s30
      %s33 = ssub.s32 %s20, %s32
      %s34 = ssub.s32 %s21, %s28
      %s35 = sor.u32 %s33, %s34
      %p36 = scmp.eq.s32.totalorder %s35, 0
      %s38 = sadd.s32 %s37, 1
      %s39 = scalar_select %p36, %s37, %s38
      %p42 = pneg %p36
      %p43 = scmp.eq.s32.totalorder %s13, 1
      %p44 = por %p42, %p43
      %p45 = scmp.ne.s32.totalorder %s37, %s40
      %p46 = scmp.eq.s32.totalorder %s13, 0
      %p47 = por %p45, %p46
      %p48 = scmp.ne.s32.totalorder %s37, %s40
      %p49 = scmp.eq.s32.totalorder %s18, 1
      %p50 = por %p48, %p49
      %p51 = scmp.ne.s32.totalorder %s40, %s41
      %p52 = scmp.eq.s32.totalorder %s18, 0
      %p53 = por %p51, %p52
      %p54 = scmp.ne.s32.totalorder %s40, %s41
      %p55 = scmp.eq.s32.totalorder %s19, 1
      %p56 = por %p54, %p55
      %p58 = scmp.ne.s32.totalorder %s41, %s57
      %p59 = scmp.eq.s32.totalorder %s19, 0
      %p60 = por %p58, %p59
      %s62 = sadd.s32 %s61, 1
      %p65 = scmp.eq.s32.totalorder %s13, 1
      %p66 = scmp.ne.s32.totalorder %s61, %s63
      %p67 = scmp.eq.s32.totalorder %s13, 0
      %p68 = por %p66, %p67
      %p69 = scmp.ne.s32.totalorder %s61, %s63
      %p70 = scmp.eq.s32.totalorder %s18, 1
      %p71 = por %p69, %p70
      %p72 = scmp.ne.s32.totalorder %s63, %s64
      %p73 = scmp.eq.s32.totalorder %s18, 0
      %p74 = por %p72, %p73
      %p75 = scmp.ne.s32.totalorder %s63, %s64
      %p76 = scmp.eq.s32.totalorder %s19, 1
      %p77 = por %p75, %p76
      %p79 = scmp.ne.s32.totalorder %s64, %s78
      %p80 = scmp.eq.s32.totalorder %s19, 0
      %p81 = por %p79, %p80
      %s83 = sadd.s32 %s82, 1
      %p86 = scmp.eq.s32.totalorder %s13, 1
      %p87 = scmp.ne.s32.totalorder %s82, %s84
      %p88 = scmp.eq.s32.totalorder %s13, 0
      %p89 = por %p87, %p88
      %p90 = scmp.ne.s32.totalorder %s82, %s84
      %p91 = scmp.eq.s32.totalorder %s18, 1
      %p92 = por %p90, %p91
      %p93 = scmp.ne.s32.totalorder %s84, %s85
      %p94 = scmp.eq.s32.totalorder %s18, 0
      %p95 = por %p93, %p94
      %p96 = scmp.ne.s32.totalorder %s84, %s85
      %p97 = scmp.eq.s32.totalorder %s19, 1
      %p98 = por %p96, %p97
      %p100 = scmp.ne.s32.totalorder %s85, %s99
      %p101 = scmp.eq.s32.totalorder %s19, 0
      %p102 = por %p100, %p101
      %s104 = sadd.s32 %s103, 1
      %p107 = scmp.eq.s32.totalorder %s13, 1
      %p108 = scmp.ne.s32.totalorder %s103, %s105
      %p109 = scmp.eq.s32.totalorder %s13, 0
      %p110 = por %p108, %p109
      %p111 = scmp.ne.s32.totalorder %s103, %s105
      %p112 = scmp.eq.s32.totalorder %s18, 1
      %p113 = por %p111, %p112
      %p114 = scmp.ne.s32.totalorder %s105, %s106
      %p115 = scmp.eq.s32.totalorder %s18, 0
      %p116 = por %p114, %p115
      %p117 = scmp.ne.s32.totalorder %s105, %s106
      %p118 = scmp.eq.s32.totalorder %s19, 1
      %p119 = por %p117, %p118
      %p121 = scmp.ne.s32.totalorder %s106, %s120
      %p122 = scmp.eq.s32.totalorder %s19, 0
      %p123 = por %p121, %p122
      %s124 = ssub.s32 %s20, %s32
      %s125 = ssub.s32 %s21, %s28
      %s126 = sor.u32 %s124, %s125
      %p127 = scmp.eq.s32.totalorder %s126, 0
      %s129 = sadd.s32 %s128, 1
      %s130 = scalar_select %p127, %s128, %s129
      %p133 = pneg %p127
      %p134 = scmp.eq.s32.totalorder %s13, 1
      %p135 = por %p133, %p134
      %p136 = scmp.ne.s32.totalorder %s128, %s131
      %p137 = scmp.eq.s32.totalorder %s13, 0
      %p138 = por %p136, %p137
      %p139 = scmp.ne.s32.totalorder %s128, %s131
      %p140 = scmp.eq.s32.totalorder %s18, 1
      %p141 = por %p139, %p140
      %p142 = scmp.ne.s32.totalorder %s131, %s132
      %p143 = scmp.eq.s32.totalorder %s18, 0
      %p144 = por %p142, %p143
      %p145 = scmp.ne.s32.totalorder %s131, %s132
      %p146 = scmp.eq.s32.totalorder %s19, 1
      %p147 = por %p145, %p146
      %p149 = scmp.ne.s32.totalorder %s132, %s148
      %p150 = scmp.eq.s32.totalorder %s19, 0
      %p151 = por %p149, %p150
      %p152 = scmp.le.s32.totalorder 1, %s13
      %p153 = scmp.lt.s32.totalorder %s13, 3
      %p154 = pnand %p152, %p153
      %p155 = pneg %p154
      // Predicated region
      $region9: #{tpu_custom_call.1} parent=5 // pred_check
        _
      $region10: #{tpu_custom_call.1} parent=5 // pred_check_branch
        %157 = sbr.rel (%p154) target = $region12
      $region11: #{tpu_custom_call.1} parent=5 // pred_region
        %s158 = ssub.s32 %s13, 1
        // Predicated region
        $region13: #{tpu_custom_call.1} parent=11 // pred_check
          %p159 = pneg %p74
        $region14: #{tpu_custom_call.1} parent=11 // pred_check_branch
          %161 = sbr.rel (%p159) target = $region16
        $region15: #{tpu_custom_call.1} parent=11 // pred_region
          _
        $region16: #{tpu_custom_call.1} parent=11 // pred_fallthru
          _
        // Predicated region
        $region17: #{tpu_custom_call.1} parent=11 // pred_check
          %p162 = pneg %p95
        $region18: #{tpu_custom_call.1} parent=11 // pred_check_branch
          %164 = sbr.rel (%p162) target = $region20
        $region19: #{tpu_custom_call.1} parent=11 // pred_region
          _
        $region20: #{tpu_custom_call.1} parent=11 // pred_fallthru
          _
        // Predicated region
        $region21: #{tpu_custom_call.1} parent=11 // pred_check
          %p165 = pneg %p116
        $region22: #{tpu_custom_call.1} parent=11 // pred_check_branch
          %167 = sbr.rel (%p165) target = $region24
        $region23: #{tpu_custom_call.1} parent=11 // pred_region
          _
        $region24: #{tpu_custom_call.1} parent=11 // pred_fallthru
          _
      $region12: #{tpu_custom_call.1} parent=5 // pred_fallthru
        _
      %p168 = scmp.lt.s32.totalorder %s13, 2
      // Predicated region
      $region25: #{tpu_custom_call.1} parent=5 // pred_check
        %p169 = pneg %p168
      $region26: #{tpu_custom_call.1} parent=5 // pred_check_branch
        %171 = sbr.rel (%p169) target = $region28
      $region27: #{tpu_custom_call.1} parent=5 // pred_region
        // Predicated region
        $region29: #{tpu_custom_call.1} parent=27 // pred_check
          %p172 = pneg %p47
        $region30: #{tpu_custom_call.1} parent=27 // pred_check_branch
          %174 = sbr.rel (%p172) target = $region32
        $region31: #{tpu_custom_call.1} parent=27 // pred_region
          %p175 = scmp.lt.s32.totalorder %s20, 1
          %s176 = scalar_select %p175, %s20, 1
          %p177 = scmp.lt.s32.totalorder %s21, 0
          %s178 = scalar_select %p177, %s21, 0
          %s179 = smul.addr %s178, 57
          %s180 = smul.addr %s176, 57
          %s181 = sadd.s32 %s179, %s180
          %s182 = smul.addr %s181, 4
          %s183 = scalar_lea.vmem %s0, %s182
        $region32: #{tpu_custom_call.1} parent=27 // pred_fallthru
          _
      $region28: #{tpu_custom_call.1} parent=5 // pred_fallthru
        _
      %p184 = scmp.le.s32.totalorder 1, %s13
      %p185 = scmp.lt.s32.totalorder %s13, 3
      %p186 = pnand %p184, %p185
      %p187 = pneg %p186
      // Predicated region
      $region33: #{tpu_custom_call.1} parent=5 // pred_check
        _
      $region34: #{tpu_custom_call.1} parent=5 // pred_check_branch
        %189 = sbr.rel (%p186) target = $region36
      $region35: #{tpu_custom_call.1} parent=5 // pred_region
        %s190 = ssub.s32 %s13, 1
        %p191 = scmp.lt.s32.totalorder %s22, 1
        %s192 = scalar_select %p191, %s22, 1
        %p193 = scmp.lt.s32.totalorder %s23, 0
        %s194 = scalar_select %p193, %s23, 0
        %s195 = smul.addr %s194, 57
        %s196 = smul.addr %s192, 57
        %s197 = sadd.s32 %s195, %s196
        %s198 = smul.addr %s197, 4
        %s199 = scalar_lea.vmem %s0, %s198
        %p200 = pneg %p53
        %p201 = pneg %p50
        %p202 = pneg %p74
        %p203 = pneg %p71
        %p204 = pneg %p95
        %p205 = pneg %p92
        %p206 = pneg %p116
        %p207 = pneg %p113
        %p208 = pneg %p144
        %p209 = pneg %p141
        %s210 = sand.u32 %s131, 1
        %s211 = scalar_lea.sflag [#allocation3], %s210
        %s212 = sand.u32 %s131, 1
        %s213 = smul.addr %s212, 256
        %s214 = scalar_lea.vmem [#allocation2], %s213
        %p215 = scmp.lt.s32.totalorder %s22, 1
        %s216 = scalar_select %p215, %s22, 1
        %p217 = scmp.lt.s32.totalorder %s23, 0
        %s218 = scalar_select %p217, %s23, 0
        %s219 = smul.addr %s218, 57
        %s220 = smul.addr %s216, 57
        %s221 = sadd.s32 %s219, %s220
        %s222 = smul.addr %s221, 4
        %s223 = scalar_lea.vmem %s0, %s222
        %s224 = smul.u32 16, %s23
        %v226 = vld [vmem:[%s223] sm:$0xf]
        %v227 = vld [vmem:[%s223 + $0x4] sm:$0xf]
        %v228 = vld [vmem:[%s223 + $0x8] sm:$0xf]
        %v229 = vld [vmem:[%s223 + $0xc] sm:$0xf]
        %v230 = vld [vmem:[%s223 + $0x10] sm:$0xf]
        %v231 = vld [vmem:[%s223 + $0x14] sm:$0xf]
        %v232 = vld [vmem:[%s223 + $0x18] sm:$0xf]
        %v233 = vld [vmem:[%s223 + $0x1c] sm:$0xf]
        %v234 = vld [vmem:[%s223 + $0x20] sm:$0xf]
        %v235 = vld [vmem:[%s223 + $0x24] sm:$0xf]
        %v236 = vld [vmem:[%s223 + $0x28] sm:$0xf]
        %v237 = vld [vmem:[%s223 + $0x2c] sm:$0xf]
        %v238 = vld [vmem:[%s223 + $0x30] sm:$0xf]
        %v239 = vld [vmem:[%s223 + $0x34] sm:$0xf]
        %v240 = vld [vmem:[%s223 + $0x38] sm:$0xf]
        %v241 = vld [vmem:[%s223 + $0x3c] sm:$0xf]
        %v242 = vld [vmem:[%s223 + $0x40] sm:$0xf]
        %v243 = vld [vmem:[%s223 + $0x44] sm:$0xf]
        %v244 = vld [vmem:[%s223 + $0x48] sm:$0xf]
        %v245 = vld [vmem:[%s223 + $0x4c] sm:$0xf]
        %v246 = vld [vmem:[%s223 + $0x50] sm:$0xf]
        %v247 = vld [vmem:[%s223 + $0x54] sm:$0xf]
        %v248 = vld [vmem:[%s223 + $0x58] sm:$0xf]
        %v249 = vld [vmem:[%s223 + $0x5c] sm:$0xf]
        %v250 = vld [vmem:[%s223 + $0x60] sm:$0xf]
        %v251 = vld [vmem:[%s223 + $0x64] sm:$0xf]
        %v252 = vld [vmem:[%s223 + $0x68] sm:$0xf]
        %v253 = vld [vmem:[%s223 + $0x6c] sm:$0xf]
        %v254 = vld [vmem:[%s223 + $0x70] sm:$0xf]
        %v255 = vld [vmem:[%s223 + $0x74] sm:$0xf]
        %v256 = vld [vmem:[%s223 + $0x78] sm:$0xf]
        %v257 = vld [vmem:[%s223 + $0x7c] sm:$0xf]
        %v258 = vld [vmem:[%s223 + $0x80] sm:$0xf]
        %v259 = vld [vmem:[%s223 + $0x84] sm:$0xf]
        %v260 = vld [vmem:[%s223 + $0x88] sm:$0xf]
        %v261 = vld [vmem:[%s223 + $0x8c] sm:$0xf]
        %v262 = vld [vmem:[%s223 + $0x90] sm:$0xf]
        %v263 = vld [vmem:[%s223 + $0x94] sm:$0xf]
        %v264 = vld [vmem:[%s223 + $0x98] sm:$0xf]
        %v265 = vld [vmem:[%s223 + $0x9c] sm:$0xf]
        %v266 = vld [vmem:[%s223 + $0xa0] sm:$0xf]
        %v267 = vld [vmem:[%s223 + $0xa4] sm:$0xf]
        %v268 = vld [vmem:[%s223 + $0xa8] sm:$0xf]
        %v269 = vld [vmem:[%s223 + $0xac] sm:$0xf]
        %v270 = vld [vmem:[%s223 + $0xb0] sm:$0xf]
        %v271 = vld [vmem:[%s223 + $0xb4] sm:$0xf]
        %v272 = vld [vmem:[%s223 + $0xb8] sm:$0xf]
        %v273 = vld [vmem:[%s223 + $0xbc] sm:$0xf]
        %v274 = vld [vmem:[%s223 + $0xc0] sm:$0xf]
        %v275 = vld [vmem:[%s223 + $0xc4] sm:$0xf]
        %v276 = vld [vmem:[%s223 + $0xc8] sm:$0xf]
        %v277 = vld [vmem:[%s223 + $0xcc] sm:$0xf]
        %v278 = vld [vmem:[%s223 + $0xd0] sm:$0xf]
        %v279 = vld [vmem:[%s223 + $0xd4] sm:$0xf]
        %v280 = vld [vmem:[%s223 + $0xd8] sm:$0xf]
        %v281 = vld [vmem:[%s1] sm:$0x3]
        %s282 = scalar_lea.vmem %s1, 2
        %v283 = vld [vmem:[%s282] sm:$0x3]
        %v333 = vunpack.c.l.b16 %v226
        %v334 = vunpack.c.l.b16 %v227
        %v335 = vunpack.c.l.b16 %v228
        %v336 = vunpack.c.l.b16 %v229
        %v337 = vunpack.c.l.b16 %v230
        %v338 = vunpack.c.l.b16 %v231
        %v339 = vunpack.c.l.b16 %v232
        %v340 = vunpack.c.l.b16 %v233
        %v341 = vunpack.c.l.b16 %v234
        %v342 = vunpack.c.l.b16 %v235
        %v343 = vunpack.c.l.b16 %v236
        %v344 = vunpack.c.l.b16 %v237
        %v345 = vunpack.c.l.b16 %v238
        %v346 = vunpack.c.l.b16 %v239
        %v347 = vunpack.c.l.b16 %v240
        %v348 = vunpack.c.l.b16 %v241
        %v349 = vunpack.c.l.b16 %v242
        %v350 = vunpack.c.l.b16 %v243
        %v351 = vunpack.c.l.b16 %v244
        %v352 = vunpack.c.l.b16 %v245
        %v353 = vunpack.c.l.b16 %v246
        %v354 = vunpack.c.l.b16 %v247
        %v355 = vunpack.c.l.b16 %v248
        %v356 = vunpack.c.l.b16 %v249
        %v357 = vunpack.c.l.b16 %v250
        %v358 = vunpack.c.l.b16 %v251
        %v359 = vunpack.c.l.b16 %v252
        %v360 = vunpack.c.l.b16 %v253
        %v361 = vunpack.c.l.b16 %v254
        %v362 = vunpack.c.l.b16 %v255
        %v363 = vunpack.c.l.b16 %v256
        %v364 = vunpack.c.l.b16 %v257
        %v365 = vunpack.c.l.b16 %v258
        %v366 = vunpack.c.l.b16 %v259
        %v367 = vunpack.c.l.b16 %v260
        %v368 = vunpack.c.l.b16 %v261
        %v369 = vunpack.c.l.b16 %v262
        %v370 = vunpack.c.l.b16 %v263
        %v371 = vunpack.c.l.b16 %v264
        %v372 = vunpack.c.l.b16 %v265
        %v373 = vunpack.c.l.b16 %v266
        %v374 = vunpack.c.l.b16 %v267
        %v375 = vunpack.c.l.b16 %v268
        %v376 = vunpack.c.l.b16 %v269
        %v377 = vunpack.c.l.b16 %v270
        %v378 = vunpack.c.l.b16 %v271
        %v379 = vunpack.c.l.b16 %v272
        %v380 = vunpack.c.l.b16 %v273
        %v381 = vunpack.c.l.b16 %v274
        %v382 = vpack.c.b16 %v334, %v333
        %v383 = vpack.c.b16 %v336, %v335
        %v384 = vpack.c.b16 %v338, %v337
        %v385 = vpack.c.b16 %v340, %v339
        %v386 = vpack.c.b16 %v342, %v341
        %v387 = vpack.c.b16 %v344, %v343
        %v388 = vpack.c.b16 %v346, %v345
        %v389 = vpack.c.b16 %v348, %v347
        %v390 = vpack.c.b16 %v350, %v349
        %v391 = vpack.c.b16 %v352, %v351
        %v392 = vpack.c.b16 %v354, %v353
        %v393 = vpack.c.b16 %v356, %v355
        %v394 = vpack.c.b16 %v358, %v357
        %v395 = vpack.c.b16 %v360, %v359
        %v396 = vpack.c.b16 %v362, %v361
        %v397 = vpack.c.b16 %v364, %v363
        %v398 = vpack.c.b16 %v366, %v365
        %v399 = vpack.c.b16 %v368, %v367
        %v400 = vpack.c.b16 %v370, %v369
        %v401 = vpack.c.b16 %v372, %v371
        %v402 = vpack.c.b16 %v374, %v373
        %v403 = vpack.c.b16 %v376, %v375
        %v404 = vpack.c.b16 %v378, %v377
        %v405 = vpack.c.b16 %v380, %v379
        %v406 = vpack.c.b16 %v381, %v381
        %vm407 = vsmask.f32 7424
        %v409 = vshrl.u32 %v382, 16
        %v411 = vshll.u32 %v382, 16
        %v413 = vrot.slane %v411, 1
        %v414 = vor.u32 %v409, %v413
        %v416 = vshll.u32 %v383, 16
        %v418 = vrot.slane %v416, 1
        %v419 = vsel %vm407, %v414, %v418
        %v420 = vshrl.u32 %v383, 16
        %v422 = vor.u32 %v420, %v418
        %v424 = vshll.u32 %v384, 16
        %v426 = vrot.slane %v424, 1
        %v427 = vsel %vm407, %v422, %v426
        %v428 = vshrl.u32 %v384, 16
        %v430 = vor.u32 %v428, %v426
        %v432 = vshll.u32 %v385, 16
        %v434 = vrot.slane %v432, 1
        %v435 = vsel %vm407, %v430, %v434
        %v436 = vshrl.u32 %v385, 16
        %v438 = vor.u32 %v436, %v434
        %v440 = vshll.u32 %v386, 16
        %v442 = vrot.slane %v440, 1
        %v443 = vsel %vm407, %v438, %v442
        %v444 = vshrl.u32 %v386, 16
        %v446 = vor.u32 %v444, %v442
        %v448 = vshll.u32 %v387, 16
        %v450 = vrot.slane %v448, 1
        %v451 = vsel %vm407, %v446, %v450
        %v452 = vshrl.u32 %v387, 16
        %v454 = vor.u32 %v452, %v450
        %v456 = vshll.u32 %v388, 16
        %v458 = vrot.slane %v456, 1
        %v459 = vsel %vm407, %v454, %v458
        %v460 = vshrl.u32 %v388, 16
        %v462 = vor.u32 %v460, %v458
        %v464 = vshll.u32 %v389, 16
        %v466 = vrot.slane %v464, 1
        %v467 = vsel %vm407, %v462, %v466
        %v468 = vshrl.u32 %v389, 16
        %v470 = vor.u32 %v468, %v466
        %v472 = vshll.u32 %v390, 16
        %v474 = vrot.slane %v472, 1
        %v475 = vsel %vm407, %v470, %v474
        %v476 = vshrl.u32 %v390, 16
        %v478 = vor.u32 %v476, %v474
        %v480 = vshll.u32 %v391, 16
        %v482 = vrot.slane %v480, 1
        %v483 = vsel %vm407, %v478, %v482
        %v484 = vshrl.u32 %v391, 16
        %v486 = vor.u32 %v484, %v482
        %v488 = vshll.u32 %v392, 16
        %v490 = vrot.slane %v488, 1
        %v491 = vsel %vm407, %v486, %v490
        %v492 = vshrl.u32 %v392, 16
        %v494 = vor.u32 %v492, %v490
        %v496 = vshll.u32 %v393, 16
        %v498 = vrot.slane %v496, 1
        %v499 = vsel %vm407, %v494, %v498
        %v500 = vshrl.u32 %v393, 16
        %v502 = vor.u32 %v500, %v498
        %v504 = vshll.u32 %v394, 16
        %v506 = vrot.slane %v504, 1
        %v507 = vsel %vm407, %v502, %v506
        %v508 = vshrl.u32 %v394, 16
        %v510 = vor.u32 %v508, %v506
        %v512 = vshll.u32 %v395, 16
        %v514 = vrot.slane %v512, 1
        %v515 = vsel %vm407, %v510, %v514
        %v516 = vshrl.u32 %v395, 16
        %v518 = vor.u32 %v516, %v514
        %v520 = vshll.u32 %v396, 16
        %v522 = vrot.slane %v520, 1
        %v523 = vsel %vm407, %v518, %v522
        %v524 = vshrl.u32 %v396, 16
        %v526 = vor.u32 %v524, %v522
        %v528 = vshll.u32 %v397, 16
        %v530 = vrot.slane %v528, 1
        %v531 = vsel %vm407, %v526, %v530
        %v532 = vshrl.u32 %v397, 16
        %v534 = vor.u32 %v532, %v530
        %v536 = vshll.u32 %v398, 16
        %v538 = vrot.slane %v536, 1
        %v539 = vsel %vm407, %v534, %v538
        %v540 = vshrl.u32 %v398, 16
        %v542 = vor.u32 %v540, %v538
        %v544 = vshll.u32 %v399, 16
        %v546 = vrot.slane %v544, 1
        %v547 = vsel %vm407, %v542, %v546
        %v548 = vshrl.u32 %v399, 16
        %v550 = vor.u32 %v548, %v546
        %v552 = vshll.u32 %v400, 16
        %v554 = vrot.slane %v552, 1
        %v555 = vsel %vm407, %v550, %v554
        %v556 = vshrl.u32 %v400, 16
        %v558 = vor.u32 %v556, %v554
        %v560 = vshll.u32 %v401, 16
        %v562 = vrot.slane %v560, 1
        %v563 = vsel %vm407, %v558, %v562
        %v564 = vshrl.u32 %v401, 16
        %v566 = vor.u32 %v564, %v562
        %v568 = vshll.u32 %v402, 16
        %v570 = vrot.slane %v568, 1
        %v571 = vsel %vm407, %v566, %v570
        %v572 = vshrl.u32 %v402, 16
        %v574 = vor.u32 %v572, %v570
        %v576 = vshll.u32 %v403, 16
        %v578 = vrot.slane %v576, 1
        %v579 = vsel %vm407, %v574, %v578
        %v580 = vshrl.u32 %v403, 16
        %v582 = vor.u32 %v580, %v578
        %v584 = vshll.u32 %v404, 16
        %v586 = vrot.slane %v584, 1
        %v587 = vsel %vm407, %v582, %v586
        %v588 = vshrl.u32 %v404, 16
        %v590 = vor.u32 %v588, %v586
        %v592 = vshll.u32 %v405, 16
        %v594 = vrot.slane %v592, 1
        %v595 = vsel %vm407, %v590, %v594
        %v596 = vshrl.u32 %v405, 16
        %v598 = vor.u32 %v596, %v594
        %v600 = vshll.u32 %v406, 16
        %v602 = vrot.slane %v600, 1
        %v603 = vsel %vm407, %v598, %v602
        %vm604 = vcmask 31744
        %v606 = vsel %vm604, %v419, 0
        %v609 = vsel %vm604, %v427, 0
        %v612 = vsel %vm604, %v435, 0
        %v615 = vsel %vm604, %v443, 0
        %v618 = vsel %vm604, %v451, 0
        %v621 = vsel %vm604, %v459, 0
        %v624 = vsel %vm604, %v467, 0
        %v627 = vsel %vm604, %v475, 0
        %v630 = vsel %vm604, %v483, 0
        %v633 = vsel %vm604, %v491, 0
        %v636 = vsel %vm604, %v499, 0
        %v639 = vsel %vm604, %v507, 0
        %v642 = vsel %vm604, %v515, 0
        %v645 = vsel %vm604, %v523, 0
        %v648 = vsel %vm604, %v531, 0
        %v651 = vsel %vm604, %v539, 0
        %v654 = vsel %vm604, %v547, 0
        %v657 = vsel %vm604, %v555, 0
        %v660 = vsel %vm604, %v563, 0
        %v663 = vsel %vm604, %v571, 0
        %v666 = vsel %vm604, %v579, 0
        %v669 = vsel %vm604, %v587, 0
        %v672 = vsel %vm604, %v595, 0
        %v675 = vsel %vm604, %v603, 0
        %vm677 = vcmask 1041408
        %v679 = vsel %vm677, %v283, 0
        %681 = vmatprep.subr.bf16.mxu0 0
        %682 = vmatpush1.bf16.msra.mxu0 0
        %683 = vmatprep.subr.bf16.mxu0 0
        %684 = vmatpush1.bf16.msra.mxu0 0
        %685 = vmatprep.subr.bf16.mxu0 0
        %686 = vmatpush1.bf16.msra.mxu0 0
        %687 = vmatprep.subr.bf16.mxu0 0
        %688 = vmatpush1.bf16.msra.mxu0 0
        %689 = vmatprep.subr.bf16.mxu0 0
        %690 = vmatpush1.bf16.msra.mxu0 0
        %691 = vmatprep.subr.bf16.mxu0 0
        %692 = vmatpush1.bf16.msra.mxu0 0
        %693 = vmatprep.subr.bf16.mxu0 0
        %694 = vmatpush1.bf16.msra.mxu0 0
        %695 = vmatprep.subr.bf16.mxu0 0
        %696 = vmatpush1.bf16.msra.mxu0 %v679
        %697 = vmatprep.subr.bf16.mxu0 0
        %698 = vmatpush2.bf16.msra.mxu0 0
        %699 = vmatprep.subr.bf16.mxu0 0
        %700 = vmatpush2.bf16.msra.mxu0 0
        %701 = vmatprep.subr.bf16.mxu0 0
        %702 = vmatpush2.bf16.msra.mxu0 0
        %703 = vmatprep.subr.bf16.mxu0 0
        %704 = vmatpush2.bf16.msra.mxu0 0
        %705 = vmatprep.subr.bf16.mxu0 0
        %706 = vmatpush2.bf16.msra.mxu0 0
        %707 = vmatprep.subr.bf16.mxu0 0
        %708 = vmatpush2.bf16.msra.mxu0 0
        %709 = vmatprep.subr.bf16.mxu0 0
        %710 = vmatpush2.bf16.msra.mxu0 0
        %711 = vmatprep.subr.bf16.mxu0 0
        %712 = vmatpush2.bf16.msra.mxu0 0
        %713 = vmatprep.mubr.bf16.mxu0 0
        %714 = vmatmul.mubr.bf16.gmra.mxu0 %v606
        %v715 = vpop.f32.mrf.mxu0
        %v716 = vadd.f32 0.0, %v715
        %v717 = vpop.f32.mrf.mxu0
        %v718 = vpop.f32.mrf.mxu0
        %v719 = vadd.f32 0.0, %v718
        %v720 = vpop.f32.mrf.mxu0
        %721 = vmatprep.mubr.bf16.mxu0 0
        %722 = vmatmul.mubr.bf16.gmra.mxu0 %v609
        %v723 = vpop.f32.mrf.mxu0
        %v724 = vpop.f32.mrf.mxu0
        %v725 = vpop.f32.mrf.mxu0
        %v726 = vadd.f32 0.0, %v725
        %v727 = vpop.f32.mrf.mxu0
        %728 = vmatprep.mubr.bf16.mxu0 0
        %729 = vmatmul.mubr.bf16.gmra.mxu0 %v612
        %v730 = vpop.f32.mrf.mxu0
        %v731 = vadd.f32 0.0, %v730
        %v732 = vpop.f32.mrf.mxu0
        %v733 = vpop.f32.mrf.mxu0
        %v734 = vpop.f32.mrf.mxu0
        %735 = vmatprep.mubr.bf16.mxu0 0
        %736 = vmatmul.mubr.bf16.gmra.mxu0 %v615
        %v737 = vpop.f32.mrf.mxu0
        %v738 = vadd.f32 0.0, %v737
        %v739 = vpop.f32.mrf.mxu0
        %v740 = vpop.f32.mrf.mxu0
        %v741 = vadd.f32 0.0, %v740
        %v742 = vpop.f32.mrf.mxu0
        %743 = vmatprep.mubr.bf16.mxu0 0
        %744 = vmatmul.mubr.bf16.gmra.mxu0 %v618
        %v745 = vpop.f32.mrf.mxu0
        %v746 = vpop.f32.mrf.mxu0
        %v747 = vpop.f32.mrf.mxu0
        %v748 = vadd.f32 0.0, %v747
        %v749 = vpop.f32.mrf.mxu0
        %750 = vmatprep.mubr.bf16.mxu0 0
        %751 = vmatmul.mubr.bf16.gmra.mxu0 %v621
        %v752 = vpop.f32.mrf.mxu0
        %v753 = vadd.f32 0.0, %v752
        %v754 = vpop.f32.mrf.mxu0
        %v755 = vpop.f32.mrf.mxu0
        %v756 = vpop.f32.mrf.mxu0
        %757 = vmatprep.mubr.bf16.mxu0 0
        %758 = vmatmul.mubr.bf16.gmra.mxu0 %v624
        %v759 = vpop.f32.mrf.mxu0
        %v760 = vadd.f32 0.0, %v759
        %v761 = vpop.f32.mrf.mxu0
        %v762 = vpop.f32.mrf.mxu0
        %v763 = vadd.f32 0.0, %v762
        %v764 = vpop.f32.mrf.mxu0
        %765 = vmatprep.mubr.bf16.mxu0 0
        %766 = vmatmul.mubr.bf16.gmra.mxu0 %v627
        %v767 = vpop.f32.mrf.mxu0
        %v768 = vpop.f32.mrf.mxu0
        %v769 = vpop.f32.mrf.mxu0
        %v770 = vadd.f32 0.0, %v769
        %v771 = vpop.f32.mrf.mxu0
        %772 = vmatprep.mubr.bf16.mxu0 0
        %773 = vmatmul.mubr.bf16.gmra.mxu0 %v630
        %v774 = vpop.f32.mrf.mxu0
        %v775 = vadd.f32 0.0, %v774
        %v776 = vpop.f32.mrf.mxu0
        %v777 = vpop.f32.mrf.mxu0
        %v778 = vpop.f32.mrf.mxu0
        %779 = vmatprep.mubr.bf16.mxu0 0
        %780 = vmatmul.mubr.bf16.gmra.mxu0 %v633
        %v781 = vpop.f32.mrf.mxu0
        %v782 = vadd.f32 0.0, %v781
        %v783 = vpop.f32.mrf.mxu0
        %v784 = vpop.f32.mrf.mxu0
        %v785 = vadd.f32 0.0, %v784
        %v786 = vpop.f32.mrf.mxu0
        %787 = vmatprep.mubr.bf16.mxu0 0
        %788 = vmatmul.mubr.bf16.gmra.mxu0 %v636
        %v789 = vpop.f32.mrf.mxu0
        %v790 = vpop.f32.mrf.mxu0
        %v791 = vpop.f32.mrf.mxu0
        %v792 = vadd.f32 0.0, %v791
        %v793 = vpop.f32.mrf.mxu0
        %794 = vmatprep.mubr.bf16.mxu0 0
        %795 = vmatmul.mubr.bf16.gmra.mxu0 %v639
        %v796 = vpop.f32.mrf.mxu0
        %v797 = vadd.f32 0.0, %v796
        %v798 = vpop.f32.mrf.mxu0
        %v799 = vpop.f32.mrf.mxu0
        %v800 = vpop.f32.mrf.mxu0
        %801 = vmatprep.mubr.bf16.mxu0 0
        %802 = vmatmul.mubr.bf16.gmra.mxu0 %v642
        %v803 = vpop.f32.mrf.mxu0
        %v804 = vadd.f32 0.0, %v803
        %v805 = vpop.f32.mrf.mxu0
        %v806 = vpop.f32.mrf.mxu0
        %v807 = vadd.f32 0.0, %v806
        %v808 = vpop.f32.mrf.mxu0
        %809 = vmatprep.mubr.bf16.mxu0 0
        %810 = vmatmul.mubr.bf16.gmra.mxu0 %v645
        %v811 = vpop.f32.mrf.mxu0
        %v812 = vpop.f32.mrf.mxu0
        %v813 = vpop.f32.mrf.mxu0
        %v814 = vadd.f32 0.0, %v813
        %v815 = vpop.f32.mrf.mxu0
        %816 = vmatprep.mubr.bf16.mxu0 0
        %817 = vmatmul.mubr.bf16.gmra.mxu0 %v648
        %v818 = vpop.f32.mrf.mxu0
        %v819 = vadd.f32 0.0, %v818
        %v820 = vpop.f32.mrf.mxu0
        %v821 = vpop.f32.mrf.mxu0
        %v822 = vpop.f32.mrf.mxu0
        %823 = vmatprep.mubr.bf16.mxu0 0
        %824 = vmatmul.mubr.bf16.gmra.mxu0 %v651
        %v825 = vpop.f32.mrf.mxu0
        %v826 = vadd.f32 0.0, %v825
        %v827 = vpop.f32.mrf.mxu0
        %v828 = vpop.f32.mrf.mxu0
        %v829 = vadd.f32 0.0, %v828
        %v830 = vpop.f32.mrf.mxu0
        %831 = vmatprep.mubr.bf16.mxu0 0
        %832 = vmatmul.mubr.bf16.gmra.mxu0 %v654
        %v833 = vpop.f32.mrf.mxu0
        %v834 = vpop.f32.mrf.mxu0
        %v835 = vpop.f32.mrf.mxu0
        %v836 = vadd.f32 0.0, %v835
        %v837 = vpop.f32.mrf.mxu0
        %838 = vmatprep.mubr.bf16.mxu0 0
        %839 = vmatmul.mubr.bf16.gmra.mxu0 %v657
        %v840 = vpop.f32.mrf.mxu0
        %v841 = vadd.f32 0.0, %v840
        %v842 = vpop.f32.mrf.mxu0
        %v843 = vpop.f32.mrf.mxu0
        %v844 = vpop.f32.mrf.mxu0
        %845 = vmatprep.mubr.bf16.mxu0 0
        %846 = vmatmul.mubr.bf16.gmra.mxu0 %v660
        %v847 = vpop.f32.mrf.mxu0
        %v848 = vadd.f32 0.0, %v847
        %v849 = vpop.f32.mrf.mxu0
        %v850 = vpop.f32.mrf.mxu0
        %v851 = vadd.f32 0.0, %v850
        %v852 = vpop.f32.mrf.mxu0
        %853 = vmatprep.mubr.bf16.mxu0 0
        %854 = vmatmul.mubr.bf16.gmra.mxu0 %v663
        %v855 = vpop.f32.mrf.mxu0
        %v856 = vpop.f32.mrf.mxu0
        %v857 = vpop.f32.mrf.mxu0
        %v858 = vadd.f32 0.0, %v857
        %v859 = vpop.f32.mrf.mxu0
        %860 = vmatprep.mubr.bf16.mxu0 0
        %861 = vmatmul.mubr.bf16.gmra.mxu0 %v666
        %v862 = vpop.f32.mrf.mxu0
        %v863 = vadd.f32 0.0, %v862
        %v864 = vpop.f32.mrf.mxu0
        %v865 = vpop.f32.mrf.mxu0
        %v866 = vpop.f32.mrf.mxu0
        %867 = vmatprep.mubr.bf16.mxu0 0
        %868 = vmatmul.mubr.bf16.gmra.mxu0 %v669
        %v869 = vpop.f32.mrf.mxu0
        %v870 = vadd.f32 0.0, %v869
        %v871 = vpop.f32.mrf.mxu0
        %v872 = vpop.f32.mrf.mxu0
        %v873 = vadd.f32 0.0, %v872
        %v874 = vpop.f32.mrf.mxu0
        %875 = vmatprep.mubr.bf16.mxu0 0
        %876 = vmatmul.mubr.bf16.gmra.mxu0 %v672
        %v877 = vpop.f32.mrf.mxu0
        %v878 = vpop.f32.mrf.mxu0
        %v879 = vpop.f32.mrf.mxu0
        %v880 = vadd.f32 0.0, %v879
        %v881 = vpop.f32.mrf.mxu0
        %882 = vmatprep.mubr.bf16.mxu0 0
        %883 = vmatmul.mubr.bf16.gmra.mxu0 %v675
        %v884 = vpop.f32.mrf.mxu0
        %v885 = vadd.f32 0.0, %v884
        %v886 = vpop.f32.mrf.mxu0
        %v887 = vpop.f32.mrf.mxu0
        %v888 = vpop.f32.mrf.mxu0
        %889 = vdwg.mxu0
        %v890 = vsel %vm604, %v382, 0
        %v892 = vsel %vm604, %v383, 0
        %v894 = vsel %vm604, %v384, 0
        %v896 = vsel %vm604, %v385, 0
        %v898 = vsel %vm604, %v386, 0
        %v900 = vsel %vm604, %v387, 0
        %v902 = vsel %vm604, %v388, 0
        %v904 = vsel %vm604, %v389, 0
        %v906 = vsel %vm604, %v390, 0
        %v908 = vsel %vm604, %v391, 0
        %v910 = vsel %vm604, %v392, 0
        %v912 = vsel %vm604, %v393, 0
        %v914 = vsel %vm604, %v394, 0
        %v916 = vsel %vm604, %v395, 0
        %v918 = vsel %vm604, %v396, 0
        %v920 = vsel %vm604, %v397, 0
        %v922 = vsel %vm604, %v398, 0
        %v924 = vsel %vm604, %v399, 0
        %v926 = vsel %vm604, %v400, 0
        %v928 = vsel %vm604, %v401, 0
        %v930 = vsel %vm604, %v402, 0
        %v932 = vsel %vm604, %v403, 0
        %v934 = vsel %vm604, %v404, 0
        %v936 = vsel %vm604, %v405, 0
        %v939 = vsel %vm677, %v281, 0
        %941 = vmatprep.subr.bf16.mxu0 0
        %942 = vmatpush1.bf16.msra.mxu0 0
        %943 = vmatprep.subr.bf16.mxu0 0
        %944 = vmatpush1.bf16.msra.mxu0 0
        %945 = vmatprep.subr.bf16.mxu0 0
        %946 = vmatpush1.bf16.msra.mxu0 0
        %947 = vmatprep.subr.bf16.mxu0 0
        %948 = vmatpush1.bf16.msra.mxu0 0
        %949 = vmatprep.subr.bf16.mxu0 0
        %950 = vmatpush1.bf16.msra.mxu0 0
        %951 = vmatprep.subr.bf16.mxu0 0
        %952 = vmatpush1.bf16.msra.mxu0 0
        %953 = vmatprep.subr.bf16.mxu0 0
        %954 = vmatpush1.bf16.msra.mxu0 0
        %955 = vmatprep.subr.bf16.mxu0 0
        %956 = vmatpush1.bf16.msra.mxu0 %v939
        %957 = vmatprep.subr.bf16.mxu0 0
        %958 = vmatpush2.bf16.msra.mxu0 0
        %959 = vmatprep.subr.bf16.mxu0 0
        %960 = vmatpush2.bf16.msra.mxu0 0
        %961 = vmatprep.subr.bf16.mxu0 0
        %962 = vmatpush2.bf16.msra.mxu0 0
        %963 = vmatprep.subr.bf16.mxu0 0
        %964 = vmatpush2.bf16.msra.mxu0 0
        %965 = vmatprep.subr.bf16.mxu0 0
        %966 = vmatpush2.bf16.msra.mxu0 0
        %967 = vmatprep.subr.bf16.mxu0 0
        %968 = vmatpush2.bf16.msra.mxu0 0
        %969 = vmatprep.subr.bf16.mxu0 0
        %970 = vmatpush2.bf16.msra.mxu0 0
        %971 = vmatprep.subr.bf16.mxu0 0
        %972 = vmatpush2.bf16.msra.mxu0 0
        %973 = vmatprep.mubr.bf16.mxu0 0
        %974 = vmatmul.mubr.bf16.gmra.mxu0 %v890
        %v975 = vpop.f32.mrf.mxu0
        %v976 = vadd.f32 %v716, %v975
        %v977 = vpop.f32.mrf.mxu0
        %v978 = vpop.f32.mrf.mxu0
        %v979 = vadd.f32 %v719, %v978
        %v980 = vpop.f32.mrf.mxu0
        %981 = vmatprep.mubr.bf16.mxu0 0
        %982 = vmatmul.mubr.bf16.gmra.mxu0 %v892
        %v983 = vpop.f32.mrf.mxu0
        %v984 = vpop.f32.mrf.mxu0
        %v985 = vpop.f32.mrf.mxu0
        %v986 = vadd.f32 %v726, %v985
        %v987 = vpop.f32.mrf.mxu0
        %988 = vmatprep.mubr.bf16.mxu0 0
        %989 = vmatmul.mubr.bf16.gmra.mxu0 %v894
        %v990 = vpop.f32.mrf.mxu0
        %v991 = vadd.f32 %v731, %v990
        %v992 = vpop.f32.mrf.mxu0
        %v993 = vpop.f32.mrf.mxu0
        %v994 = vpop.f32.mrf.mxu0
        %995 = vmatprep.mubr.bf16.mxu0 0
        %996 = vmatmul.mubr.bf16.gmra.mxu0 %v896
        %v997 = vpop.f32.mrf.mxu0
        %v998 = vadd.f32 %v738, %v997
        %v999 = vpop.f32.mrf.mxu0
        %v1000 = vpop.f32.mrf.mxu0
        %v1001 = vadd.f32 %v741, %v1000
        %v1002 = vpop.f32.mrf.mxu0
        %1003 = vmatprep.mubr.bf16.mxu0 0
        %1004 = vmatmul.mubr.bf16.gmra.mxu0 %v898
        %v1005 = vpop.f32.mrf.mxu0
        %v1006 = vpop.f32.mrf.mxu0
        %v1007 = vpop.f32.mrf.mxu0
        %v1008 = vadd.f32 %v748, %v1007
        %v1009 = vpop.f32.mrf.mxu0
        %1010 = vmatprep.mubr.bf16.mxu0 0
        %1011 = vmatmul.mubr.bf16.gmra.mxu0 %v900
        %v1012 = vpop.f32.mrf.mxu0
        %v1013 = vadd.f32 %v753, %v1012
        %v1014 = vpop.f32.mrf.mxu0
        %v1015 = vpop.f32.mrf.mxu0
        %v1016 = vpop.f32.mrf.mxu0
        %1017 = vmatprep.mubr.bf16.mxu0 0
        %1018 = vmatmul.mubr.bf16.gmra.mxu0 %v902
        %v1019 = vpop.f32.mrf.mxu0
        %v1020 = vadd.f32 %v760, %v1019
        %v1021 = vpop.f32.mrf.mxu0
        %v1022 = vpop.f32.mrf.mxu0
        %v1023 = vadd.f32 %v763, %v1022
        %v1024 = vpop.f32.mrf.mxu0
        %1025 = vmatprep.mubr.bf16.mxu0 0
        %1026 = vmatmul.mubr.bf16.gmra.mxu0 %v904
        %v1027 = vpop.f32.mrf.mxu0
        %v1028 = vpop.f32.mrf.mxu0
        %v1029 = vpop.f32.mrf.mxu0
        %v1030 = vadd.f32 %v770, %v1029
        %v1031 = vpop.f32.mrf.mxu0
        %1032 = vmatprep.mubr.bf16.mxu0 0
        %1033 = vmatmul.mubr.bf16.gmra.mxu0 %v906
        %v1034 = vpop.f32.mrf.mxu0
        %v1035 = vadd.f32 %v775, %v1034
        %v1036 = vpop.f32.mrf.mxu0
        %v1037 = vpop.f32.mrf.mxu0
        %v1038 = vpop.f32.mrf.mxu0
        %1039 = vmatprep.mubr.bf16.mxu0 0
        %1040 = vmatmul.mubr.bf16.gmra.mxu0 %v908
        %v1041 = vpop.f32.mrf.mxu0
        %v1042 = vadd.f32 %v782, %v1041
        %v1043 = vpop.f32.mrf.mxu0
        %v1044 = vpop.f32.mrf.mxu0
        %v1045 = vadd.f32 %v785, %v1044
        %v1046 = vpop.f32.mrf.mxu0
        %1047 = vmatprep.mubr.bf16.mxu0 0
        %1048 = vmatmul.mubr.bf16.gmra.mxu0 %v910
        %v1049 = vpop.f32.mrf.mxu0
        %v1050 = vpop.f32.mrf.mxu0
        %v1051 = vpop.f32.mrf.mxu0
        %v1052 = vadd.f32 %v792, %v1051
        %v1053 = vpop.f32.mrf.mxu0
        %1054 = vmatprep.mubr.bf16.mxu0 0
        %1055 = vmatmul.mubr.bf16.gmra.mxu0 %v912
        %v1056 = vpop.f32.mrf.mxu0
        %v1057 = vadd.f32 %v797, %v1056
        %v1058 = vpop.f32.mrf.mxu0
        %v1059 = vpop.f32.mrf.mxu0
        %v1060 = vpop.f32.mrf.mxu0
        %1061 = vmatprep.mubr.bf16.mxu0 0
        %1062 = vmatmul.mubr.bf16.gmra.mxu0 %v914
        %v1063 = vpop.f32.mrf.mxu0
        %v1064 = vadd.f32 %v804, %v1063
        %v1065 = vpop.f32.mrf.mxu0
        %v1066 = vpop.f32.mrf.mxu0
        %v1067 = vadd.f32 %v807, %v1066
        %v1068 = vpop.f32.mrf.mxu0
        %1069 = vmatprep.mubr.bf16.mxu0 0
        %1070 = vmatmul.mubr.bf16.gmra.mxu0 %v916
        %v1071 = vpop.f32.mrf.mxu0
        %v1072 = vpop.f32.mrf.mxu0
        %v1073 = vpop.f32.mrf.mxu0
        %v1074 = vadd.f32 %v814, %v1073
        %v1075 = vpop.f32.mrf.mxu0
        %1076 = vmatprep.mubr.bf16.mxu0 0
        %1077 = vmatmul.mubr.bf16.gmra.mxu0 %v918
        %v1078 = vpop.f32.mrf.mxu0
        %v1079 = vadd.f32 %v819, %v1078
        %v1080 = vpop.f32.mrf.mxu0
        %v1081 = vpop.f32.mrf.mxu0
        %v1082 = vpop.f32.mrf.mxu0
        %1083 = vmatprep.mubr.bf16.mxu0 0
        %1084 = vmatmul.mubr.bf16.gmra.mxu0 %v920
        %v1085 = vpop.f32.mrf.mxu0
        %v1086 = vadd.f32 %v826, %v1085
        %v1087 = vpop.f32.mrf.mxu0
        %v1088 = vpop.f32.mrf.mxu0
        %v1089 = vadd.f32 %v829, %v1088
        %v1090 = vpop.f32.mrf.mxu0
        %1091 = vmatprep.mubr.bf16.mxu0 0
        %1092 = vmatmul.mubr.bf16.gmra.mxu0 %v922
        %v1093 = vpop.f32.mrf.mxu0
        %v1094 = vpop.f32.mrf.mxu0
        %v1095 = vpop.f32.mrf.mxu0
        %v1096 = vadd.f32 %v836, %v1095
        %v1097 = vpop.f32.mrf.mxu0
        %1098 = vmatprep.mubr.bf16.mxu0 0
        %1099 = vmatmul.mubr.bf16.gmra.mxu0 %v924
        %v1100 = vpop.f32.mrf.mxu0
        %v1101 = vadd.f32 %v841, %v1100
        %v1102 = vpop.f32.mrf.mxu0
        %v1103 = vpop.f32.mrf.mxu0
        %v1104 = vpop.f32.mrf.mxu0
        %1105 = vmatprep.mubr.bf16.mxu0 0
        %1106 = vmatmul.mubr.bf16.gmra.mxu0 %v926
        %v1107 = vpop.f32.mrf.mxu0
        %v1108 = vadd.f32 %v848, %v1107
        %v1109 = vpop.f32.mrf.mxu0
        %v1110 = vpop.f32.mrf.mxu0
        %v1111 = vadd.f32 %v851, %v1110
        %v1112 = vpop.f32.mrf.mxu0
        %1113 = vmatprep.mubr.bf16.mxu0 0
        %1114 = vmatmul.mubr.bf16.gmra.mxu0 %v928
        %v1115 = vpop.f32.mrf.mxu0
        %v1116 = vpop.f32.mrf.mxu0
        %v1117 = vpop.f32.mrf.mxu0
        %v1118 = vadd.f32 %v858, %v1117
        %v1119 = vpop.f32.mrf.mxu0
        %1120 = vmatprep.mubr.bf16.mxu0 0
        %1121 = vmatmul.mubr.bf16.gmra.mxu0 %v930
        %v1122 = vpop.f32.mrf.mxu0
        %v1123 = vadd.f32 %v863, %v1122
        %v1124 = vpop.f32.mrf.mxu0
        %v1125 = vpop.f32.mrf.mxu0
        %v1126 = vpop.f32.mrf.mxu0
        %1127 = vmatprep.mubr.bf16.mxu0 0
        %1128 = vmatmul.mubr.bf16.gmra.mxu0 %v932
        %v1129 = vpop.f32.mrf.mxu0
        %v1130 = vadd.f32 %v870, %v1129
        %v1131 = vpop.f32.mrf.mxu0
        %v1132 = vpop.f32.mrf.mxu0
        %v1133 = vadd.f32 %v873, %v1132
        %v1134 = vpop.f32.mrf.mxu0
        %1135 = vmatprep.mubr.bf16.mxu0 0
        %1136 = vmatmul.mubr.bf16.gmra.mxu0 %v934
        %v1137 = vpop.f32.mrf.mxu0
        %v1138 = vpop.f32.mrf.mxu0
        %v1139 = vpop.f32.mrf.mxu0
        %v1140 = vadd.f32 %v880, %v1139
        %v1141 = vpop.f32.mrf.mxu0
        %1142 = vmatprep.mubr.bf16.mxu0 0
        %1143 = vmatmul.mubr.bf16.gmra.mxu0 %v936
        %v1144 = vpop.f32.mrf.mxu0
        %v1145 = vadd.f32 %v885, %v1144
        %v1146 = vpop.f32.mrf.mxu0
        %v1147 = vpop.f32.mrf.mxu0
        %v1148 = vpop.f32.mrf.mxu0
        %1149 = vdwg.mxu0
        %s1150 = scalar_lea.vmem %s1, 4
        %v1151 = vld [vmem:[%s1150] sm:$0x3]
        %vm1152 = vcmask 1046528
        %v1153 = vrot.slane %v382, 1
        %v1154 = vrot.slane %v383, 1
        %v1155 = vsel %vm1152, %v1153, %v1154
        %v1156 = vrot.slane %v384, 1
        %v1157 = vsel %vm1152, %v1154, %v1156
        %v1158 = vrot.slane %v385, 1
        %v1159 = vsel %vm1152, %v1156, %v1158
        %v1160 = vrot.slane %v386, 1
        %v1161 = vsel %vm1152, %v1158, %v1160
        %v1162 = vrot.slane %v387, 1
        %v1163 = vsel %vm1152, %v1160, %v1162
        %v1164 = vrot.slane %v388, 1
        %v1165 = vsel %vm1152, %v1162, %v1164
        %v1166 = vrot.slane %v389, 1
        %v1167 = vsel %vm1152, %v1164, %v1166
        %v1168 = vrot.slane %v390, 1
        %v1169 = vsel %vm1152, %v1166, %v1168
        %v1170 = vrot.slane %v391, 1
        %v1171 = vsel %vm1152, %v1168, %v1170
        %v1172 = vrot.slane %v392, 1
        %v1173 = vsel %vm1152, %v1170, %v1172
        %v1174 = vrot.slane %v393, 1
        %v1175 = vsel %vm1152, %v1172, %v1174
        %v1176 = vrot.slane %v394, 1
        %v1177 = vsel %vm1152, %v1174, %v1176
        %v1178 = vrot.slane %v395, 1
        %v1179 = vsel %vm1152, %v1176, %v1178
        %v1180 = vrot.slane %v396, 1
        %v1181 = vsel %vm1152, %v1178, %v1180
        %v1182 = vrot.slane %v397, 1
        %v1183 = vsel %vm1152, %v1180, %v1182
        %v1184 = vrot.slane %v398, 1
        %v1185 = vsel %vm1152, %v1182, %v1184
        %v1186 = vrot.slane %v399, 1
        %v1187 = vsel %vm1152, %v1184, %v1186
        %v1188 = vrot.slane %v400, 1
        %v1189 = vsel %vm1152, %v1186, %v1188
        %v1190 = vrot.slane %v401, 1
        %v1191 = vsel %vm1152, %v1188, %v1190
        %v1192 = vrot.slane %v402, 1
        %v1193 = vsel %vm1152, %v1190, %v1192
        %v1194 = vrot.slane %v403, 1
        %v1195 = vsel %vm1152, %v1192, %v1194
        %v1196 = vrot.slane %v404, 1
        %v1197 = vsel %vm1152, %v1194, %v1196
        %v1198 = vrot.slane %v405, 1
        %v1199 = vsel %vm1152, %v1196, %v1198
        %v1200 = vrot.slane %v406, 1
        %v1201 = vsel %vm1152, %v1198, %v1200
        %v1203 = vsel %vm604, %v1155, 0
        %v1206 = vsel %vm604, %v1157, 0
        %v1209 = vsel %vm604, %v1159, 0
        %v1212 = vsel %vm604, %v1161, 0
        %v1215 = vsel %vm604, %v1163, 0
        %v1218 = vsel %vm604, %v1165, 0
        %v1221 = vsel %vm604, %v1167, 0
        %v1224 = vsel %vm604, %v1169, 0
        %v1227 = vsel %vm604, %v1171, 0
        %v1230 = vsel %vm604, %v1173, 0
        %v1233 = vsel %vm604, %v1175, 0
        %v1236 = vsel %vm604, %v1177, 0
        %v1239 = vsel %vm604, %v1179, 0
        %v1242 = vsel %vm604, %v1181, 0
        %v1245 = vsel %vm604, %v1183, 0
        %v1248 = vsel %vm604, %v1185, 0
        %v1251 = vsel %vm604, %v1187, 0
        %v1254 = vsel %vm604, %v1189, 0
        %v1257 = vsel %vm604, %v1191, 0
        %v1260 = vsel %vm604, %v1193, 0
        %v1263 = vsel %vm604, %v1195, 0
        %v1266 = vsel %vm604, %v1197, 0
        %v1269 = vsel %vm604, %v1199, 0
        %v1272 = vsel %vm604, %v1201, 0
        %v1275 = vsel %vm677, %v1151, 0
        %1277 = vmatprep.subr.bf16.mxu0 0
        %1278 = vmatpush1.bf16.msra.mxu0 0
        %1279 = vmatprep.subr.bf16.mxu0 0
        %1280 = vmatpush1.bf16.msra.mxu0 0
        %1281 = vmatprep.subr.bf16.mxu0 0
        %1282 = vmatpush1.bf16.msra.mxu0 0
        %1283 = vmatprep.subr.bf16.mxu0 0
        %1284 = vmatpush1.bf16.msra.mxu0 0
        %1285 = vmatprep.subr.bf16.mxu0 0
        %1286 = vmatpush1.bf16.msra.mxu0 0
        %1287 = vmatprep.subr.bf16.mxu0 0
        %1288 = vmatpush1.bf16.msra.mxu0 0
        %1289 = vmatprep.subr.bf16.mxu0 0
        %1290 = vmatpush1.bf16.msra.mxu0 0
        %1291 = vmatprep.subr.bf16.mxu0 0
        %1292 = vmatpush1.bf16.msra.mxu0 %v1275
        %1293 = vmatprep.subr.bf16.mxu0 0
        %1294 = vmatpush2.bf16.msra.mxu0 0
        %1295 = vmatprep.subr.bf16.mxu0 0
        %1296 = vmatpush2.bf16.msra.mxu0 0
        %1297 = vmatprep.subr.bf16.mxu0 0
        %1298 = vmatpush2.bf16.msra.mxu0 0
        %1299 = vmatprep.subr.bf16.mxu0 0
        %1300 = vmatpush2.bf16.msra.mxu0 0
        %1301 = vmatprep.subr.bf16.mxu0 0
        %1302 = vmatpush2.bf16.msra.mxu0 0
        %1303 = vmatprep.subr.bf16.mxu0 0
        %1304 = vmatpush2.bf16.msra.mxu0 0
        %1305 = vmatprep.subr.bf16.mxu0 0
        %1306 = vmatpush2.bf16.msra.mxu0 0
        %1307 = vmatprep.subr.bf16.mxu0 0
        %1308 = vmatpush2.bf16.msra.mxu0 0
        %1309 = vmatprep.mubr.bf16.mxu0 0
        %1310 = vmatmul.mubr.bf16.gmra.mxu0 %v1203
        %v1311 = vpop.f32.mrf.mxu0
        %v1312 = vadd.f32 0.0, %v1311
        %v1313 = vpop.f32.mrf.mxu0
        %v1314 = vpop.f32.mrf.mxu0
        %v1315 = vadd.f32 0.0, %v1314
        %v1316 = vpop.f32.mrf.mxu0
        %1317 = vmatprep.mubr.bf16.mxu0 0
        %1318 = vmatmul.mubr.bf16.gmra.mxu0 %v1206
        %v1319 = vpop.f32.mrf.mxu0
        %v1320 = vpop.f32.mrf.mxu0
        %v1321 = vpop.f32.mrf.mxu0
        %v1322 = vadd.f32 0.0, %v1321
        %v1323 = vpop.f32.mrf.mxu0
        %1324 = vmatprep.mubr.bf16.mxu0 0
        %1325 = vmatmul.mubr.bf16.gmra.mxu0 %v1209
        %v1326 = vpop.f32.mrf.mxu0
        %v1327 = vadd.f32 0.0, %v1326
        %v1328 = vpop.f32.mrf.mxu0
        %v1329 = vpop.f32.mrf.mxu0
        %v1330 = vpop.f32.mrf.mxu0
        %1331 = vmatprep.mubr.bf16.mxu0 0
        %1332 = vmatmul.mubr.bf16.gmra.mxu0 %v1212
        %v1333 = vpop.f32.mrf.mxu0
        %v1334 = vadd.f32 0.0, %v1333
        %v1335 = vpop.f32.mrf.mxu0
        %v1336 = vpop.f32.mrf.mxu0
        %v1337 = vadd.f32 0.0, %v1336
        %v1338 = vpop.f32.mrf.mxu0
        %1339 = vmatprep.mubr.bf16.mxu0 0
        %1340 = vmatmul.mubr.bf16.gmra.mxu0 %v1215
        %v1341 = vpop.f32.mrf.mxu0
        %v1342 = vpop.f32.mrf.mxu0
        %v1343 = vpop.f32.mrf.mxu0
        %v1344 = vadd.f32 0.0, %v1343
        %v1345 = vpop.f32.mrf.mxu0
        %1346 = vmatprep.mubr.bf16.mxu0 0
        %1347 = vmatmul.mubr.bf16.gmra.mxu0 %v1218
        %v1348 = vpop.f32.mrf.mxu0
        %v1349 = vadd.f32 0.0, %v1348
        %v1350 = vpop.f32.mrf.mxu0
        %v1351 = vpop.f32.mrf.mxu0
        %v1352 = vpop.f32.mrf.mxu0
        %1353 = vmatprep.mubr.bf16.mxu0 0
        %1354 = vmatmul.mubr.bf16.gmra.mxu0 %v1221
        %v1355 = vpop.f32.mrf.mxu0
        %v1356 = vadd.f32 0.0, %v1355
        %v1357 = vpop.f32.mrf.mxu0
        %v1358 = vpop.f32.mrf.mxu0
        %v1359 = vadd.f32 0.0, %v1358
        %v1360 = vpop.f32.mrf.mxu0
        %1361 = vmatprep.mubr.bf16.mxu0 0
        %1362 = vmatmul.mubr.bf16.gmra.mxu0 %v1224
        %v1363 = vpop.f32.mrf.mxu0
        %v1364 = vpop.f32.mrf.mxu0
        %v1365 = vpop.f32.mrf.mxu0
        %v1366 = vadd.f32 0.0, %v1365
        %v1367 = vpop.f32.mrf.mxu0
        %1368 = vmatprep.mubr.bf16.mxu0 0
        %1369 = vmatmul.mubr.bf16.gmra.mxu0 %v1227
        %v1370 = vpop.f32.mrf.mxu0
        %v1371 = vadd.f32 0.0, %v1370
        %v1372 = vpop.f32.mrf.mxu0
        %v1373 = vpop.f32.mrf.mxu0
        %v1374 = vpop.f32.mrf.mxu0
        %1375 = vmatprep.mubr.bf16.mxu0 0
        %1376 = vmatmul.mubr.bf16.gmra.mxu0 %v1230
        %v1377 = vpop.f32.mrf.mxu0
        %v1378 = vadd.f32 0.0, %v1377
        %v1379 = vpop.f32.mrf.mxu0
        %v1380 = vpop.f32.mrf.mxu0
        %v1381 = vadd.f32 0.0, %v1380
        %v1382 = vpop.f32.mrf.mxu0
        %1383 = vmatprep.mubr.bf16.mxu0 0
        %1384 = vmatmul.mubr.bf16.gmra.mxu0 %v1233
        %v1385 = vpop.f32.mrf.mxu0
        %v1386 = vpop.f32.mrf.mxu0
        %v1387 = vpop.f32.mrf.mxu0
        %v1388 = vadd.f32 0.0, %v1387
        %v1389 = vpop.f32.mrf.mxu0
        %1390 = vmatprep.mubr.bf16.mxu0 0
        %1391 = vmatmul.mubr.bf16.gmra.mxu0 %v1236
        %v1392 = vpop.f32.mrf.mxu0
        %v1393 = vadd.f32 0.0, %v1392
        %v1394 = vpop.f32.mrf.mxu0
        %v1395 = vpop.f32.mrf.mxu0
        %v1396 = vpop.f32.mrf.mxu0
        %1397 = vmatprep.mubr.bf16.mxu0 0
        %1398 = vmatmul.mubr.bf16.gmra.mxu0 %v1239
        %v1399 = vpop.f32.mrf.mxu0
        %v1400 = vadd.f32 0.0, %v1399
        %v1401 = vpop.f32.mrf.mxu0
        %v1402 = vpop.f32.mrf.mxu0
        %v1403 = vadd.f32 0.0, %v1402
        %v1404 = vpop.f32.mrf.mxu0
        %1405 = vmatprep.mubr.bf16.mxu0 0
        %1406 = vmatmul.mubr.bf16.gmra.mxu0 %v1242
        %v1407 = vpop.f32.mrf.mxu0
        %v1408 = vpop.f32.mrf.mxu0
        %v1409 = vpop.f32.mrf.mxu0
        %v1410 = vadd.f32 0.0, %v1409
        %v1411 = vpop.f32.mrf.mxu0
        %1412 = vmatprep.mubr.bf16.mxu0 0
        %1413 = vmatmul.mubr.bf16.gmra.mxu0 %v1245
        %v1414 = vpop.f32.mrf.mxu0
        %v1415 = vadd.f32 0.0, %v1414
        %v1416 = vpop.f32.mrf.mxu0
        %v1417 = vpop.f32.mrf.mxu0
        %v1418 = vpop.f32.mrf.mxu0
        %1419 = vmatprep.mubr.bf16.mxu0 0
        %1420 = vmatmul.mubr.bf16.gmra.mxu0 %v1248
        %v1421 = vpop.f32.mrf.mxu0
        %v1422 = vadd.f32 0.0, %v1421
        %v1423 = vpop.f32.mrf.mxu0
        %v1424 = vpop.f32.mrf.mxu0
        %v1425 = vadd.f32 0.0, %v1424
        %v1426 = vpop.f32.mrf.mxu0
        %1427 = vmatprep.mubr.bf16.mxu0 0
        %1428 = vmatmul.mubr.bf16.gmra.mxu0 %v1251
        %v1429 = vpop.f32.mrf.mxu0
        %v1430 = vpop.f32.mrf.mxu0
        %v1431 = vpop.f32.mrf.mxu0
        %v1432 = vadd.f32 0.0, %v1431
        %v1433 = vpop.f32.mrf.mxu0
        %1434 = vmatprep.mubr.bf16.mxu0 0
        %1435 = vmatmul.mubr.bf16.gmra.mxu0 %v1254
        %v1436 = vpop.f32.mrf.mxu0
        %v1437 = vadd.f32 0.0, %v1436
        %v1438 = vpop.f32.mrf.mxu0
        %v1439 = vpop.f32.mrf.mxu0
        %v1440 = vpop.f32.mrf.mxu0
        %1441 = vmatprep.mubr.bf16.mxu0 0
        %1442 = vmatmul.mubr.bf16.gmra.mxu0 %v1257
        %v1443 = vpop.f32.mrf.mxu0
        %v1444 = vadd.f32 0.0, %v1443
        %v1445 = vpop.f32.mrf.mxu0
        %v1446 = vpop.f32.mrf.mxu0
        %v1447 = vadd.f32 0.0, %v1446
        %v1448 = vpop.f32.mrf.mxu0
        %1449 = vmatprep.mubr.bf16.mxu0 0
        %1450 = vmatmul.mubr.bf16.gmra.mxu0 %v1260
        %v1451 = vpop.f32.mrf.mxu0
        %v1452 = vpop.f32.mrf.mxu0
        %v1453 = vpop.f32.mrf.mxu0
        %v1454 = vadd.f32 0.0, %v1453
        %v1455 = vpop.f32.mrf.mxu0
        %1456 = vmatprep.mubr.bf16.mxu0 0
        %1457 = vmatmul.mubr.bf16.gmra.mxu0 %v1263
        %v1458 = vpop.f32.mrf.mxu0
        %v1459 = vadd.f32 0.0, %v1458
        %v1460 = vpop.f32.mrf.mxu0
        %v1461 = vpop.f32.mrf.mxu0
        %v1462 = vpop.f32.mrf.mxu0
        %1463 = vmatprep.mubr.bf16.mxu0 0
        %1464 = vmatmul.mubr.bf16.gmra.mxu0 %v1266
        %v1465 = vpop.f32.mrf.mxu0
        %v1466 = vadd.f32 0.0, %v1465
        %v1467 = vpop.f32.mrf.mxu0
        %v1468 = vpop.f32.mrf.mxu0
        %v1469 = vadd.f32 0.0, %v1468
        %v1470 = vpop.f32.mrf.mxu0
        %1471 = vmatprep.mubr.bf16.mxu0 0
        %1472 = vmatmul.mubr.bf16.gmra.mxu0 %v1269
        %v1473 = vpop.f32.mrf.mxu0
        %v1474 = vpop.f32.mrf.mxu0
        %v1475 = vpop.f32.mrf.mxu0
        %v1476 = vadd.f32 0.0, %v1475
        %v1477 = vpop.f32.mrf.mxu0
        %1478 = vmatprep.mubr.bf16.mxu0 0
        %1479 = vmatmul.mubr.bf16.gmra.mxu0 %v1272
        %v1480 = vpop.f32.mrf.mxu0
        %v1481 = vadd.f32 0.0, %v1480
        %v1482 = vpop.f32.mrf.mxu0
        %v1483 = vpop.f32.mrf.mxu0
        %v1484 = vpop.f32.mrf.mxu0
        %1485 = vdwg.mxu0
        %v1486 = vadd.f32 %v976, %v1312
        %v1487 = vadd.f32 %v979, %v1315
        %v1488 = vadd.f32 %v986, %v1322
        %v1489 = vadd.f32 %v991, %v1327
        %v1490 = vadd.f32 %v998, %v1334
        %v1491 = vadd.f32 %v1001, %v1337
        %v1492 = vadd.f32 %v1008, %v1344
        %v1493 = vadd.f32 %v1013, %v1349
        %v1494 = vadd.f32 %v1020, %v1356
        %v1495 = vadd.f32 %v1023, %v1359
        %v1496 = vadd.f32 %v1030, %v1366
        %v1497 = vadd.f32 %v1035, %v1371
        %v1498 = vadd.f32 %v1042, %v1378
        %v1499 = vadd.f32 %v1045, %v1381
        %v1500 = vadd.f32 %v1052, %v1388
        %v1501 = vadd.f32 %v1057, %v1393
        %v1502 = vadd.f32 %v1064, %v1400
        %v1503 = vadd.f32 %v1067, %v1403
        %v1504 = vadd.f32 %v1074, %v1410
        %v1505 = vadd.f32 %v1079, %v1415
        %v1506 = vadd.f32 %v1086, %v1422
        %v1507 = vadd.f32 %v1089, %v1425
        %v1508 = vadd.f32 %v1096, %v1432
        %v1509 = vadd.f32 %v1101, %v1437
        %v1510 = vadd.f32 %v1108, %v1444
        %v1511 = vadd.f32 %v1111, %v1447
        %v1512 = vadd.f32 %v1118, %v1454
        %v1513 = vadd.f32 %v1123, %v1459
        %v1514 = vadd.f32 %v1130, %v1466
        %v1515 = vadd.f32 %v1133, %v1469
        %v1516 = vadd.f32 %v1140, %v1476
        %v1517 = vadd.f32 %v1145, %v1481
        %s1518 = scalar_lea.vmem %s1, 6
        %v1519 = vld [vmem:[%s1518] sm:$0x3]
        %v1522 = vunpack.c.l.b16 %v275
        %v1523 = vunpack.c.l.b16 %v276
        %v1524 = vpack.c.b16 %v337, %v336
        %v1525 = vpack.c.b16 %v339, %v338
        %v1526 = vpack.c.b16 %v341, %v340
        %v1527 = vpack.c.b16 %v343, %v342
        %v1528 = vpack.c.b16 %v345, %v344
        %v1529 = vpack.c.b16 %v347, %v346
        %v1530 = vpack.c.b16 %v349, %v348
        %v1531 = vpack.c.b16 %v351, %v350
        %v1532 = vpack.c.b16 %v353, %v352
        %v1533 = vpack.c.b16 %v355, %v354
        %v1534 = vpack.c.b16 %v357, %v356
        %v1535 = vpack.c.b16 %v359, %v358
        %v1536 = vpack.c.b16 %v361, %v360
        %v1537 = vpack.c.b16 %v363, %v362
        %v1538 = vpack.c.b16 %v365, %v364
        %v1539 = vpack.c.b16 %v367, %v366
        %v1540 = vpack.c.b16 %v369, %v368
        %v1541 = vpack.c.b16 %v371, %v370
        %v1542 = vpack.c.b16 %v373, %v372
        %v1543 = vpack.c.b16 %v375, %v374
        %v1544 = vpack.c.b16 %v377, %v376
        %v1545 = vpack.c.b16 %v379, %v378
        %v1546 = vpack.c.b16 %v381, %v380
        %v1547 = vpack.c.b16 %v1523, %v1522
        %v1549 = vsel %vm604, %v1524, 0
        %v1552 = vsel %vm604, %v1525, 0
        %v1555 = vsel %vm604, %v1526, 0
        %v1558 = vsel %vm604, %v1527, 0
        %v1561 = vsel %vm604, %v1528, 0
        %v1564 = vsel %vm604, %v1529, 0
        %v1567 = vsel %vm604, %v1530, 0
        %v1570 = vsel %vm604, %v1531, 0
        %v1573 = vsel %vm604, %v1532, 0
        %v1576 = vsel %vm604, %v1533, 0
        %v1579 = vsel %vm604, %v1534, 0
        %v1582 = vsel %vm604, %v1535, 0
        %v1585 = vsel %vm604, %v1536, 0
        %v1588 = vsel %vm604, %v1537, 0
        %v1591 = vsel %vm604, %v1538, 0
        %v1594 = vsel %vm604, %v1539, 0
        %v1597 = vsel %vm604, %v1540, 0
        %v1600 = vsel %vm604, %v1541, 0
        %v1603 = vsel %vm604, %v1542, 0
        %v1606 = vsel %vm604, %v1543, 0
        %v1609 = vsel %vm604, %v1544, 0
        %v1612 = vsel %vm604, %v1545, 0
        %v1615 = vsel %vm604, %v1546, 0
        %v1618 = vsel %vm604, %v1547, 0
        %v1621 = vsel %vm677, %v1519, 0
        %1623 = vmatprep.subr.bf16.mxu0 0
        %1624 = vmatpush1.bf16.msra.mxu0 0
        %1625 = vmatprep.subr.bf16.mxu0 0
        %1626 = vmatpush1.bf16.msra.mxu0 0
        %1627 = vmatprep.subr.bf16.mxu0 0
        %1628 = vmatpush1.bf16.msra.mxu0 0
        %1629 = vmatprep.subr.bf16.mxu0 0
        %1630 = vmatpush1.bf16.msra.mxu0 0
        %1631 = vmatprep.subr.bf16.mxu0 0
        %1632 = vmatpush1.bf16.msra.mxu0 0
        %1633 = vmatprep.subr.bf16.mxu0 0
        %1634 = vmatpush1.bf16.msra.mxu0 0
        %1635 = vmatprep.subr.bf16.mxu0 0
        %1636 = vmatpush1.bf16.msra.mxu0 0
        %1637 = vmatprep.subr.bf16.mxu0 0
        %1638 = vmatpush1.bf16.msra.mxu0 %v1621
        %1639 = vmatprep.subr.bf16.mxu0 0
        %1640 = vmatpush2.bf16.msra.mxu0 0
        %1641 = vmatprep.subr.bf16.mxu0 0
        %1642 = vmatpush2.bf16.msra.mxu0 0
        %1643 = vmatprep.subr.bf16.mxu0 0
        %1644 = vmatpush2.bf16.msra.mxu0 0
        %1645 = vmatprep.subr.bf16.mxu0 0
        %1646 = vmatpush2.bf16.msra.mxu0 0
        %1647 = vmatprep.subr.bf16.mxu0 0
        %1648 = vmatpush2.bf16.msra.mxu0 0
        %1649 = vmatprep.subr.bf16.mxu0 0
        %1650 = vmatpush2.bf16.msra.mxu0 0
        %1651 = vmatprep.subr.bf16.mxu0 0
        %1652 = vmatpush2.bf16.msra.mxu0 0
        %1653 = vmatprep.subr.bf16.mxu0 0
        %1654 = vmatpush2.bf16.msra.mxu0 0
        %1655 = vmatprep.mubr.bf16.mxu0 0
        %1656 = vmatmul.mubr.bf16.gmra.mxu0 %v1549
        %v1657 = vpop.f32.mrf.mxu0
        %v1658 = vadd.f32 0.0, %v1657
        %v1659 = vpop.f32.mrf.mxu0
        %v1660 = vpop.f32.mrf.mxu0
        %v1661 = vadd.f32 0.0, %v1660
        %v1662 = vpop.f32.mrf.mxu0
        %1663 = vmatprep.mubr.bf16.mxu0 0
        %1664 = vmatmul.mubr.bf16.gmra.mxu0 %v1552
        %v1665 = vpop.f32.mrf.mxu0
        %v1666 = vpop.f32.mrf.mxu0
        %v1667 = vpop.f32.mrf.mxu0
        %v1668 = vadd.f32 0.0, %v1667
        %v1669 = vpop.f32.mrf.mxu0
        %1670 = vmatprep.mubr.bf16.mxu0 0
        %1671 = vmatmul.mubr.bf16.gmra.mxu0 %v1555
        %v1672 = vpop.f32.mrf.mxu0
        %v1673 = vadd.f32 0.0, %v1672
        %v1674 = vpop.f32.mrf.mxu0
        %v1675 = vpop.f32.mrf.mxu0
        %v1676 = vpop.f32.mrf.mxu0
        %1677 = vmatprep.mubr.bf16.mxu0 0
        %1678 = vmatmul.mubr.bf16.gmra.mxu0 %v1558
        %v1679 = vpop.f32.mrf.mxu0
        %v1680 = vadd.f32 0.0, %v1679
        %v1681 = vpop.f32.mrf.mxu0
        %v1682 = vpop.f32.mrf.mxu0
        %v1683 = vadd.f32 0.0, %v1682
        %v1684 = vpop.f32.mrf.mxu0
        %1685 = vmatprep.mubr.bf16.mxu0 0
        %1686 = vmatmul.mubr.bf16.gmra.mxu0 %v1561
        %v1687 = vpop.f32.mrf.mxu0
        %v1688 = vpop.f32.mrf.mxu0
        %v1689 = vpop.f32.mrf.mxu0
        %v1690 = vadd.f32 0.0, %v1689
        %v1691 = vpop.f32.mrf.mxu0
        %1692 = vmatprep.mubr.bf16.mxu0 0
        %1693 = vmatmul.mubr.bf16.gmra.mxu0 %v1564
        %v1694 = vpop.f32.mrf.mxu0
        %v1695 = vadd.f32 0.0, %v1694
        %v1696 = vpop.f32.mrf.mxu0
        %v1697 = vpop.f32.mrf.mxu0
        %v1698 = vpop.f32.mrf.mxu0
        %1699 = vmatprep.mubr.bf16.mxu0 0
        %1700 = vmatmul.mubr.bf16.gmra.mxu0 %v1567
        %v1701 = vpop.f32.mrf.mxu0
        %v1702 = vadd.f32 0.0, %v1701
        %v1703 = vpop.f32.mrf.mxu0
        %v1704 = vpop.f32.mrf.mxu0
        %v1705 = vadd.f32 0.0, %v1704
        %v1706 = vpop.f32.mrf.mxu0
        %1707 = vmatprep.mubr.bf16.mxu0 0
        %1708 = vmatmul.mubr.bf16.gmra.mxu0 %v1570
        %v1709 = vpop.f32.mrf.mxu0
        %v1710 = vpop.f32.mrf.mxu0
        %v1711 = vpop.f32.mrf.mxu0
        %v1712 = vadd.f32 0.0, %v1711
        %v1713 = vpop.f32.mrf.mxu0
        %1714 = vmatprep.mubr.bf16.mxu0 0
        %1715 = vmatmul.mubr.bf16.gmra.mxu0 %v1573
        %v1716 = vpop.f32.mrf.mxu0
        %v1717 = vadd.f32 0.0, %v1716
        %v1718 = vpop.f32.mrf.mxu0
        %v1719 = vpop.f32.mrf.mxu0
        %v1720 = vpop.f32.mrf.mxu0
        %1721 = vmatprep.mubr.bf16.mxu0 0
        %1722 = vmatmul.mubr.bf16.gmra.mxu0 %v1576
        %v1723 = vpop.f32.mrf.mxu0
        %v1724 = vadd.f32 0.0, %v1723
        %v1725 = vpop.f32.mrf.mxu0
        %v1726 = vpop.f32.mrf.mxu0
        %v1727 = vadd.f32 0.0, %v1726
        %v1728 = vpop.f32.mrf.mxu0
        %1729 = vmatprep.mubr.bf16.mxu0 0
        %1730 = vmatmul.mubr.bf16.gmra.mxu0 %v1579
        %v1731 = vpop.f32.mrf.mxu0
        %v1732 = vpop.f32.mrf.mxu0
        %v1733 = vpop.f32.mrf.mxu0
        %v1734 = vadd.f32 0.0, %v1733
        %v1735 = vpop.f32.mrf.mxu0
        %1736 = vmatprep.mubr.bf16.mxu0 0
        %1737 = vmatmul.mubr.bf16.gmra.mxu0 %v1582
        %v1738 = vpop.f32.mrf.mxu0
        %v1739 = vadd.f32 0.0, %v1738
        %v1740 = vpop.f32.mrf.mxu0
        %v1741 = vpop.f32.mrf.mxu0
        %v1742 = vpop.f32.mrf.mxu0
        %1743 = vmatprep.mubr.bf16.mxu0 0
        %1744 = vmatmul.mubr.bf16.gmra.mxu0 %v1585
        %v1745 = vpop.f32.mrf.mxu0
        %v1746 = vadd.f32 0.0, %v1745
        %v1747 = vpop.f32.mrf.mxu0
        %v1748 = vpop.f32.mrf.mxu0
        %v1749 = vadd.f32 0.0, %v1748
        %v1750 = vpop.f32.mrf.mxu0
        %1751 = vmatprep.mubr.bf16.mxu0 0
        %1752 = vmatmul.mubr.bf16.gmra.mxu0 %v1588
        %v1753 = vpop.f32.mrf.mxu0
        %v1754 = vpop.f32.mrf.mxu0
        %v1755 = vpop.f32.mrf.mxu0
        %v1756 = vadd.f32 0.0, %v1755
        %v1757 = vpop.f32.mrf.mxu0
        %1758 = vmatprep.mubr.bf16.mxu0 0
        %1759 = vmatmul.mubr.bf16.gmra.mxu0 %v1591
        %v1760 = vpop.f32.mrf.mxu0
        %v1761 = vadd.f32 0.0, %v1760
        %v1762 = vpop.f32.mrf.mxu0
        %v1763 = vpop.f32.mrf.mxu0
        %v1764 = vpop.f32.mrf.mxu0
        %1765 = vmatprep.mubr.bf16.mxu0 0
        %1766 = vmatmul.mubr.bf16.gmra.mxu0 %v1594
        %v1767 = vpop.f32.mrf.mxu0
        %v1768 = vadd.f32 0.0, %v1767
        %v1769 = vpop.f32.mrf.mxu0
        %v1770 = vpop.f32.mrf.mxu0
        %v1771 = vadd.f32 0.0, %v1770
        %v1772 = vpop.f32.mrf.mxu0
        %1773 = vmatprep.mubr.bf16.mxu0 0
        %1774 = vmatmul.mubr.bf16.gmra.mxu0 %v1597
        %v1775 = vpop.f32.mrf.mxu0
        %v1776 = vpop.f32.mrf.mxu0
        %v1777 = vpop.f32.mrf.mxu0
        %v1778 = vadd.f32 0.0, %v1777
        %v1779 = vpop.f32.mrf.mxu0
        %1780 = vmatprep.mubr.bf16.mxu0 0
        %1781 = vmatmul.mubr.bf16.gmra.mxu0 %v1600
        %v1782 = vpop.f32.mrf.mxu0
        %v1783 = vadd.f32 0.0, %v1782
        %v1784 = vpop.f32.mrf.mxu0
        %v1785 = vpop.f32.mrf.mxu0
        %v1786 = vpop.f32.mrf.mxu0
        %1787 = vmatprep.mubr.bf16.mxu0 0
        %1788 = vmatmul.mubr.bf16.gmra.mxu0 %v1603
        %v1789 = vpop.f32.mrf.mxu0
        %v1790 = vadd.f32 0.0, %v1789
        %v1791 = vpop.f32.mrf.mxu0
        %v1792 = vpop.f32.mrf.mxu0
        %v1793 = vadd.f32 0.0, %v1792
        %v1794 = vpop.f32.mrf.mxu0
        %1795 = vmatprep.mubr.bf16.mxu0 0
        %1796 = vmatmul.mubr.bf16.gmra.mxu0 %v1606
        %v1797 = vpop.f32.mrf.mxu0
        %v1798 = vpop.f32.mrf.mxu0
        %v1799 = vpop.f32.mrf.mxu0
        %v1800 = vadd.f32 0.0, %v1799
        %v1801 = vpop.f32.mrf.mxu0
        %1802 = vmatprep.mubr.bf16.mxu0 0
        %1803 = vmatmul.mubr.bf16.gmra.mxu0 %v1609
        %v1804 = vpop.f32.mrf.mxu0
        %v1805 = vadd.f32 0.0, %v1804
        %v1806 = vpop.f32.mrf.mxu0
        %v1807 = vpop.f32.mrf.mxu0
        %v1808 = vpop.f32.mrf.mxu0
        %1809 = vmatprep.mubr.bf16.mxu0 0
        %1810 = vmatmul.mubr.bf16.gmra.mxu0 %v1612
        %v1811 = vpop.f32.mrf.mxu0
        %v1812 = vadd.f32 0.0, %v1811
        %v1813 = vpop.f32.mrf.mxu0
        %v1814 = vpop.f32.mrf.mxu0
        %v1815 = vadd.f32 0.0, %v1814
        %v1816 = vpop.f32.mrf.mxu0
        %1817 = vmatprep.mubr.bf16.mxu0 0
        %1818 = vmatmul.mubr.bf16.gmra.mxu0 %v1615
        %v1819 = vpop.f32.mrf.mxu0
        %v1820 = vpop.f32.mrf.mxu0
        %v1821 = vpop.f32.mrf.mxu0
        %v1822 = vadd.f32 0.0, %v1821
        %v1823 = vpop.f32.mrf.mxu0
        %1824 = vmatprep.mubr.bf16.mxu0 0
        %1825 = vmatmul.mubr.bf16.gmra.mxu0 %v1618
        %v1826 = vpop.f32.mrf.mxu0
        %v1827 = vadd.f32 0.0, %v1826
        %v1828 = vpop.f32.mrf.mxu0
        %v1829 = vpop.f32.mrf.mxu0
        %v1830 = vpop.f32.mrf.mxu0
        %1831 = vdwg.mxu0
        %v1832 = vadd.f32 %v1486, %v1658
        %v1833 = vadd.f32 %v1487, %v1661
        %v1834 = vadd.f32 %v1488, %v1668
        %v1835 = vadd.f32 %v1489, %v1673
        %v1836 = vadd.f32 %v1490, %v1680
        %v1837 = vadd.f32 %v1491, %v1683
        %v1838 = vadd.f32 %v1492, %v1690
        %v1839 = vadd.f32 %v1493, %v1695
        %v1840 = vadd.f32 %v1494, %v1702
        %v1841 = vadd.f32 %v1495, %v1705
        %v1842 = vadd.f32 %v1496, %v1712
        %v1843 = vadd.f32 %v1497, %v1717
        %v1844 = vadd.f32 %v1498, %v1724
        %v1845 = vadd.f32 %v1499, %v1727
        %v1846 = vadd.f32 %v1500, %v1734
        %v1847 = vadd.f32 %v1501, %v1739
        %v1848 = vadd.f32 %v1502, %v1746
        %v1849 = vadd.f32 %v1503, %v1749
        %v1850 = vadd.f32 %v1504, %v1756
        %v1851 = vadd.f32 %v1505, %v1761
        %v1852 = vadd.f32 %v1506, %v1768
        %v1853 = vadd.f32 %v1507, %v1771
        %v1854 = vadd.f32 %v1508, %v1778
        %v1855 = vadd.f32 %v1509, %v1783
        %v1856 = vadd.f32 %v1510, %v1790
        %v1857 = vadd.f32 %v1511, %v1793
        %v1858 = vadd.f32 %v1512, %v1800
        %v1859 = vadd.f32 %v1513, %v1805
        %v1860 = vadd.f32 %v1514, %v1812
        %v1861 = vadd.f32 %v1515, %v1815
        %v1862 = vadd.f32 %v1516, %v1822
        %v1863 = vadd.f32 %v1517, %v1827
        %s1864 = scalar_lea.vmem %s1, 8
        %v1865 = vld [vmem:[%s1864] sm:$0x3]
        %v1867 = vunpack.c.l.b16 %v277
        %v1868 = vpack.c.b16 %v1867, %v1867
        %v1869 = vshrl.u32 %v1524, 16
        %v1871 = vshll.u32 %v1524, 16
        %v1873 = vrot.slane %v1871, 1
        %v1874 = vor.u32 %v1869, %v1873
        %v1875 = vshll.u32 %v1525, 16
        %v1877 = vrot.slane %v1875, 1
        %v1878 = vsel %vm407, %v1874, %v1877
        %v1879 = vshrl.u32 %v1525, 16
        %v1881 = vor.u32 %v1879, %v1877
        %v1882 = vshll.u32 %v1526, 16
        %v1884 = vrot.slane %v1882, 1
        %v1885 = vsel %vm407, %v1881, %v1884
        %v1886 = vshrl.u32 %v1526, 16
        %v1888 = vor.u32 %v1886, %v1884
        %v1889 = vshll.u32 %v1527, 16
        %v1891 = vrot.slane %v1889, 1
        %v1892 = vsel %vm407, %v1888, %v1891
        %v1893 = vshrl.u32 %v1527, 16
        %v1895 = vor.u32 %v1893, %v1891
        %v1896 = vshll.u32 %v1528, 16
        %v1898 = vrot.slane %v1896, 1
        %v1899 = vsel %vm407, %v1895, %v1898
        %v1900 = vshrl.u32 %v1528, 16
        %v1902 = vor.u32 %v1900, %v1898
        %v1903 = vshll.u32 %v1529, 16
        %v1905 = vrot.slane %v1903, 1
        %v1906 = vsel %vm407, %v1902, %v1905
        %v1907 = vshrl.u32 %v1529, 16
        %v1909 = vor.u32 %v1907, %v1905
        %v1910 = vshll.u32 %v1530, 16
        %v1912 = vrot.slane %v1910, 1
        %v1913 = vsel %vm407, %v1909, %v1912
        %v1914 = vshrl.u32 %v1530, 16
        %v1916 = vor.u32 %v1914, %v1912
        %v1917 = vshll.u32 %v1531, 16
        %v1919 = vrot.slane %v1917, 1
        %v1920 = vsel %vm407, %v1916, %v1919
        %v1921 = vshrl.u32 %v1531, 16
        %v1923 = vor.u32 %v1921, %v1919
        %v1924 = vshll.u32 %v1532, 16
        %v1926 = vrot.slane %v1924, 1
        %v1927 = vsel %vm407, %v1923, %v1926
        %v1928 = vshrl.u32 %v1532, 16
        %v1930 = vor.u32 %v1928, %v1926
        %v1931 = vshll.u32 %v1533, 16
        %v1933 = vrot.slane %v1931, 1
        %v1934 = vsel %vm407, %v1930, %v1933
        %v1935 = vshrl.u32 %v1533, 16
        %v1937 = vor.u32 %v1935, %v1933
        %v1938 = vshll.u32 %v1534, 16
        %v1940 = vrot.slane %v1938, 1
        %v1941 = vsel %vm407, %v1937, %v1940
        %v1942 = vshrl.u32 %v1534, 16
        %v1944 = vor.u32 %v1942, %v1940
        %v1945 = vshll.u32 %v1535, 16
        %v1947 = vrot.slane %v1945, 1
        %v1948 = vsel %vm407, %v1944, %v1947
        %v1949 = vshrl.u32 %v1535, 16
        %v1951 = vor.u32 %v1949, %v1947
        %v1952 = vshll.u32 %v1536, 16
        %v1954 = vrot.slane %v1952, 1
        %v1955 = vsel %vm407, %v1951, %v1954
        %v1956 = vshrl.u32 %v1536, 16
        %v1958 = vor.u32 %v1956, %v1954
        %v1959 = vshll.u32 %v1537, 16
        %v1961 = vrot.slane %v1959, 1
        %v1962 = vsel %vm407, %v1958, %v1961
        %v1963 = vshrl.u32 %v1537, 16
        %v1965 = vor.u32 %v1963, %v1961
        %v1966 = vshll.u32 %v1538, 16
        %v1968 = vrot.slane %v1966, 1
        %v1969 = vsel %vm407, %v1965, %v1968
        %v1970 = vshrl.u32 %v1538, 16
        %v1972 = vor.u32 %v1970, %v1968
        %v1973 = vshll.u32 %v1539, 16
        %v1975 = vrot.slane %v1973, 1
        %v1976 = vsel %vm407, %v1972, %v1975
        %v1977 = vshrl.u32 %v1539, 16
        %v1979 = vor.u32 %v1977, %v1975
        %v1980 = vshll.u32 %v1540, 16
        %v1982 = vrot.slane %v1980, 1
        %v1983 = vsel %vm407, %v1979, %v1982
        %v1984 = vshrl.u32 %v1540, 16
        %v1986 = vor.u32 %v1984, %v1982
        %v1987 = vshll.u32 %v1541, 16
        %v1989 = vrot.slane %v1987, 1
        %v1990 = vsel %vm407, %v1986, %v1989
        %v1991 = vshrl.u32 %v1541, 16
        %v1993 = vor.u32 %v1991, %v1989
        %v1994 = vshll.u32 %v1542, 16
        %v1996 = vrot.slane %v1994, 1
        %v1997 = vsel %vm407, %v1993, %v1996
        %v1998 = vshrl.u32 %v1542, 16
        %v2000 = vor.u32 %v1998, %v1996
        %v2001 = vshll.u32 %v1543, 16
        %v2003 = vrot.slane %v2001, 1
        %v2004 = vsel %vm407, %v2000, %v2003
        %v2005 = vshrl.u32 %v1543, 16
        %v2007 = vor.u32 %v2005, %v2003
        %v2008 = vshll.u32 %v1544, 16
        %v2010 = vrot.slane %v2008, 1
        %v2011 = vsel %vm407, %v2007, %v2010
        %v2012 = vshrl.u32 %v1544, 16
        %v2014 = vor.u32 %v2012, %v2010
        %v2015 = vshll.u32 %v1545, 16
        %v2017 = vrot.slane %v2015, 1
        %v2018 = vsel %vm407, %v2014, %v2017
        %v2019 = vshrl.u32 %v1545, 16
        %v2021 = vor.u32 %v2019, %v2017
        %v2022 = vshll.u32 %v1546, 16
        %v2024 = vrot.slane %v2022, 1
        %v2025 = vsel %vm407, %v2021, %v2024
        %v2026 = vshrl.u32 %v1546, 16
        %v2028 = vor.u32 %v2026, %v2024
        %v2029 = vshll.u32 %v1547, 16
        %v2031 = vrot.slane %v2029, 1
        %v2032 = vsel %vm407, %v2028, %v2031
        %v2033 = vshrl.u32 %v1547, 16
        %v2035 = vor.u32 %v2033, %v2031
        %v2037 = vshll.u32 %v1868, 16
        %v2039 = vrot.slane %v2037, 1
        %v2040 = vsel %vm407, %v2035, %v2039
        %v2042 = vsel %vm604, %v1878, 0
        %v2045 = vsel %vm604, %v1885, 0
        %v2048 = vsel %vm604, %v1892, 0
        %v2051 = vsel %vm604, %v1899, 0
        %v2054 = vsel %vm604, %v1906, 0
        %v2057 = vsel %vm604, %v1913, 0
        %v2060 = vsel %vm604, %v1920, 0
        %v2063 = vsel %vm604, %v1927, 0
        %v2066 = vsel %vm604, %v1934, 0
        %v2069 = vsel %vm604, %v1941, 0
        %v2072 = vsel %vm604, %v1948, 0
        %v2075 = vsel %vm604, %v1955, 0
        %v2078 = vsel %vm604, %v1962, 0
        %v2081 = vsel %vm604, %v1969, 0
        %v2084 = vsel %vm604, %v1976, 0
        %v2087 = vsel %vm604, %v1983, 0
        %v2090 = vsel %vm604, %v1990, 0
        %v2093 = vsel %vm604, %v1997, 0
        %v2096 = vsel %vm604, %v2004, 0
        %v2099 = vsel %vm604, %v2011, 0
        %v2102 = vsel %vm604, %v2018, 0
        %v2105 = vsel %vm604, %v2025, 0
        %v2108 = vsel %vm604, %v2032, 0
        %v2111 = vsel %vm604, %v2040, 0
        %v2114 = vsel %vm677, %v1865, 0
        %2116 = vmatprep.subr.bf16.mxu0 0
        %2117 = vmatpush1.bf16.msra.mxu0 0
        %2118 = vmatprep.subr.bf16.mxu0 0
        %2119 = vmatpush1.bf16.msra.mxu0 0
        %2120 = vmatprep.subr.bf16.mxu0 0
        %2121 = vmatpush1.bf16.msra.mxu0 0
        %2122 = vmatprep.subr.bf16.mxu0 0
        %2123 = vmatpush1.bf16.msra.mxu0 0
        %2124 = vmatprep.subr.bf16.mxu0 0
        %2125 = vmatpush1.bf16.msra.mxu0 0
        %2126 = vmatprep.subr.bf16.mxu0 0
        %2127 = vmatpush1.bf16.msra.mxu0 0
        %2128 = vmatprep.subr.bf16.mxu0 0
        %2129 = vmatpush1.bf16.msra.mxu0 0
        %2130 = vmatprep.subr.bf16.mxu0 0
        %2131 = vmatpush1.bf16.msra.mxu0 %v2114
        %2132 = vmatprep.subr.bf16.mxu0 0
        %2133 = vmatpush2.bf16.msra.mxu0 0
        %2134 = vmatprep.subr.bf16.mxu0 0
        %2135 = vmatpush2.bf16.msra.mxu0 0
        %2136 = vmatprep.subr.bf16.mxu0 0
        %2137 = vmatpush2.bf16.msra.mxu0 0
        %2138 = vmatprep.subr.bf16.mxu0 0
        %2139 = vmatpush2.bf16.msra.mxu0 0
        %2140 = vmatprep.subr.bf16.mxu0 0
        %2141 = vmatpush2.bf16.msra.mxu0 0
        %2142 = vmatprep.subr.bf16.mxu0 0
        %2143 = vmatpush2.bf16.msra.mxu0 0
        %2144 = vmatprep.subr.bf16.mxu0 0
        %2145 = vmatpush2.bf16.msra.mxu0 0
        %2146 = vmatprep.subr.bf16.mxu0 0
        %2147 = vmatpush2.bf16.msra.mxu0 0
        %2148 = vmatprep.mubr.bf16.mxu0 0
        %2149 = vmatmul.mubr.bf16.gmra.mxu0 %v2042
        %v2150 = vpop.f32.mrf.mxu0
        %v2151 = vadd.f32 0.0, %v2150
        %v2152 = vpop.f32.mrf.mxu0
        %v2153 = vpop.f32.mrf.mxu0
        %v2154 = vadd.f32 0.0, %v2153
        %v2155 = vpop.f32.mrf.mxu0
        %2156 = vmatprep.mubr.bf16.mxu0 0
        %2157 = vmatmul.mubr.bf16.gmra.mxu0 %v2045
        %v2158 = vpop.f32.mrf.mxu0
        %v2159 = vpop.f32.mrf.mxu0
        %v2160 = vpop.f32.mrf.mxu0
        %v2161 = vadd.f32 0.0, %v2160
        %v2162 = vpop.f32.mrf.mxu0
        %2163 = vmatprep.mubr.bf16.mxu0 0
        %2164 = vmatmul.mubr.bf16.gmra.mxu0 %v2048
        %v2165 = vpop.f32.mrf.mxu0
        %v2166 = vadd.f32 0.0, %v2165
        %v2167 = vpop.f32.mrf.mxu0
        %v2168 = vpop.f32.mrf.mxu0
        %v2169 = vpop.f32.mrf.mxu0
        %2170 = vmatprep.mubr.bf16.mxu0 0
        %2171 = vmatmul.mubr.bf16.gmra.mxu0 %v2051
        %v2172 = vpop.f32.mrf.mxu0
        %v2173 = vadd.f32 0.0, %v2172
        %v2174 = vpop.f32.mrf.mxu0
        %v2175 = vpop.f32.mrf.mxu0
        %v2176 = vadd.f32 0.0, %v2175
        %v2177 = vpop.f32.mrf.mxu0
        %2178 = vmatprep.mubr.bf16.mxu0 0
        %2179 = vmatmul.mubr.bf16.gmra.mxu0 %v2054
        %v2180 = vpop.f32.mrf.mxu0
        %v2181 = vpop.f32.mrf.mxu0
        %v2182 = vpop.f32.mrf.mxu0
        %v2183 = vadd.f32 0.0, %v2182
        %v2184 = vpop.f32.mrf.mxu0
        %2185 = vmatprep.mubr.bf16.mxu0 0
        %2186 = vmatmul.mubr.bf16.gmra.mxu0 %v2057
        %v2187 = vpop.f32.mrf.mxu0
        %v2188 = vadd.f32 0.0, %v2187
        %v2189 = vpop.f32.mrf.mxu0
        %v2190 = vpop.f32.mrf.mxu0
        %v2191 = vpop.f32.mrf.mxu0
        %2192 = vmatprep.mubr.bf16.mxu0 0
        %2193 = vmatmul.mubr.bf16.gmra.mxu0 %v2060
        %v2194 = vpop.f32.mrf.mxu0
        %v2195 = vadd.f32 0.0, %v2194
        %v2196 = vpop.f32.mrf.mxu0
        %v2197 = vpop.f32.mrf.mxu0
        %v2198 = vadd.f32 0.0, %v2197
        %v2199 = vpop.f32.mrf.mxu0
        %2200 = vmatprep.mubr.bf16.mxu0 0
        %2201 = vmatmul.mubr.bf16.gmra.mxu0 %v2063
        %v2202 = vpop.f32.mrf.mxu0
        %v2203 = vpop.f32.mrf.mxu0
        %v2204 = vpop.f32.mrf.mxu0
        %v2205 = vadd.f32 0.0, %v2204
        %v2206 = vpop.f32.mrf.mxu0
        %2207 = vmatprep.mubr.bf16.mxu0 0
        %2208 = vmatmul.mubr.bf16.gmra.mxu0 %v2066
        %v2209 = vpop.f32.mrf.mxu0
        %v2210 = vadd.f32 0.0, %v2209
        %v2211 = vpop.f32.mrf.mxu0
        %v2212 = vpop.f32.mrf.mxu0
        %v2213 = vpop.f32.mrf.mxu0
        %2214 = vmatprep.mubr.bf16.mxu0 0
        %2215 = vmatmul.mubr.bf16.gmra.mxu0 %v2069
        %v2216 = vpop.f32.mrf.mxu0
        %v2217 = vadd.f32 0.0, %v2216
        %v2218 = vpop.f32.mrf.mxu0
        %v2219 = vpop.f32.mrf.mxu0
        %v2220 = vadd.f32 0.0, %v2219
        %v2221 = vpop.f32.mrf.mxu0
        %2222 = vmatprep.mubr.bf16.mxu0 0
        %2223 = vmatmul.mubr.bf16.gmra.mxu0 %v2072
        %v2224 = vpop.f32.mrf.mxu0
        %v2225 = vpop.f32.mrf.mxu0
        %v2226 = vpop.f32.mrf.mxu0
        %v2227 = vadd.f32 0.0, %v2226
        %v2228 = vpop.f32.mrf.mxu0
        %2229 = vmatprep.mubr.bf16.mxu0 0
        %2230 = vmatmul.mubr.bf16.gmra.mxu0 %v2075
        %v2231 = vpop.f32.mrf.mxu0
        %v2232 = vadd.f32 0.0, %v2231
        %v2233 = vpop.f32.mrf.mxu0
        %v2234 = vpop.f32.mrf.mxu0
        %v2235 = vpop.f32.mrf.mxu0
        %2236 = vmatprep.mubr.bf16.mxu0 0
        %2237 = vmatmul.mubr.bf16.gmra.mxu0 %v2078
        %v2238 = vpop.f32.mrf.mxu0
        %v2239 = vadd.f32 0.0, %v2238
        %v2240 = vpop.f32.mrf.mxu0
        %v2241 = vpop.f32.mrf.mxu0
        %v2242 = vadd.f32 0.0, %v2241
        %v2243 = vpop.f32.mrf.mxu0
        %2244 = vmatprep.mubr.bf16.mxu0 0
        %2245 = vmatmul.mubr.bf16.gmra.mxu0 %v2081
        %v2246 = vpop.f32.mrf.mxu0
        %v2247 = vpop.f32.mrf.mxu0
        %v2248 = vpop.f32.mrf.mxu0
        %v2249 = vadd.f32 0.0, %v2248
        %v2250 = vpop.f32.mrf.mxu0
        %2251 = vmatprep.mubr.bf16.mxu0 0
        %2252 = vmatmul.mubr.bf16.gmra.mxu0 %v2084
        %v2253 = vpop.f32.mrf.mxu0
        %v2254 = vadd.f32 0.0, %v2253
        %v2255 = vpop.f32.mrf.mxu0
        %v2256 = vpop.f32.mrf.mxu0
        %v2257 = vpop.f32.mrf.mxu0
        %2258 = vmatprep.mubr.bf16.mxu0 0
        %2259 = vmatmul.mubr.bf16.gmra.mxu0 %v2087
        %v2260 = vpop.f32.mrf.mxu0
        %v2261 = vadd.f32 0.0, %v2260
        %v2262 = vpop.f32.mrf.mxu0
        %v2263 = vpop.f32.mrf.mxu0
        %v2264 = vadd.f32 0.0, %v2263
        %v2265 = vpop.f32.mrf.mxu0
        %2266 = vmatprep.mubr.bf16.mxu0 0
        %2267 = vmatmul.mubr.bf16.gmra.mxu0 %v2090
        %v2268 = vpop.f32.mrf.mxu0
        %v2269 = vpop.f32.mrf.mxu0
        %v2270 = vpop.f32.mrf.mxu0
        %v2271 = vadd.f32 0.0, %v2270
        %v2272 = vpop.f32.mrf.mxu0
        %2273 = vmatprep.mubr.bf16.mxu0 0
        %2274 = vmatmul.mubr.bf16.gmra.mxu0 %v2093
        %v2275 = vpop.f32.mrf.mxu0
        %v2276 = vadd.f32 0.0, %v2275
        %v2277 = vpop.f32.mrf.mxu0
        %v2278 = vpop.f32.mrf.mxu0
        %v2279 = vpop.f32.mrf.mxu0
        %2280 = vmatprep.mubr.bf16.mxu0 0
        %2281 = vmatmul.mubr.bf16.gmra.mxu0 %v2096
        %v2282 = vpop.f32.mrf.mxu0
        %v2283 = vadd.f32 0.0, %v2282
        %v2284 = vpop.f32.mrf.mxu0
        %v2285 = vpop.f32.mrf.mxu0
        %v2286 = vadd.f32 0.0, %v2285
        %v2287 = vpop.f32.mrf.mxu0
        %2288 = vmatprep.mubr.bf16.mxu0 0
        %2289 = vmatmul.mubr.bf16.gmra.mxu0 %v2099
        %v2290 = vpop.f32.mrf.mxu0
        %v2291 = vpop.f32.mrf.mxu0
        %v2292 = vpop.f32.mrf.mxu0
        %v2293 = vadd.f32 0.0, %v2292
        %v2294 = vpop.f32.mrf.mxu0
        %2295 = vmatprep.mubr.bf16.mxu0 0
        %2296 = vmatmul.mubr.bf16.gmra.mxu0 %v2102
        %v2297 = vpop.f32.mrf.mxu0
        %v2298 = vadd.f32 0.0, %v2297
        %v2299 = vpop.f32.mrf.mxu0
        %v2300 = vpop.f32.mrf.mxu0
        %v2301 = vpop.f32.mrf.mxu0
        %2302 = vmatprep.mubr.bf16.mxu0 0
        %2303 = vmatmul.mubr.bf16.gmra.mxu0 %v2105
        %v2304 = vpop.f32.mrf.mxu0
        %v2305 = vadd.f32 0.0, %v2304
        %v2306 = vpop.f32.mrf.mxu0
        %v2307 = vpop.f32.mrf.mxu0
        %v2308 = vadd.f32 0.0, %v2307
        %v2309 = vpop.f32.mrf.mxu0
        %2310 = vmatprep.mubr.bf16.mxu0 0
        %2311 = vmatmul.mubr.bf16.gmra.mxu0 %v2108
        %v2312 = vpop.f32.mrf.mxu0
        %v2313 = vpop.f32.mrf.mxu0
        %v2314 = vpop.f32.mrf.mxu0
        %v2315 = vadd.f32 0.0, %v2314
        %v2316 = vpop.f32.mrf.mxu0
        %2317 = vmatprep.mubr.bf16.mxu0 0
        %2318 = vmatmul.mubr.bf16.gmra.mxu0 %v2111
        %v2319 = vpop.f32.mrf.mxu0
        %v2320 = vadd.f32 0.0, %v2319
        %v2321 = vpop.f32.mrf.mxu0
        %v2322 = vpop.f32.mrf.mxu0
        %v2323 = vpop.f32.mrf.mxu0
        %2324 = vdwg.mxu0
        %v2325 = vadd.f32 %v1832, %v2151
        %v2326 = vadd.f32 %v1833, %v2154
        %v2327 = vadd.f32 %v1834, %v2161
        %v2328 = vadd.f32 %v1835, %v2166
        %v2329 = vadd.f32 %v1836, %v2173
        %v2330 = vadd.f32 %v1837, %v2176
        %v2331 = vadd.f32 %v1838, %v2183
        %v2332 = vadd.f32 %v1839, %v2188
        %v2333 = vadd.f32 %v1840, %v2195
        %v2334 = vadd.f32 %v1841, %v2198
        %v2335 = vadd.f32 %v1842, %v2205
        %v2336 = vadd.f32 %v1843, %v2210
        %v2337 = vadd.f32 %v1844, %v2217
        %v2338 = vadd.f32 %v1845, %v2220
        %v2339 = vadd.f32 %v1846, %v2227
        %v2340 = vadd.f32 %v1847, %v2232
        %v2341 = vadd.f32 %v1848, %v2239
        %v2342 = vadd.f32 %v1849, %v2242
        %v2343 = vadd.f32 %v1850, %v2249
        %v2344 = vadd.f32 %v1851, %v2254
        %v2345 = vadd.f32 %v1852, %v2261
        %v2346 = vadd.f32 %v1853, %v2264
        %v2347 = vadd.f32 %v1854, %v2271
        %v2348 = vadd.f32 %v1855, %v2276
        %v2349 = vadd.f32 %v1856, %v2283
        %v2350 = vadd.f32 %v1857, %v2286
        %v2351 = vadd.f32 %v1858, %v2293
        %v2352 = vadd.f32 %v1859, %v2298
        %v2353 = vadd.f32 %v1860, %v2305
        %v2354 = vadd.f32 %v1861, %v2308
        %v2355 = vadd.f32 %v1862, %v2315
        %v2356 = vadd.f32 %v1863, %v2320
        %s2357 = scalar_lea.vmem %s1, 10
        %v2358 = vld [vmem:[%s2357] sm:$0x3]
        %v2359 = vrot.slane %v1524, 1
        %v2360 = vrot.slane %v1525, 1
        %v2361 = vsel %vm1152, %v2359, %v2360
        %v2362 = vrot.slane %v1526, 1
        %v2363 = vsel %vm1152, %v2360, %v2362
        %v2364 = vrot.slane %v1527, 1
        %v2365 = vsel %vm1152, %v2362, %v2364
        %v2366 = vrot.slane %v1528, 1
        %v2367 = vsel %vm1152, %v2364, %v2366
        %v2368 = vrot.slane %v1529, 1
        %v2369 = vsel %vm1152, %v2366, %v2368
        %v2370 = vrot.slane %v1530, 1
        %v2371 = vsel %vm1152, %v2368, %v2370
        %v2372 = vrot.slane %v1531, 1
        %v2373 = vsel %vm1152, %v2370, %v2372
        %v2374 = vrot.slane %v1532, 1
        %v2375 = vsel %vm1152, %v2372, %v2374
        %v2376 = vrot.slane %v1533, 1
        %v2377 = vsel %vm1152, %v2374, %v2376
        %v2378 = vrot.slane %v1534, 1
        %v2379 = vsel %vm1152, %v2376, %v2378
        %v2380 = vrot.slane %v1535, 1
        %v2381 = vsel %vm1152, %v2378, %v2380
        %v2382 = vrot.slane %v1536, 1
        %v2383 = vsel %vm1152, %v2380, %v2382
        %v2384 = vrot.slane %v1537, 1
        %v2385 = vsel %vm1152, %v2382, %v2384
        %v2386 = vrot.slane %v1538, 1
        %v2387 = vsel %vm1152, %v2384, %v2386
        %v2388 = vrot.slane %v1539, 1
        %v2389 = vsel %vm1152, %v2386, %v2388
        %v2390 = vrot.slane %v1540, 1
        %v2391 = vsel %vm1152, %v2388, %v2390
        %v2392 = vrot.slane %v1541, 1
        %v2393 = vsel %vm1152, %v2390, %v2392
        %v2394 = vrot.slane %v1542, 1
        %v2395 = vsel %vm1152, %v2392, %v2394
        %v2396 = vrot.slane %v1543, 1
        %v2397 = vsel %vm1152, %v2394, %v2396
        %v2398 = vrot.slane %v1544, 1
        %v2399 = vsel %vm1152, %v2396, %v2398
        %v2400 = vrot.slane %v1545, 1
        %v2401 = vsel %vm1152, %v2398, %v2400
        %v2402 = vrot.slane %v1546, 1
        %v2403 = vsel %vm1152, %v2400, %v2402
        %v2404 = vrot.slane %v1547, 1
        %v2405 = vsel %vm1152, %v2402, %v2404
        %v2406 = vrot.slane %v1868, 1
        %v2407 = vsel %vm1152, %v2404, %v2406
        %v2409 = vsel %vm604, %v2361, 0
        %v2412 = vsel %vm604, %v2363, 0
        %v2415 = vsel %vm604, %v2365, 0
        %v2418 = vsel %vm604, %v2367, 0
        %v2421 = vsel %vm604, %v2369, 0
        %v2424 = vsel %vm604, %v2371, 0
        %v2427 = vsel %vm604, %v2373, 0
        %v2430 = vsel %vm604, %v2375, 0
        %v2433 = vsel %vm604, %v2377, 0
        %v2436 = vsel %vm604, %v2379, 0
        %v2439 = vsel %vm604, %v2381, 0
        %v2442 = vsel %vm604, %v2383, 0
        %v2445 = vsel %vm604, %v2385, 0
        %v2448 = vsel %vm604, %v2387, 0
        %v2451 = vsel %vm604, %v2389, 0
        %v2454 = vsel %vm604, %v2391, 0
        %v2457 = vsel %vm604, %v2393, 0
        %v2460 = vsel %vm604, %v2395, 0
        %v2463 = vsel %vm604, %v2397, 0
        %v2466 = vsel %vm604, %v2399, 0
        %v2469 = vsel %vm604, %v2401, 0
        %v2472 = vsel %vm604, %v2403, 0
        %v2475 = vsel %vm604, %v2405, 0
        %v2478 = vsel %vm604, %v2407, 0
        %v2481 = vsel %vm677, %v2358, 0
        %2483 = vmatprep.subr.bf16.mxu0 0
        %2484 = vmatpush1.bf16.msra.mxu0 0
        %2485 = vmatprep.subr.bf16.mxu0 0
        %2486 = vmatpush1.bf16.msra.mxu0 0
        %2487 = vmatprep.subr.bf16.mxu0 0
        %2488 = vmatpush1.bf16.msra.mxu0 0
        %2489 = vmatprep.subr.bf16.mxu0 0
        %2490 = vmatpush1.bf16.msra.mxu0 0
        %2491 = vmatprep.subr.bf16.mxu0 0
        %2492 = vmatpush1.bf16.msra.mxu0 0
        %2493 = vmatprep.subr.bf16.mxu0 0
        %2494 = vmatpush1.bf16.msra.mxu0 0
        %2495 = vmatprep.subr.bf16.mxu0 0
        %2496 = vmatpush1.bf16.msra.mxu0 0
        %2497 = vmatprep.subr.bf16.mxu0 0
        %2498 = vmatpush1.bf16.msra.mxu0 %v2481
        %2499 = vmatprep.subr.bf16.mxu0 0
        %2500 = vmatpush2.bf16.msra.mxu0 0
        %2501 = vmatprep.subr.bf16.mxu0 0
        %2502 = vmatpush2.bf16.msra.mxu0 0
        %2503 = vmatprep.subr.bf16.mxu0 0
        %2504 = vmatpush2.bf16.msra.mxu0 0
        %2505 = vmatprep.subr.bf16.mxu0 0
        %2506 = vmatpush2.bf16.msra.mxu0 0
        %2507 = vmatprep.subr.bf16.mxu0 0
        %2508 = vmatpush2.bf16.msra.mxu0 0
        %2509 = vmatprep.subr.bf16.mxu0 0
        %2510 = vmatpush2.bf16.msra.mxu0 0
        %2511 = vmatprep.subr.bf16.mxu0 0
        %2512 = vmatpush2.bf16.msra.mxu0 0
        %2513 = vmatprep.subr.bf16.mxu0 0
        %2514 = vmatpush2.bf16.msra.mxu0 0
        %2515 = vmatprep.mubr.bf16.mxu0 0
        %2516 = vmatmul.mubr.bf16.gmra.mxu0 %v2409
        %v2517 = vpop.f32.mrf.mxu0
        %v2518 = vadd.f32 0.0, %v2517
        %v2519 = vpop.f32.mrf.mxu0
        %v2520 = vpop.f32.mrf.mxu0
        %v2521 = vadd.f32 0.0, %v2520
        %v2522 = vpop.f32.mrf.mxu0
        %2523 = vmatprep.mubr.bf16.mxu0 0
        %2524 = vmatmul.mubr.bf16.gmra.mxu0 %v2412
        %v2525 = vpop.f32.mrf.mxu0
        %v2526 = vpop.f32.mrf.mxu0
        %v2527 = vpop.f32.mrf.mxu0
        %v2528 = vadd.f32 0.0, %v2527
        %v2529 = vpop.f32.mrf.mxu0
        %2530 = vmatprep.mubr.bf16.mxu0 0
        %2531 = vmatmul.mubr.bf16.gmra.mxu0 %v2415
        %v2532 = vpop.f32.mrf.mxu0
        %v2533 = vadd.f32 0.0, %v2532
        %v2534 = vpop.f32.mrf.mxu0
        %v2535 = vpop.f32.mrf.mxu0
        %v2536 = vpop.f32.mrf.mxu0
        %2537 = vmatprep.mubr.bf16.mxu0 0
        %2538 = vmatmul.mubr.bf16.gmra.mxu0 %v2418
        %v2539 = vpop.f32.mrf.mxu0
        %v2540 = vadd.f32 0.0, %v2539
        %v2541 = vpop.f32.mrf.mxu0
        %v2542 = vpop.f32.mrf.mxu0
        %v2543 = vadd.f32 0.0, %v2542
        %v2544 = vpop.f32.mrf.mxu0
        %2545 = vmatprep.mubr.bf16.mxu0 0
        %2546 = vmatmul.mubr.bf16.gmra.mxu0 %v2421
        %v2547 = vpop.f32.mrf.mxu0
        %v2548 = vpop.f32.mrf.mxu0
        %v2549 = vpop.f32.mrf.mxu0
        %v2550 = vadd.f32 0.0, %v2549
        %v2551 = vpop.f32.mrf.mxu0
        %2552 = vmatprep.mubr.bf16.mxu0 0
        %2553 = vmatmul.mubr.bf16.gmra.mxu0 %v2424
        %v2554 = vpop.f32.mrf.mxu0
        %v2555 = vadd.f32 0.0, %v2554
        %v2556 = vpop.f32.mrf.mxu0
        %v2557 = vpop.f32.mrf.mxu0
        %v2558 = vpop.f32.mrf.mxu0
        %2559 = vmatprep.mubr.bf16.mxu0 0
        %2560 = vmatmul.mubr.bf16.gmra.mxu0 %v2427
        %v2561 = vpop.f32.mrf.mxu0
        %v2562 = vadd.f32 0.0, %v2561
        %v2563 = vpop.f32.mrf.mxu0
        %v2564 = vpop.f32.mrf.mxu0
        %v2565 = vadd.f32 0.0, %v2564
        %v2566 = vpop.f32.mrf.mxu0
        %2567 = vmatprep.mubr.bf16.mxu0 0
        %2568 = vmatmul.mubr.bf16.gmra.mxu0 %v2430
        %v2569 = vpop.f32.mrf.mxu0
        %v2570 = vpop.f32.mrf.mxu0
        %v2571 = vpop.f32.mrf.mxu0
        %v2572 = vadd.f32 0.0, %v2571
        %v2573 = vpop.f32.mrf.mxu0
        %2574 = vmatprep.mubr.bf16.mxu0 0
        %2575 = vmatmul.mubr.bf16.gmra.mxu0 %v2433
        %v2576 = vpop.f32.mrf.mxu0
        %v2577 = vadd.f32 0.0, %v2576
        %v2578 = vpop.f32.mrf.mxu0
        %v2579 = vpop.f32.mrf.mxu0
        %v2580 = vpop.f32.mrf.mxu0
        %2581 = vmatprep.mubr.bf16.mxu0 0
        %2582 = vmatmul.mubr.bf16.gmra.mxu0 %v2436
        %v2583 = vpop.f32.mrf.mxu0
        %v2584 = vadd.f32 0.0, %v2583
        %v2585 = vpop.f32.mrf.mxu0
        %v2586 = vpop.f32.mrf.mxu0
        %v2587 = vadd.f32 0.0, %v2586
        %v2588 = vpop.f32.mrf.mxu0
        %2589 = vmatprep.mubr.bf16.mxu0 0
        %2590 = vmatmul.mubr.bf16.gmra.mxu0 %v2439
        %v2591 = vpop.f32.mrf.mxu0
        %v2592 = vpop.f32.mrf.mxu0
        %v2593 = vpop.f32.mrf.mxu0
        %v2594 = vadd.f32 0.0, %v2593
        %v2595 = vpop.f32.mrf.mxu0
        %2596 = vmatprep.mubr.bf16.mxu0 0
        %2597 = vmatmul.mubr.bf16.gmra.mxu0 %v2442
        %v2598 = vpop.f32.mrf.mxu0
        %v2599 = vadd.f32 0.0, %v2598
        %v2600 = vpop.f32.mrf.mxu0
        %v2601 = vpop.f32.mrf.mxu0
        %v2602 = vpop.f32.mrf.mxu0
        %2603 = vmatprep.mubr.bf16.mxu0 0
        %2604 = vmatmul.mubr.bf16.gmra.mxu0 %v2445
        %v2605 = vpop.f32.mrf.mxu0
        %v2606 = vadd.f32 0.0, %v2605
        %v2607 = vpop.f32.mrf.mxu0
        %v2608 = vpop.f32.mrf.mxu0
        %v2609 = vadd.f32 0.0, %v2608
        %v2610 = vpop.f32.mrf.mxu0
        %2611 = vmatprep.mubr.bf16.mxu0 0
        %2612 = vmatmul.mubr.bf16.gmra.mxu0 %v2448
        %v2613 = vpop.f32.mrf.mxu0
        %v2614 = vpop.f32.mrf.mxu0
        %v2615 = vpop.f32.mrf.mxu0
        %v2616 = vadd.f32 0.0, %v2615
        %v2617 = vpop.f32.mrf.mxu0
        %2618 = vmatprep.mubr.bf16.mxu0 0
        %2619 = vmatmul.mubr.bf16.gmra.mxu0 %v2451
        %v2620 = vpop.f32.mrf.mxu0
        %v2621 = vadd.f32 0.0, %v2620
        %v2622 = vpop.f32.mrf.mxu0
        %v2623 = vpop.f32.mrf.mxu0
        %v2624 = vpop.f32.mrf.mxu0
        %2625 = vmatprep.mubr.bf16.mxu0 0
        %2626 = vmatmul.mubr.bf16.gmra.mxu0 %v2454
        %v2627 = vpop.f32.mrf.mxu0
        %v2628 = vadd.f32 0.0, %v2627
        %v2629 = vpop.f32.mrf.mxu0
        %v2630 = vpop.f32.mrf.mxu0
        %v2631 = vadd.f32 0.0, %v2630
        %v2632 = vpop.f32.mrf.mxu0
        %2633 = vmatprep.mubr.bf16.mxu0 0
        %2634 = vmatmul.mubr.bf16.gmra.mxu0 %v2457
        %v2635 = vpop.f32.mrf.mxu0
        %v2636 = vpop.f32.mrf.mxu0
        %v2637 = vpop.f32.mrf.mxu0
        %v2638 = vadd.f32 0.0, %v2637
        %v2639 = vpop.f32.mrf.mxu0
        %2640 = vmatprep.mubr.bf16.mxu0 0
        %2641 = vmatmul.mubr.bf16.gmra.mxu0 %v2460
        %v2642 = vpop.f32.mrf.mxu0
        %v2643 = vadd.f32 0.0, %v2642
        %v2644 = vpop.f32.mrf.mxu0
        %v2645 = vpop.f32.mrf.mxu0
        %v2646 = vpop.f32.mrf.mxu0
        %2647 = vmatprep.mubr.bf16.mxu0 0
        %2648 = vmatmul.mubr.bf16.gmra.mxu0 %v2463
        %v2649 = vpop.f32.mrf.mxu0
        %v2650 = vadd.f32 0.0, %v2649
        %v2651 = vpop.f32.mrf.mxu0
        %v2652 = vpop.f32.mrf.mxu0
        %v2653 = vadd.f32 0.0, %v2652
        %v2654 = vpop.f32.mrf.mxu0
        %2655 = vmatprep.mubr.bf16.mxu0 0
        %2656 = vmatmul.mubr.bf16.gmra.mxu0 %v2466
        %v2657 = vpop.f32.mrf.mxu0
        %v2658 = vpop.f32.mrf.mxu0
        %v2659 = vpop.f32.mrf.mxu0
        %v2660 = vadd.f32 0.0, %v2659
        %v2661 = vpop.f32.mrf.mxu0
        %2662 = vmatprep.mubr.bf16.mxu0 0
        %2663 = vmatmul.mubr.bf16.gmra.mxu0 %v2469
        %v2664 = vpop.f32.mrf.mxu0
        %v2665 = vadd.f32 0.0, %v2664
        %v2666 = vpop.f32.mrf.mxu0
        %v2667 = vpop.f32.mrf.mxu0
        %v2668 = vpop.f32.mrf.mxu0
        %2669 = vmatprep.mubr.bf16.mxu0 0
        %2670 = vmatmul.mubr.bf16.gmra.mxu0 %v2472
        %v2671 = vpop.f32.mrf.mxu0
        %v2672 = vadd.f32 0.0, %v2671
        %v2673 = vpop.f32.mrf.mxu0
        %v2674 = vpop.f32.mrf.mxu0
        %v2675 = vadd.f32 0.0, %v2674
        %v2676 = vpop.f32.mrf.mxu0
        %2677 = vmatprep.mubr.bf16.mxu0 0
        %2678 = vmatmul.mubr.bf16.gmra.mxu0 %v2475
        %v2679 = vpop.f32.mrf.mxu0
        %v2680 = vpop.f32.mrf.mxu0
        %v2681 = vpop.f32.mrf.mxu0
        %v2682 = vadd.f32 0.0, %v2681
        %v2683 = vpop.f32.mrf.mxu0
        %2684 = vmatprep.mubr.bf16.mxu0 0
        %2685 = vmatmul.mubr.bf16.gmra.mxu0 %v2478
        %v2686 = vpop.f32.mrf.mxu0
        %v2687 = vadd.f32 0.0, %v2686
        %v2688 = vpop.f32.mrf.mxu0
        %v2689 = vpop.f32.mrf.mxu0
        %v2690 = vpop.f32.mrf.mxu0
        %2691 = vdwg.mxu0
        %v2692 = vadd.f32 %v2325, %v2518
        %v2693 = vadd.f32 %v2326, %v2521
        %v2694 = vadd.f32 %v2327, %v2528
        %v2695 = vadd.f32 %v2328, %v2533
        %v2696 = vadd.f32 %v2329, %v2540
        %v2697 = vadd.f32 %v2330, %v2543
        %v2698 = vadd.f32 %v2331, %v2550
        %v2699 = vadd.f32 %v2332, %v2555
        %v2700 = vadd.f32 %v2333, %v2562
        %v2701 = vadd.f32 %v2334, %v2565
        %v2702 = vadd.f32 %v2335, %v2572
        %v2703 = vadd.f32 %v2336, %v2577
        %v2704 = vadd.f32 %v2337, %v2584
        %v2705 = vadd.f32 %v2338, %v2587
        %v2706 = vadd.f32 %v2339, %v2594
        %v2707 = vadd.f32 %v2340, %v2599
        %v2708 = vadd.f32 %v2341, %v2606
        %v2709 = vadd.f32 %v2342, %v2609
        %v2710 = vadd.f32 %v2343, %v2616
        %v2711 = vadd.f32 %v2344, %v2621
        %v2712 = vadd.f32 %v2345, %v2628
        %v2713 = vadd.f32 %v2346, %v2631
        %v2714 = vadd.f32 %v2347, %v2638
        %v2715 = vadd.f32 %v2348, %v2643
        %v2716 = vadd.f32 %v2349, %v2650
        %v2717 = vadd.f32 %v2350, %v2653
        %v2718 = vadd.f32 %v2351, %v2660
        %v2719 = vadd.f32 %v2352, %v2665
        %v2720 = vadd.f32 %v2353, %v2672
        %v2721 = vadd.f32 %v2354, %v2675
        %v2722 = vadd.f32 %v2355, %v2682
        %v2723 = vadd.f32 %v2356, %v2687
        %s2724 = scalar_lea.vmem %s1, 12
        %v2725 = vld [vmem:[%s2724] sm:$0x3]
        %v2728 = vunpack.c.l.b16 %v278
        %v2729 = vunpack.c.l.b16 %v279
        %v2730 = vpack.c.b16 %v1522, %v381
        %v2731 = vpack.c.b16 %v1867, %v1523
        %v2732 = vpack.c.b16 %v2729, %v2728
        %v2734 = vsel %vm604, %v2730, 0
        %v2737 = vsel %vm604, %v2731, 0
        %v2740 = vsel %vm604, %v2732, 0
        %v2743 = vsel %vm677, %v2725, 0
        %2745 = vmatprep.subr.bf16.mxu0 0
        %2746 = vmatpush1.bf16.msra.mxu0 0
        %2747 = vmatprep.subr.bf16.mxu0 0
        %2748 = vmatpush1.bf16.msra.mxu0 0
        %2749 = vmatprep.subr.bf16.mxu0 0
        %2750 = vmatpush1.bf16.msra.mxu0 0
        %2751 = vmatprep.subr.bf16.mxu0 0
        %2752 = vmatpush1.bf16.msra.mxu0 0
        %2753 = vmatprep.subr.bf16.mxu0 0
        %2754 = vmatpush1.bf16.msra.mxu0 0
        %2755 = vmatprep.subr.bf16.mxu0 0
        %2756 = vmatpush1.bf16.msra.mxu0 0
        %2757 = vmatprep.subr.bf16.mxu0 0
        %2758 = vmatpush1.bf16.msra.mxu0 0
        %2759 = vmatprep.subr.bf16.mxu0 0
        %2760 = vmatpush1.bf16.msra.mxu0 %v2743
        %2761 = vmatprep.subr.bf16.mxu0 0
        %2762 = vmatpush2.bf16.msra.mxu0 0
        %2763 = vmatprep.subr.bf16.mxu0 0
        %2764 = vmatpush2.bf16.msra.mxu0 0
        %2765 = vmatprep.subr.bf16.mxu0 0
        %2766 = vmatpush2.bf16.msra.mxu0 0
        %2767 = vmatprep.subr.bf16.mxu0 0
        %2768 = vmatpush2.bf16.msra.mxu0 0
        %2769 = vmatprep.subr.bf16.mxu0 0
        %2770 = vmatpush2.bf16.msra.mxu0 0
        %2771 = vmatprep.subr.bf16.mxu0 0
        %2772 = vmatpush2.bf16.msra.mxu0 0
        %2773 = vmatprep.subr.bf16.mxu0 0
        %2774 = vmatpush2.bf16.msra.mxu0 0
        %2775 = vmatprep.subr.bf16.mxu0 0
        %2776 = vmatpush2.bf16.msra.mxu0 0
        %2777 = vmatprep.mubr.bf16.mxu0 0
        %2778 = vmatmul.mubr.bf16.gmra.mxu0 %v896
        %v2779 = vpop.f32.mrf.mxu0
        %v2780 = vadd.f32 0.0, %v2779
        %v2781 = vpop.f32.mrf.mxu0
        %v2782 = vpop.f32.mrf.mxu0
        %v2783 = vadd.f32 0.0, %v2782
        %v2784 = vpop.f32.mrf.mxu0
        %2785 = vmatprep.mubr.bf16.mxu0 0
        %2786 = vmatmul.mubr.bf16.gmra.mxu0 %v898
        %v2787 = vpop.f32.mrf.mxu0
        %v2788 = vpop.f32.mrf.mxu0
        %v2789 = vpop.f32.mrf.mxu0
        %v2790 = vadd.f32 0.0, %v2789
        %v2791 = vpop.f32.mrf.mxu0
        %2792 = vmatprep.mubr.bf16.mxu0 0
        %2793 = vmatmul.mubr.bf16.gmra.mxu0 %v900
        %v2794 = vpop.f32.mrf.mxu0
        %v2795 = vadd.f32 0.0, %v2794
        %v2796 = vpop.f32.mrf.mxu0
        %v2797 = vpop.f32.mrf.mxu0
        %v2798 = vpop.f32.mrf.mxu0
        %2799 = vmatprep.mubr.bf16.mxu0 0
        %2800 = vmatmul.mubr.bf16.gmra.mxu0 %v902
        %v2801 = vpop.f32.mrf.mxu0
        %v2802 = vadd.f32 0.0, %v2801
        %v2803 = vpop.f32.mrf.mxu0
        %v2804 = vpop.f32.mrf.mxu0
        %v2805 = vadd.f32 0.0, %v2804
        %v2806 = vpop.f32.mrf.mxu0
        %2807 = vmatprep.mubr.bf16.mxu0 0
        %2808 = vmatmul.mubr.bf16.gmra.mxu0 %v904
        %v2809 = vpop.f32.mrf.mxu0
        %v2810 = vpop.f32.mrf.mxu0
        %v2811 = vpop.f32.mrf.mxu0
        %v2812 = vadd.f32 0.0, %v2811
        %v2813 = vpop.f32.mrf.mxu0
        %2814 = vmatprep.mubr.bf16.mxu0 0
        %2815 = vmatmul.mubr.bf16.gmra.mxu0 %v906
        %v2816 = vpop.f32.mrf.mxu0
        %v2817 = vadd.f32 0.0, %v2816
        %v2818 = vpop.f32.mrf.mxu0
        %v2819 = vpop.f32.mrf.mxu0
        %v2820 = vpop.f32.mrf.mxu0
        %2821 = vmatprep.mubr.bf16.mxu0 0
        %2822 = vmatmul.mubr.bf16.gmra.mxu0 %v908
        %v2823 = vpop.f32.mrf.mxu0
        %v2824 = vadd.f32 0.0, %v2823
        %v2825 = vpop.f32.mrf.mxu0
        %v2826 = vpop.f32.mrf.mxu0
        %v2827 = vadd.f32 0.0, %v2826
        %v2828 = vpop.f32.mrf.mxu0
        %2829 = vmatprep.mubr.bf16.mxu0 0
        %2830 = vmatmul.mubr.bf16.gmra.mxu0 %v910
        %v2831 = vpop.f32.mrf.mxu0
        %v2832 = vpop.f32.mrf.mxu0
        %v2833 = vpop.f32.mrf.mxu0
        %v2834 = vadd.f32 0.0, %v2833
        %v2835 = vpop.f32.mrf.mxu0
        %2836 = vmatprep.mubr.bf16.mxu0 0
        %2837 = vmatmul.mubr.bf16.gmra.mxu0 %v912
        %v2838 = vpop.f32.mrf.mxu0
        %v2839 = vadd.f32 0.0, %v2838
        %v2840 = vpop.f32.mrf.mxu0
        %v2841 = vpop.f32.mrf.mxu0
        %v2842 = vpop.f32.mrf.mxu0
        %2843 = vmatprep.mubr.bf16.mxu0 0
        %2844 = vmatmul.mubr.bf16.gmra.mxu0 %v914
        %v2845 = vpop.f32.mrf.mxu0
        %v2846 = vadd.f32 0.0, %v2845
        %v2847 = vpop.f32.mrf.mxu0
        %v2848 = vpop.f32.mrf.mxu0
        %v2849 = vadd.f32 0.0, %v2848
        %v2850 = vpop.f32.mrf.mxu0
        %2851 = vmatprep.mubr.bf16.mxu0 0
        %2852 = vmatmul.mubr.bf16.gmra.mxu0 %v916
        %v2853 = vpop.f32.mrf.mxu0
        %v2854 = vpop.f32.mrf.mxu0
        %v2855 = vpop.f32.mrf.mxu0
        %v2856 = vadd.f32 0.0, %v2855
        %v2857 = vpop.f32.mrf.mxu0
        %2858 = vmatprep.mubr.bf16.mxu0 0
        %2859 = vmatmul.mubr.bf16.gmra.mxu0 %v918
        %v2860 = vpop.f32.mrf.mxu0
        %v2861 = vadd.f32 0.0, %v2860
        %v2862 = vpop.f32.mrf.mxu0
        %v2863 = vpop.f32.mrf.mxu0
        %v2864 = vpop.f32.mrf.mxu0
        %2865 = vmatprep.mubr.bf16.mxu0 0
        %2866 = vmatmul.mubr.bf16.gmra.mxu0 %v920
        %v2867 = vpop.f32.mrf.mxu0
        %v2868 = vadd.f32 0.0, %v2867
        %v2869 = vpop.f32.mrf.mxu0
        %v2870 = vpop.f32.mrf.mxu0
        %v2871 = vadd.f32 0.0, %v2870
        %v2872 = vpop.f32.mrf.mxu0
        %2873 = vmatprep.mubr.bf16.mxu0 0
        %2874 = vmatmul.mubr.bf16.gmra.mxu0 %v922
        %v2875 = vpop.f32.mrf.mxu0
        %v2876 = vpop.f32.mrf.mxu0
        %v2877 = vpop.f32.mrf.mxu0
        %v2878 = vadd.f32 0.0, %v2877
        %v2879 = vpop.f32.mrf.mxu0
        %2880 = vmatprep.mubr.bf16.mxu0 0
        %2881 = vmatmul.mubr.bf16.gmra.mxu0 %v924
        %v2882 = vpop.f32.mrf.mxu0
        %v2883 = vadd.f32 0.0, %v2882
        %v2884 = vpop.f32.mrf.mxu0
        %v2885 = vpop.f32.mrf.mxu0
        %v2886 = vpop.f32.mrf.mxu0
        %2887 = vmatprep.mubr.bf16.mxu0 0
        %2888 = vmatmul.mubr.bf16.gmra.mxu0 %v926
        %v2889 = vpop.f32.mrf.mxu0
        %v2890 = vadd.f32 0.0, %v2889
        %v2891 = vpop.f32.mrf.mxu0
        %v2892 = vpop.f32.mrf.mxu0
        %v2893 = vadd.f32 0.0, %v2892
        %v2894 = vpop.f32.mrf.mxu0
        %2895 = vmatprep.mubr.bf16.mxu0 0
        %2896 = vmatmul.mubr.bf16.gmra.mxu0 %v928
        %v2897 = vpop.f32.mrf.mxu0
        %v2898 = vpop.f32.mrf.mxu0
        %v2899 = vpop.f32.mrf.mxu0
        %v2900 = vadd.f32 0.0, %v2899
        %v2901 = vpop.f32.mrf.mxu0
        %2902 = vmatprep.mubr.bf16.mxu0 0
        %2903 = vmatmul.mubr.bf16.gmra.mxu0 %v930
        %v2904 = vpop.f32.mrf.mxu0
        %v2905 = vadd.f32 0.0, %v2904
        %v2906 = vpop.f32.mrf.mxu0
        %v2907 = vpop.f32.mrf.mxu0
        %v2908 = vpop.f32.mrf.mxu0
        %2909 = vmatprep.mubr.bf16.mxu0 0
        %2910 = vmatmul.mubr.bf16.gmra.mxu0 %v932
        %v2911 = vpop.f32.mrf.mxu0
        %v2912 = vadd.f32 0.0, %v2911
        %v2913 = vpop.f32.mrf.mxu0
        %v2914 = vpop.f32.mrf.mxu0
        %v2915 = vadd.f32 0.0, %v2914
        %v2916 = vpop.f32.mrf.mxu0
        %2917 = vmatprep.mubr.bf16.mxu0 0
        %2918 = vmatmul.mubr.bf16.gmra.mxu0 %v934
        %v2919 = vpop.f32.mrf.mxu0
        %v2920 = vpop.f32.mrf.mxu0
        %v2921 = vpop.f32.mrf.mxu0
        %v2922 = vadd.f32 0.0, %v2921
        %v2923 = vpop.f32.mrf.mxu0
        %2924 = vmatprep.mubr.bf16.mxu0 0
        %2925 = vmatmul.mubr.bf16.gmra.mxu0 %v936
        %v2926 = vpop.f32.mrf.mxu0
        %v2927 = vadd.f32 0.0, %v2926
        %v2928 = vpop.f32.mrf.mxu0
        %v2929 = vpop.f32.mrf.mxu0
        %v2930 = vpop.f32.mrf.mxu0
        %2931 = vmatprep.mubr.bf16.mxu0 0
        %2932 = vmatmul.mubr.bf16.gmra.mxu0 %v2734
        %v2933 = vpop.f32.mrf.mxu0
        %v2934 = vadd.f32 0.0, %v2933
        %v2935 = vpop.f32.mrf.mxu0
        %v2936 = vpop.f32.mrf.mxu0
        %v2937 = vadd.f32 0.0, %v2936
        %v2938 = vpop.f32.mrf.mxu0
        %2939 = vmatprep.mubr.bf16.mxu0 0
        %2940 = vmatmul.mubr.bf16.gmra.mxu0 %v2737
        %v2941 = vpop.f32.mrf.mxu0
        %v2942 = vpop.f32.mrf.mxu0
        %v2943 = vpop.f32.mrf.mxu0
        %v2944 = vadd.f32 0.0, %v2943
        %v2945 = vpop.f32.mrf.mxu0
        %2946 = vmatprep.mubr.bf16.mxu0 0
        %2947 = vmatmul.mubr.bf16.gmra.mxu0 %v2740
        %v2948 = vpop.f32.mrf.mxu0
        %v2949 = vadd.f32 0.0, %v2948
        %v2950 = vpop.f32.mrf.mxu0
        %v2951 = vpop.f32.mrf.mxu0
        %v2952 = vpop.f32.mrf.mxu0
        %2953 = vdwg.mxu0
        %v2954 = vadd.f32 %v2692, %v2780
        %v2955 = vadd.f32 %v2693, %v2783
        %v2956 = vadd.f32 %v2694, %v2790
        %v2957 = vadd.f32 %v2695, %v2795
        %v2958 = vadd.f32 %v2696, %v2802
        %v2959 = vadd.f32 %v2697, %v2805
        %v2960 = vadd.f32 %v2698, %v2812
        %v2961 = vadd.f32 %v2699, %v2817
        %v2962 = vadd.f32 %v2700, %v2824
        %v2963 = vadd.f32 %v2701, %v2827
        %v2964 = vadd.f32 %v2702, %v2834
        %v2965 = vadd.f32 %v2703, %v2839
        %v2966 = vadd.f32 %v2704, %v2846
        %v2967 = vadd.f32 %v2705, %v2849
        %v2968 = vadd.f32 %v2706, %v2856
        %v2969 = vadd.f32 %v2707, %v2861
        %v2970 = vadd.f32 %v2708, %v2868
        %v2971 = vadd.f32 %v2709, %v2871
        %v2972 = vadd.f32 %v2710, %v2878
        %v2973 = vadd.f32 %v2711, %v2883
        %v2974 = vadd.f32 %v2712, %v2890
        %v2975 = vadd.f32 %v2713, %v2893
        %v2976 = vadd.f32 %v2714, %v2900
        %v2977 = vadd.f32 %v2715, %v2905
        %v2978 = vadd.f32 %v2716, %v2912
        %v2979 = vadd.f32 %v2717, %v2915
        %v2980 = vadd.f32 %v2718, %v2922
        %v2981 = vadd.f32 %v2719, %v2927
        %v2982 = vadd.f32 %v2720, %v2934
        %v2983 = vadd.f32 %v2721, %v2937
        %v2984 = vadd.f32 %v2722, %v2944
        %v2985 = vadd.f32 %v2723, %v2949
        %s2986 = scalar_lea.vmem %s1, 14
        %v2987 = vld [vmem:[%s2986] sm:$0x3]
        %v2989 = vunpack.c.l.b16 %v280
        %v2990 = vpack.c.b16 %v2989, %v2989
        %v2991 = vshll.u32 %v2730, 16
        %v2993 = vrot.slane %v2991, 1
        %v2994 = vsel %vm407, %v598, %v2993
        %v2995 = vshrl.u32 %v2730, 16
        %v2997 = vor.u32 %v2995, %v2993
        %v2998 = vshll.u32 %v2731, 16
        %v3000 = vrot.slane %v2998, 1
        %v3001 = vsel %vm407, %v2997, %v3000
        %v3002 = vshrl.u32 %v2731, 16
        %v3004 = vor.u32 %v3002, %v3000
        %v3005 = vshll.u32 %v2732, 16
        %v3007 = vrot.slane %v3005, 1
        %v3008 = vsel %vm407, %v3004, %v3007
        %v3009 = vshrl.u32 %v2732, 16
        %v3011 = vor.u32 %v3009, %v3007
        %v3013 = vshll.u32 %v2990, 16
        %v3015 = vrot.slane %v3013, 1
        %v3016 = vsel %vm407, %v3011, %v3015
        %v3018 = vsel %vm604, %v2994, 0
        %v3021 = vsel %vm604, %v3001, 0
        %v3024 = vsel %vm604, %v3008, 0
        %v3027 = vsel %vm604, %v3016, 0
        %v3030 = vsel %vm677, %v2987, 0
        %3032 = vmatprep.subr.bf16.mxu0 0
        %3033 = vmatpush1.bf16.msra.mxu0 0
        %3034 = vmatprep.subr.bf16.mxu0 0
        %3035 = vmatpush1.bf16.msra.mxu0 0
        %3036 = vmatprep.subr.bf16.mxu0 0
        %3037 = vmatpush1.bf16.msra.mxu0 0
        %3038 = vmatprep.subr.bf16.mxu0 0
        %3039 = vmatpush1.bf16.msra.mxu0 0
        %3040 = vmatprep.subr.bf16.mxu0 0
        %3041 = vmatpush1.bf16.msra.mxu0 0
        %3042 = vmatprep.subr.bf16.mxu0 0
        %3043 = vmatpush1.bf16.msra.mxu0 0
        %3044 = vmatprep.subr.bf16.mxu0 0
        %3045 = vmatpush1.bf16.msra.mxu0 0
        %3046 = vmatprep.subr.bf16.mxu0 0
        %3047 = vmatpush1.bf16.msra.mxu0 %v3030
        %3048 = vmatprep.subr.bf16.mxu0 0
        %3049 = vmatpush2.bf16.msra.mxu0 0
        %3050 = vmatprep.subr.bf16.mxu0 0
        %3051 = vmatpush2.bf16.msra.mxu0 0
        %3052 = vmatprep.subr.bf16.mxu0 0
        %3053 = vmatpush2.bf16.msra.mxu0 0
        %3054 = vmatprep.subr.bf16.mxu0 0
        %3055 = vmatpush2.bf16.msra.mxu0 0
        %3056 = vmatprep.subr.bf16.mxu0 0
        %3057 = vmatpush2.bf16.msra.mxu0 0
        %3058 = vmatprep.subr.bf16.mxu0 0
        %3059 = vmatpush2.bf16.msra.mxu0 0
        %3060 = vmatprep.subr.bf16.mxu0 0
        %3061 = vmatpush2.bf16.msra.mxu0 0
        %3062 = vmatprep.subr.bf16.mxu0 0
        %3063 = vmatpush2.bf16.msra.mxu0 0
        %3064 = vmatprep.mubr.bf16.mxu0 0
        %3065 = vmatmul.mubr.bf16.gmra.mxu0 %v615
        %v3066 = vpop.f32.mrf.mxu0
        %v3067 = vadd.f32 0.0, %v3066
        %v3068 = vpop.f32.mrf.mxu0
        %v3069 = vpop.f32.mrf.mxu0
        %v3070 = vadd.f32 0.0, %v3069
        %v3071 = vpop.f32.mrf.mxu0
        %3072 = vmatprep.mubr.bf16.mxu0 0
        %3073 = vmatmul.mubr.bf16.gmra.mxu0 %v618
        %v3074 = vpop.f32.mrf.mxu0
        %v3075 = vpop.f32.mrf.mxu0
        %v3076 = vpop.f32.mrf.mxu0
        %v3077 = vadd.f32 0.0, %v3076
        %v3078 = vpop.f32.mrf.mxu0
        %3079 = vmatprep.mubr.bf16.mxu0 0
        %3080 = vmatmul.mubr.bf16.gmra.mxu0 %v621
        %v3081 = vpop.f32.mrf.mxu0
        %v3082 = vadd.f32 0.0, %v3081
        %v3083 = vpop.f32.mrf.mxu0
        %v3084 = vpop.f32.mrf.mxu0
        %v3085 = vpop.f32.mrf.mxu0
        %3086 = vmatprep.mubr.bf16.mxu0 0
        %3087 = vmatmul.mubr.bf16.gmra.mxu0 %v624
        %v3088 = vpop.f32.mrf.mxu0
        %v3089 = vadd.f32 0.0, %v3088
        %v3090 = vpop.f32.mrf.mxu0
        %v3091 = vpop.f32.mrf.mxu0
        %v3092 = vadd.f32 0.0, %v3091
        %v3093 = vpop.f32.mrf.mxu0
        %3094 = vmatprep.mubr.bf16.mxu0 0
        %3095 = vmatmul.mubr.bf16.gmra.mxu0 %v627
        %v3096 = vpop.f32.mrf.mxu0
        %v3097 = vpop.f32.mrf.mxu0
        %v3098 = vpop.f32.mrf.mxu0
        %v3099 = vadd.f32 0.0, %v3098
        %v3100 = vpop.f32.mrf.mxu0
        %3101 = vmatprep.mubr.bf16.mxu0 0
        %3102 = vmatmul.mubr.bf16.gmra.mxu0 %v630
        %v3103 = vpop.f32.mrf.mxu0
        %v3104 = vadd.f32 0.0, %v3103
        %v3105 = vpop.f32.mrf.mxu0
        %v3106 = vpop.f32.mrf.mxu0
        %v3107 = vpop.f32.mrf.mxu0
        %3108 = vmatprep.mubr.bf16.mxu0 0
        %3109 = vmatmul.mubr.bf16.gmra.mxu0 %v633
        %v3110 = vpop.f32.mrf.mxu0
        %v3111 = vadd.f32 0.0, %v3110
        %v3112 = vpop.f32.mrf.mxu0
        %v3113 = vpop.f32.mrf.mxu0
        %v3114 = vadd.f32 0.0, %v3113
        %v3115 = vpop.f32.mrf.mxu0
        %3116 = vmatprep.mubr.bf16.mxu0 0
        %3117 = vmatmul.mubr.bf16.gmra.mxu0 %v636
        %v3118 = vpop.f32.mrf.mxu0
        %v3119 = vpop.f32.mrf.mxu0
        %v3120 = vpop.f32.mrf.mxu0
        %v3121 = vadd.f32 0.0, %v3120
        %v3122 = vpop.f32.mrf.mxu0
        %3123 = vmatprep.mubr.bf16.mxu0 0
        %3124 = vmatmul.mubr.bf16.gmra.mxu0 %v639
        %v3125 = vpop.f32.mrf.mxu0
        %v3126 = vadd.f32 0.0, %v3125
        %v3127 = vpop.f32.mrf.mxu0
        %v3128 = vpop.f32.mrf.mxu0
        %v3129 = vpop.f32.mrf.mxu0
        %3130 = vmatprep.mubr.bf16.mxu0 0
        %3131 = vmatmul.mubr.bf16.gmra.mxu0 %v642
        %v3132 = vpop.f32.mrf.mxu0
        %v3133 = vadd.f32 0.0, %v3132
        %v3134 = vpop.f32.mrf.mxu0
        %v3135 = vpop.f32.mrf.mxu0
        %v3136 = vadd.f32 0.0, %v3135
        %v3137 = vpop.f32.mrf.mxu0
        %3138 = vmatprep.mubr.bf16.mxu0 0
        %3139 = vmatmul.mubr.bf16.gmra.mxu0 %v645
        %v3140 = vpop.f32.mrf.mxu0
        %v3141 = vpop.f32.mrf.mxu0
        %v3142 = vpop.f32.mrf.mxu0
        %v3143 = vadd.f32 0.0, %v3142
        %v3144 = vpop.f32.mrf.mxu0
        %3145 = vmatprep.mubr.bf16.mxu0 0
        %3146 = vmatmul.mubr.bf16.gmra.mxu0 %v648
        %v3147 = vpop.f32.mrf.mxu0
        %v3148 = vadd.f32 0.0, %v3147
        %v3149 = vpop.f32.mrf.mxu0
        %v3150 = vpop.f32.mrf.mxu0
        %v3151 = vpop.f32.mrf.mxu0
        %3152 = vmatprep.mubr.bf16.mxu0 0
        %3153 = vmatmul.mubr.bf16.gmra.mxu0 %v651
        %v3154 = vpop.f32.mrf.mxu0
        %v3155 = vadd.f32 0.0, %v3154
        %v3156 = vpop.f32.mrf.mxu0
        %v3157 = vpop.f32.mrf.mxu0
        %v3158 = vadd.f32 0.0, %v3157
        %v3159 = vpop.f32.mrf.mxu0
        %3160 = vmatprep.mubr.bf16.mxu0 0
        %3161 = vmatmul.mubr.bf16.gmra.mxu0 %v654
        %v3162 = vpop.f32.mrf.mxu0
        %v3163 = vpop.f32.mrf.mxu0
        %v3164 = vpop.f32.mrf.mxu0
        %v3165 = vadd.f32 0.0, %v3164
        %v3166 = vpop.f32.mrf.mxu0
        %3167 = vmatprep.mubr.bf16.mxu0 0
        %3168 = vmatmul.mubr.bf16.gmra.mxu0 %v657
        %v3169 = vpop.f32.mrf.mxu0
        %v3170 = vadd.f32 0.0, %v3169
        %v3171 = vpop.f32.mrf.mxu0
        %v3172 = vpop.f32.mrf.mxu0
        %v3173 = vpop.f32.mrf.mxu0
        %3174 = vmatprep.mubr.bf16.mxu0 0
        %3175 = vmatmul.mubr.bf16.gmra.mxu0 %v660
        %v3176 = vpop.f32.mrf.mxu0
        %v3177 = vadd.f32 0.0, %v3176
        %v3178 = vpop.f32.mrf.mxu0
        %v3179 = vpop.f32.mrf.mxu0
        %v3180 = vadd.f32 0.0, %v3179
        %v3181 = vpop.f32.mrf.mxu0
        %3182 = vmatprep.mubr.bf16.mxu0 0
        %3183 = vmatmul.mubr.bf16.gmra.mxu0 %v663
        %v3184 = vpop.f32.mrf.mxu0
        %v3185 = vpop.f32.mrf.mxu0
        %v3186 = vpop.f32.mrf.mxu0
        %v3187 = vadd.f32 0.0, %v3186
        %v3188 = vpop.f32.mrf.mxu0
        %3189 = vmatprep.mubr.bf16.mxu0 0
        %3190 = vmatmul.mubr.bf16.gmra.mxu0 %v666
        %v3191 = vpop.f32.mrf.mxu0
        %v3192 = vadd.f32 0.0, %v3191
        %v3193 = vpop.f32.mrf.mxu0
        %v3194 = vpop.f32.mrf.mxu0
        %v3195 = vpop.f32.mrf.mxu0
        %3196 = vmatprep.mubr.bf16.mxu0 0
        %3197 = vmatmul.mubr.bf16.gmra.mxu0 %v669
        %v3198 = vpop.f32.mrf.mxu0
        %v3199 = vadd.f32 0.0, %v3198
        %v3200 = vpop.f32.mrf.mxu0
        %v3201 = vpop.f32.mrf.mxu0
        %v3202 = vadd.f32 0.0, %v3201
        %v3203 = vpop.f32.mrf.mxu0
        %3204 = vmatprep.mubr.bf16.mxu0 0
        %3205 = vmatmul.mubr.bf16.gmra.mxu0 %v672
        %v3206 = vpop.f32.mrf.mxu0
        %v3207 = vpop.f32.mrf.mxu0
        %v3208 = vpop.f32.mrf.mxu0
        %v3209 = vadd.f32 0.0, %v3208
        %v3210 = vpop.f32.mrf.mxu0
        %3211 = vmatprep.mubr.bf16.mxu0 0
        %3212 = vmatmul.mubr.bf16.gmra.mxu0 %v3018
        %v3213 = vpop.f32.mrf.mxu0
        %v3214 = vadd.f32 0.0, %v3213
        %v3215 = vpop.f32.mrf.mxu0
        %v3216 = vpop.f32.mrf.mxu0
        %v3217 = vpop.f32.mrf.mxu0
        %3218 = vmatprep.mubr.bf16.mxu0 0
        %3219 = vmatmul.mubr.bf16.gmra.mxu0 %v3021
        %v3220 = vpop.f32.mrf.mxu0
        %v3221 = vadd.f32 0.0, %v3220
        %v3222 = vpop.f32.mrf.mxu0
        %v3223 = vpop.f32.mrf.mxu0
        %v3224 = vadd.f32 0.0, %v3223
        %v3225 = vpop.f32.mrf.mxu0
        %3226 = vmatprep.mubr.bf16.mxu0 0
        %3227 = vmatmul.mubr.bf16.gmra.mxu0 %v3024
        %v3228 = vpop.f32.mrf.mxu0
        %v3229 = vpop.f32.mrf.mxu0
        %v3230 = vpop.f32.mrf.mxu0
        %v3231 = vadd.f32 0.0, %v3230
        %v3232 = vpop.f32.mrf.mxu0
        %3233 = vmatprep.mubr.bf16.mxu0 0
        %3234 = vmatmul.mubr.bf16.gmra.mxu0 %v3027
        %v3235 = vpop.f32.mrf.mxu0
        %v3236 = vadd.f32 0.0, %v3235
        %v3237 = vpop.f32.mrf.mxu0
        %v3238 = vpop.f32.mrf.mxu0
        %v3239 = vpop.f32.mrf.mxu0
        %3240 = vdwg.mxu0
        %v3241 = vadd.f32 %v2954, %v3067
        %v3242 = vadd.f32 %v2955, %v3070
        %v3243 = vadd.f32 %v2956, %v3077
        %v3244 = vadd.f32 %v2957, %v3082
        %v3245 = vadd.f32 %v2958, %v3089
        %v3246 = vadd.f32 %v2959, %v3092
        %v3247 = vadd.f32 %v2960, %v3099
        %v3248 = vadd.f32 %v2961, %v3104
        %v3249 = vadd.f32 %v2962, %v3111
        %v3250 = vadd.f32 %v2963, %v3114
        %v3251 = vadd.f32 %v2964, %v3121
        %v3252 = vadd.f32 %v2965, %v3126
        %v3253 = vadd.f32 %v2966, %v3133
        %v3254 = vadd.f32 %v2967, %v3136
        %v3255 = vadd.f32 %v2968, %v3143
        %v3256 = vadd.f32 %v2969, %v3148
        %v3257 = vadd.f32 %v2970, %v3155
        %v3258 = vadd.f32 %v2971, %v3158
        %v3259 = vadd.f32 %v2972, %v3165
        %v3260 = vadd.f32 %v2973, %v3170
        %v3261 = vadd.f32 %v2974, %v3177
        %v3262 = vadd.f32 %v2975, %v3180
        %v3263 = vadd.f32 %v2976, %v3187
        %v3264 = vadd.f32 %v2977, %v3192
        %v3265 = vadd.f32 %v2978, %v3199
        %v3266 = vadd.f32 %v2979, %v3202
        %v3267 = vadd.f32 %v2980, %v3209
        %v3268 = vadd.f32 %v2981, %v3214
        %v3269 = vadd.f32 %v2982, %v3221
        %v3270 = vadd.f32 %v2983, %v3224
        %v3271 = vadd.f32 %v2984, %v3231
        %v3272 = vadd.f32 %v2985, %v3236
        %s3273 = scalar_lea.vmem %s1, 16
        %v3274 = vld [vmem:[%s3273] sm:$0x3]
        %v3275 = vrot.slane %v2730, 1
        %v3276 = vsel %vm1152, %v1198, %v3275
        %v3277 = vrot.slane %v2731, 1
        %v3278 = vsel %vm1152, %v3275, %v3277
        %v3279 = vrot.slane %v2732, 1
        %v3280 = vsel %vm1152, %v3277, %v3279
        %v3281 = vrot.slane %v2990, 1
        %v3282 = vsel %vm1152, %v3279, %v3281
        %v3284 = vsel %vm604, %v3276, 0
        %v3287 = vsel %vm604, %v3278, 0
        %v3290 = vsel %vm604, %v3280, 0
        %v3293 = vsel %vm604, %v3282, 0
        %v3296 = vsel %vm677, %v3274, 0
        %3298 = vmatprep.subr.bf16.mxu0 0
        %3299 = vmatpush1.bf16.msra.mxu0 0
        %3300 = vmatprep.subr.bf16.mxu0 0
        %3301 = vmatpush1.bf16.msra.mxu0 0
        %3302 = vmatprep.subr.bf16.mxu0 0
        %3303 = vmatpush1.bf16.msra.mxu0 0
        %3304 = vmatprep.subr.bf16.mxu0 0
        %3305 = vmatpush1.bf16.msra.mxu0 0
        %3306 = vmatprep.subr.bf16.mxu0 0
        %3307 = vmatpush1.bf16.msra.mxu0 0
        %3308 = vmatprep.subr.bf16.mxu0 0
        %3309 = vmatpush1.bf16.msra.mxu0 0
        %3310 = vmatprep.subr.bf16.mxu0 0
        %3311 = vmatpush1.bf16.msra.mxu0 0
        %3312 = vmatprep.subr.bf16.mxu0 0
        %3313 = vmatpush1.bf16.msra.mxu0 %v3296
        %3314 = vmatprep.subr.bf16.mxu0 0
        %3315 = vmatpush2.bf16.msra.mxu0 0
        %3316 = vmatprep.subr.bf16.mxu0 0
        %3317 = vmatpush2.bf16.msra.mxu0 0
        %3318 = vmatprep.subr.bf16.mxu0 0
        %3319 = vmatpush2.bf16.msra.mxu0 0
        %3320 = vmatprep.subr.bf16.mxu0 0
        %3321 = vmatpush2.bf16.msra.mxu0 0
        %3322 = vmatprep.subr.bf16.mxu0 0
        %3323 = vmatpush2.bf16.msra.mxu0 0
        %3324 = vmatprep.subr.bf16.mxu0 0
        %3325 = vmatpush2.bf16.msra.mxu0 0
        %3326 = vmatprep.subr.bf16.mxu0 0
        %3327 = vmatpush2.bf16.msra.mxu0 0
        %3328 = vmatprep.subr.bf16.mxu0 0
        %3329 = vmatpush2.bf16.msra.mxu0 0
        %3330 = vmatprep.mubr.bf16.mxu0 0
        %3331 = vmatmul.mubr.bf16.gmra.mxu0 %v1212
        %v3332 = vpop.f32.mrf.mxu0
        %v3333 = vadd.f32 0.0, %v3332
        %v3334 = vpop.f32.mrf.mxu0
        %v3335 = vpop.f32.mrf.mxu0
        %v3336 = vadd.f32 0.0, %v3335
        %v3337 = vpop.f32.mrf.mxu0
        %3338 = vmatprep.mubr.bf16.mxu0 0
        %3339 = vmatmul.mubr.bf16.gmra.mxu0 %v1215
        %v3340 = vpop.f32.mrf.mxu0
        %v3341 = vpop.f32.mrf.mxu0
        %v3342 = vpop.f32.mrf.mxu0
        %v3343 = vadd.f32 0.0, %v3342
        %v3344 = vpop.f32.mrf.mxu0
        %3345 = vmatprep.mubr.bf16.mxu0 0
        %3346 = vmatmul.mubr.bf16.gmra.mxu0 %v1218
        %v3347 = vpop.f32.mrf.mxu0
        %v3348 = vadd.f32 0.0, %v3347
        %v3349 = vpop.f32.mrf.mxu0
        %v3350 = vpop.f32.mrf.mxu0
        %v3351 = vpop.f32.mrf.mxu0
        %3352 = vmatprep.mubr.bf16.mxu0 0
        %3353 = vmatmul.mubr.bf16.gmra.mxu0 %v1221
        %v3354 = vpop.f32.mrf.mxu0
        %v3355 = vadd.f32 0.0, %v3354
        %v3356 = vpop.f32.mrf.mxu0
        %v3357 = vpop.f32.mrf.mxu0
        %v3358 = vadd.f32 0.0, %v3357
        %v3359 = vpop.f32.mrf.mxu0
        %3360 = vmatprep.mubr.bf16.mxu0 0
        %3361 = vmatmul.mubr.bf16.gmra.mxu0 %v1224
        %v3362 = vpop.f32.mrf.mxu0
        %v3363 = vpop.f32.mrf.mxu0
        %v3364 = vpop.f32.mrf.mxu0
        %v3365 = vadd.f32 0.0, %v3364
        %v3366 = vpop.f32.mrf.mxu0
        %3367 = vmatprep.mubr.bf16.mxu0 0
        %3368 = vmatmul.mubr.bf16.gmra.mxu0 %v1227
        %v3369 = vpop.f32.mrf.mxu0
        %v3370 = vadd.f32 0.0, %v3369
        %v3371 = vpop.f32.mrf.mxu0
        %v3372 = vpop.f32.mrf.mxu0
        %v3373 = vpop.f32.mrf.mxu0
        %3374 = vmatprep.mubr.bf16.mxu0 0
        %3375 = vmatmul.mubr.bf16.gmra.mxu0 %v1230
        %v3376 = vpop.f32.mrf.mxu0
        %v3377 = vadd.f32 0.0, %v3376
        %v3378 = vpop.f32.mrf.mxu0
        %v3379 = vpop.f32.mrf.mxu0
        %v3380 = vadd.f32 0.0, %v3379
        %v3381 = vpop.f32.mrf.mxu0
        %3382 = vmatprep.mubr.bf16.mxu0 0
        %3383 = vmatmul.mubr.bf16.gmra.mxu0 %v1233
        %v3384 = vpop.f32.mrf.mxu0
        %v3385 = vpop.f32.mrf.mxu0
        %v3386 = vpop.f32.mrf.mxu0
        %v3387 = vadd.f32 0.0, %v3386
        %v3388 = vpop.f32.mrf.mxu0
        %3389 = vmatprep.mubr.bf16.mxu0 0
        %3390 = vmatmul.mubr.bf16.gmra.mxu0 %v1236
        %v3391 = vpop.f32.mrf.mxu0
        %v3392 = vadd.f32 0.0, %v3391
        %v3393 = vpop.f32.mrf.mxu0
        %v3394 = vpop.f32.mrf.mxu0
        %v3395 = vpop.f32.mrf.mxu0
        %3396 = vmatprep.mubr.bf16.mxu0 0
        %3397 = vmatmul.mubr.bf16.gmra.mxu0 %v1239
        %v3398 = vpop.f32.mrf.mxu0
        %v3399 = vadd.f32 0.0, %v3398
        %v3400 = vpop.f32.mrf.mxu0
        %v3401 = vpop.f32.mrf.mxu0
        %v3402 = vadd.f32 0.0, %v3401
        %v3403 = vpop.f32.mrf.mxu0
        %3404 = vmatprep.mubr.bf16.mxu0 0
        %3405 = vmatmul.mubr.bf16.gmra.mxu0 %v1242
        %v3406 = vpop.f32.mrf.mxu0
        %v3407 = vpop.f32.mrf.mxu0
        %v3408 = vpop.f32.mrf.mxu0
        %v3409 = vadd.f32 0.0, %v3408
        %v3410 = vpop.f32.mrf.mxu0
        %3411 = vmatprep.mubr.bf16.mxu0 0
        %3412 = vmatmul.mubr.bf16.gmra.mxu0 %v1245
        %v3413 = vpop.f32.mrf.mxu0
        %v3414 = vadd.f32 0.0, %v3413
        %v3415 = vpop.f32.mrf.mxu0
        %v3416 = vpop.f32.mrf.mxu0
        %v3417 = vpop.f32.mrf.mxu0
        %3418 = vmatprep.mubr.bf16.mxu0 0
        %3419 = vmatmul.mubr.bf16.gmra.mxu0 %v1248
        %v3420 = vpop.f32.mrf.mxu0
        %v3421 = vadd.f32 0.0, %v3420
        %v3422 = vpop.f32.mrf.mxu0
        %v3423 = vpop.f32.mrf.mxu0
        %v3424 = vadd.f32 0.0, %v3423
        %v3425 = vpop.f32.mrf.mxu0
        %3426 = vmatprep.mubr.bf16.mxu0 0
        %3427 = vmatmul.mubr.bf16.gmra.mxu0 %v1251
        %v3428 = vpop.f32.mrf.mxu0
        %v3429 = vpop.f32.mrf.mxu0
        %v3430 = vpop.f32.mrf.mxu0
        %v3431 = vadd.f32 0.0, %v3430
        %v3432 = vpop.f32.mrf.mxu0
        %3433 = vmatprep.mubr.bf16.mxu0 0
        %3434 = vmatmul.mubr.bf16.gmra.mxu0 %v1254
        %v3435 = vpop.f32.mrf.mxu0
        %v3436 = vadd.f32 0.0, %v3435
        %v3437 = vpop.f32.mrf.mxu0
        %v3438 = vpop.f32.mrf.mxu0
        %v3439 = vpop.f32.mrf.mxu0
        %3440 = vmatprep.mubr.bf16.mxu0 0
        %3441 = vmatmul.mubr.bf16.gmra.mxu0 %v1257
        %v3442 = vpop.f32.mrf.mxu0
        %v3443 = vadd.f32 0.0, %v3442
        %v3444 = vpop.f32.mrf.mxu0
        %v3445 = vpop.f32.mrf.mxu0
        %v3446 = vadd.f32 0.0, %v3445
        %v3447 = vpop.f32.mrf.mxu0
        %3448 = vmatprep.mubr.bf16.mxu0 0
        %3449 = vmatmul.mubr.bf16.gmra.mxu0 %v1260
        %v3450 = vpop.f32.mrf.mxu0
        %v3451 = vpop.f32.mrf.mxu0
        %v3452 = vpop.f32.mrf.mxu0
        %v3453 = vadd.f32 0.0, %v3452
        %v3454 = vpop.f32.mrf.mxu0
        %3455 = vmatprep.mubr.bf16.mxu0 0
        %3456 = vmatmul.mubr.bf16.gmra.mxu0 %v1263
        %v3457 = vpop.f32.mrf.mxu0
        %v3458 = vadd.f32 0.0, %v3457
        %v3459 = vpop.f32.mrf.mxu0
        %v3460 = vpop.f32.mrf.mxu0
        %v3461 = vpop.f32.mrf.mxu0
        %3462 = vmatprep.mubr.bf16.mxu0 0
        %3463 = vmatmul.mubr.bf16.gmra.mxu0 %v1266
        %v3464 = vpop.f32.mrf.mxu0
        %v3465 = vadd.f32 0.0, %v3464
        %v3466 = vpop.f32.mrf.mxu0
        %v3467 = vpop.f32.mrf.mxu0
        %v3468 = vadd.f32 0.0, %v3467
        %v3469 = vpop.f32.mrf.mxu0
        %3470 = vmatprep.mubr.bf16.mxu0 0
        %3471 = vmatmul.mubr.bf16.gmra.mxu0 %v1269
        %v3472 = vpop.f32.mrf.mxu0
        %v3473 = vpop.f32.mrf.mxu0
        %v3474 = vpop.f32.mrf.mxu0
        %v3475 = vadd.f32 0.0, %v3474
        %v3476 = vpop.f32.mrf.mxu0
        %3477 = vmatprep.mubr.bf16.mxu0 0
        %3478 = vmatmul.mubr.bf16.gmra.mxu0 %v3284
        %v3479 = vpop.f32.mrf.mxu0
        %v3480 = vadd.f32 0.0, %v3479
        %v3481 = vpop.f32.mrf.mxu0
        %v3482 = vpop.f32.mrf.mxu0
        %v3483 = vpop.f32.mrf.mxu0
        %3484 = vmatprep.mubr.bf16.mxu0 0
        %3485 = vmatmul.mubr.bf16.gmra.mxu0 %v3287
        %v3486 = vpop.f32.mrf.mxu0
        %v3487 = vadd.f32 0.0, %v3486
        %v3488 = vpop.f32.mrf.mxu0
        %v3489 = vpop.f32.mrf.mxu0
        %v3490 = vadd.f32 0.0, %v3489
        %v3491 = vpop.f32.mrf.mxu0
        %3492 = vmatprep.mubr.bf16.mxu0 0
        %3493 = vmatmul.mubr.bf16.gmra.mxu0 %v3290
        %v3494 = vpop.f32.mrf.mxu0
        %v3495 = vpop.f32.mrf.mxu0
        %v3496 = vpop.f32.mrf.mxu0
        %v3497 = vadd.f32 0.0, %v3496
        %v3498 = vpop.f32.mrf.mxu0
        %3499 = vmatprep.mubr.bf16.mxu0 0
        %3500 = vmatmul.mubr.bf16.gmra.mxu0 %v3293
        %v3501 = vpop.f32.mrf.mxu0
        %v3502 = vadd.f32 0.0, %v3501
        %v3503 = vpop.f32.mrf.mxu0
        %v3504 = vpop.f32.mrf.mxu0
        %v3505 = vpop.f32.mrf.mxu0
        %3506 = vdwg.mxu0
        %v3507 = vadd.f32 %v3241, %v3333
        %v3508 = vadd.f32 %v3242, %v3336
        %v3509 = vadd.f32 %v3243, %v3343
        %v3510 = vadd.f32 %v3244, %v3348
        %v3511 = vadd.f32 %v3245, %v3355
        %v3512 = vadd.f32 %v3246, %v3358
        %v3513 = vadd.f32 %v3247, %v3365
        %v3514 = vadd.f32 %v3248, %v3370
        %v3515 = vadd.f32 %v3249, %v3377
        %v3516 = vadd.f32 %v3250, %v3380
        %v3517 = vadd.f32 %v3251, %v3387
        %v3518 = vadd.f32 %v3252, %v3392
        %v3519 = vadd.f32 %v3253, %v3399
        %v3520 = vadd.f32 %v3254, %v3402
        %v3521 = vadd.f32 %v3255, %v3409
        %v3522 = vadd.f32 %v3256, %v3414
        %v3523 = vadd.f32 %v3257, %v3421
        %v3524 = vadd.f32 %v3258, %v3424
        %v3525 = vadd.f32 %v3259, %v3431
        %v3526 = vadd.f32 %v3260, %v3436
        %v3527 = vadd.f32 %v3261, %v3443
        %v3528 = vadd.f32 %v3262, %v3446
        %v3529 = vadd.f32 %v3263, %v3453
        %v3530 = vadd.f32 %v3264, %v3458
        %v3531 = vadd.f32 %v3265, %v3465
        %v3532 = vadd.f32 %v3266, %v3468
        %v3533 = vadd.f32 %v3267, %v3475
        %v3534 = vadd.f32 %v3268, %v3480
        %v3535 = vadd.f32 %v3269, %v3487
        %v3536 = vadd.f32 %v3270, %v3490
        %v3537 = vadd.f32 %v3271, %v3497
        %v3538 = vadd.f32 %v3272, %v3502
        %v3539 = vld [vmem:[%s2] sm:$0x1]
        %v3541 = vlaneseq
        %v3542 = vshrl.u32 %v3541, 7
        %v3543 = vsub.s32 0, %v3542
        %v3544 = vrot.slane %v3539, %v3543
        %v3546 = vmul.f32 %v3507, %v3544
        %v3547 = vmul.f32 %v3508, %v3544
        %v3548 = vmul.f32 %v3509, %v3544
        %v3549 = vmul.f32 %v3510, %v3544
        %v3550 = vmul.f32 %v3511, %v3544
        %v3551 = vmul.f32 %v3512, %v3544
        %v3552 = vmul.f32 %v3513, %v3544
        %v3553 = vmul.f32 %v3514, %v3544
        %v3554 = vmul.f32 %v3515, %v3544
        %v3555 = vmul.f32 %v3516, %v3544
        %v3556 = vmul.f32 %v3517, %v3544
        %v3557 = vmul.f32 %v3518, %v3544
        %v3558 = vmul.f32 %v3519, %v3544
        %v3559 = vmul.f32 %v3520, %v3544
        %v3560 = vmul.f32 %v3521, %v3544
        %v3561 = vmul.f32 %v3522, %v3544
        %v3562 = vmul.f32 %v3523, %v3544
        %v3563 = vmul.f32 %v3524, %v3544
        %v3564 = vmul.f32 %v3525, %v3544
        %v3565 = vmul.f32 %v3526, %v3544
        %v3566 = vmul.f32 %v3527, %v3544
        %v3567 = vmul.f32 %v3528, %v3544
        %v3568 = vmul.f32 %v3529, %v3544
        %v3569 = vmul.f32 %v3530, %v3544
        %v3570 = vmul.f32 %v3531, %v3544
        %v3571 = vmul.f32 %v3532, %v3544
        %v3572 = vmul.f32 %v3533, %v3544
        %v3573 = vmul.f32 %v3534, %v3544
        %v3574 = vmul.f32 %v3535, %v3544
        %v3575 = vmul.f32 %v3536, %v3544
        %v3576 = vmul.f32 %v3537, %v3544
        %v3577 = vmul.f32 %v3538, %v3544
        %v3578 = vld [vmem:[%s3] sm:$0x1]
        %v3580 = vlaneseq
        %v3581 = vshrl.u32 %v3580, 7
        %v3582 = vsub.s32 0, %v3581
        %v3583 = vrot.slane %v3578, %v3582
        %v3585 = vadd.f32 %v3546, %v3583
        %v3586 = vadd.f32 %v3547, %v3583
        %v3587 = vadd.f32 %v3548, %v3583
        %v3588 = vadd.f32 %v3549, %v3583
        %v3589 = vadd.f32 %v3550, %v3583
        %v3590 = vadd.f32 %v3551, %v3583
        %v3591 = vadd.f32 %v3552, %v3583
        %v3592 = vadd.f32 %v3553, %v3583
        %v3593 = vadd.f32 %v3554, %v3583
        %v3594 = vadd.f32 %v3555, %v3583
        %v3595 = vadd.f32 %v3556, %v3583
        %v3596 = vadd.f32 %v3557, %v3583
        %v3597 = vadd.f32 %v3558, %v3583
        %v3598 = vadd.f32 %v3559, %v3583
        %v3599 = vadd.f32 %v3560, %v3583
        %v3600 = vadd.f32 %v3561, %v3583
        %v3601 = vadd.f32 %v3562, %v3583
        %v3602 = vadd.f32 %v3563, %v3583
        %v3603 = vadd.f32 %v3564, %v3583
        %v3604 = vadd.f32 %v3565, %v3583
        %v3605 = vadd.f32 %v3566, %v3583
        %v3606 = vadd.f32 %v3567, %v3583
        %v3607 = vadd.f32 %v3568, %v3583
        %v3608 = vadd.f32 %v3569, %v3583
        %v3609 = vadd.f32 %v3570, %v3583
        %v3610 = vadd.f32 %v3571, %v3583
        %v3611 = vadd.f32 %v3572, %v3583
        %v3612 = vadd.f32 %v3573, %v3583
        %v3613 = vadd.f32 %v3574, %v3583
        %v3614 = vadd.f32 %v3575, %v3583
        %v3615 = vadd.f32 %v3576, %v3583
        %v3616 = vadd.f32 %v3577, %v3583
        %v3617 = vmax.f32 %v3585, 0.0
        %v3618 = vmax.f32 %v3586, 0.0
        %v3619 = vmax.f32 %v3587, 0.0
        %v3620 = vmax.f32 %v3588, 0.0
        %v3621 = vmax.f32 %v3589, 0.0
        %v3622 = vmax.f32 %v3590, 0.0
        %v3623 = vmax.f32 %v3591, 0.0
        %v3624 = vmax.f32 %v3592, 0.0
        %v3625 = vmax.f32 %v3593, 0.0
        %v3626 = vmax.f32 %v3594, 0.0
        %v3627 = vmax.f32 %v3595, 0.0
        %v3628 = vmax.f32 %v3596, 0.0
        %v3629 = vmax.f32 %v3597, 0.0
        %v3630 = vmax.f32 %v3598, 0.0
        %v3631 = vmax.f32 %v3599, 0.0
        %v3632 = vmax.f32 %v3600, 0.0
        %v3633 = vmax.f32 %v3601, 0.0
        %v3634 = vmax.f32 %v3602, 0.0
        %v3635 = vmax.f32 %v3603, 0.0
        %v3636 = vmax.f32 %v3604, 0.0
        %v3637 = vmax.f32 %v3605, 0.0
        %v3638 = vmax.f32 %v3606, 0.0
        %v3639 = vmax.f32 %v3607, 0.0
        %v3640 = vmax.f32 %v3608, 0.0
        %v3641 = vmax.f32 %v3609, 0.0
        %v3642 = vmax.f32 %v3610, 0.0
        %v3643 = vmax.f32 %v3611, 0.0
        %v3644 = vmax.f32 %v3612, 0.0
        %v3645 = vmax.f32 %v3613, 0.0
        %v3646 = vmax.f32 %v3614, 0.0
        %v3647 = vmax.f32 %v3615, 0.0
        %v3648 = vmax.f32 %v3616, 0.0
        %3649 = vst [vmem:[%s214] sm:$0xff] %v3617
        %3650 = vst [vmem:[%s214 + $0x8] sm:$0xff] %v3618
        %3651 = vst [vmem:[%s214 + $0x10] sm:$0xff] %v3619
        %3652 = vst [vmem:[%s214 + $0x18] sm:$0xff] %v3620
        %3653 = vst [vmem:[%s214 + $0x20] sm:$0xff] %v3621
        %3654 = vst [vmem:[%s214 + $0x28] sm:$0xff] %v3622
        %3655 = vst [vmem:[%s214 + $0x30] sm:$0xff] %v3623
        %3656 = vst [vmem:[%s214 + $0x38] sm:$0xff] %v3624
        %3657 = vst [vmem:[%s214 + $0x40] sm:$0xff] %v3625
        %3658 = vst [vmem:[%s214 + $0x48] sm:$0xff] %v3626
        %3659 = vst [vmem:[%s214 + $0x50] sm:$0xff] %v3627
        %3660 = vst [vmem:[%s214 + $0x58] sm:$0xff] %v3628
        %3661 = vst [vmem:[%s214 + $0x60] sm:$0xff] %v3629
        %3662 = vst [vmem:[%s214 + $0x68] sm:$0xff] %v3630
        %3663 = vst [vmem:[%s214 + $0x70] sm:$0xff] %v3631
        %3664 = vst [vmem:[%s214 + $0x78] sm:$0xff] %v3632
        %3665 = vst [vmem:[%s214 + $0x80] sm:$0xff] %v3633
        %3666 = vst [vmem:[%s214 + $0x88] sm:$0xff] %v3634
        %3667 = vst [vmem:[%s214 + $0x90] sm:$0xff] %v3635
        %3668 = vst [vmem:[%s214 + $0x98] sm:$0xff] %v3636
        %3669 = vst [vmem:[%s214 + $0xa0] sm:$0xff] %v3637
        %3670 = vst [vmem:[%s214 + $0xa8] sm:$0xff] %v3638
        %3671 = vst [vmem:[%s214 + $0xb0] sm:$0xff] %v3639
        %3672 = vst [vmem:[%s214 + $0xb8] sm:$0xff] %v3640
        %3673 = vst [vmem:[%s214 + $0xc0] sm:$0xff] %v3641
        %3674 = vst [vmem:[%s214 + $0xc8] sm:$0xff] %v3642
        %3675 = vst [vmem:[%s214 + $0xd0] sm:$0xff] %v3643
        %3676 = vst [vmem:[%s214 + $0xd8] sm:$0xff] %v3644
        %3677 = vst [vmem:[%s214 + $0xe0] sm:$0xff] %v3645
        %3678 = vst [vmem:[%s214 + $0xe8] sm:$0xff] %v3646
        %3679 = vst [vmem:[%s214 + $0xf0] sm:$0xff] %v3647
        %3680 = vst [vmem:[%s214 + $0xf8] sm:$0xff] %v3648
        %s3681 = sand.u32 %s131, 1
        %s3682 = scalar_lea.sflag [#allocation3], %s3681
        %s3683 = sand.u32 %s131, 1
        %s3684 = smul.addr %s3683, 256
        %s3685 = scalar_lea.vmem [#allocation2], %s3684
        // Predicated region
        $region37: #{tpu_custom_call.1} parent=35 // pred_check
          %p3686 = pneg %p141
        $region38: #{tpu_custom_call.1} parent=35 // pred_check_branch
          %3688 = sbr.rel (%p3686) target = $region40
        $region39: #{tpu_custom_call.1} parent=35 // pred_region
          %s3689 = smul.u32 16, %s23
          %s3691 = ssub.s32 4096, 4096
          %3692 = vsyncadd %s3682, %s3691
          %s3693 = smul.addr %s3689, 2
          %s3694 = smul.addr %s22, 32
          %s3695 = sadd.s32 %s3693, %s3694
          %s3696 = smul.addr %s3695, 128
          %s3697 = scalar_lea.hbm %s4, %s3696
          %s3698 = sshll.u32 %s3685, 4
          %s3699 = int_to_ptr.vmem [resolvable:$true] %s3698
          %3704 = dma.vmem_to_hbm [thread:$0]  %s3699, 4096, %s3697, %s3682, 128, 128, 8
        $region40: #{tpu_custom_call.1} parent=35 // pred_fallthru
          _
      $region36: #{tpu_custom_call.1} parent=5 // pred_fallthru
        _
      %p3705 = scmp.le.s32.totalorder 2, %s13
      // Predicated region
      $region41: #{tpu_custom_call.1} parent=5 // pred_check
        %p3706 = pneg %p3705
      $region42: #{tpu_custom_call.1} parent=5 // pred_check_branch
        %3708 = sbr.rel (%p3706) target = $region44
      $region43: #{tpu_custom_call.1} parent=5 // pred_region
        %s3709 = ssub.s32 %s13, 2
        // Predicated region
        $region45: #{tpu_custom_call.1} parent=43 // pred_check
          %p3710 = pneg %p147
        $region46: #{tpu_custom_call.1} parent=43 // pred_check_branch
          %3712 = sbr.rel (%p3710) target = $region48
        $region47: #{tpu_custom_call.1} parent=43 // pred_region
          %s3713 = sand.u32 %s132, 1
          %s3714 = scalar_lea.sflag [#allocation3], %s3713
          %s3715 = sand.u32 %s132, 1
          %s3716 = smul.addr %s3715, 256
          %s3717 = scalar_lea.vmem [#allocation2], %s3716
          %3718 = dma.done %s3714, 4096
        $region48: #{tpu_custom_call.1} parent=43 // pred_fallthru
          _
      $region44: #{tpu_custom_call.1} parent=5 // pred_fallthru
        _
    $region6: #{tpu_custom_call.1} parent=1 // loop_footer
      %s17 = sadd.s32 1, %s13
    $region7: #{tpu_custom_call.1} parent=1 // loop_footer_branch
      %12 = sbr.rel target = $region3
    $region8: #{tpu_custom_call.1} parent=1 // loop_exit
      _
    %3719 = vsyncpa [#allocation3], 1
    %s3720 = scalar_lea.sflag [#allocation3], 1
    %3721 = vsyncpa %s3720, 1

</llo_original>
